<compile_context>
chip_gen: v6e
topology: v6e:2x2x1
jax: 0.10.0
libtpu: 0.0.40
codegen_flags: <defaults>
</compile_context>

<pallas_src>
import jax
import jax.numpy as jnp
from jax import lax
from jax.experimental import pallas as pl
from jax.experimental.pallas import tpu as pltpu

NUM_CLASSES = 10

# Padded sizes (kernel layouts).
K1 = 32              # conv1 im2col K: 25 taps -> 32
C1_OC = 32           # conv1 out channels 20 -> 32
C2_CI = 32           # conv2 in  channels 20 -> 32
C2_OC = 64           # conv2 out channels 50 -> 64
K2 = 25 * C2_CI      # conv2 taps folded into K: 800
H1_W = 16            # conv1 pooled width 12 -> 16 (multiple of 8 => free reshapes)
SPATIAL1 = 12 * H1_W  # 192 rows per pool phase per image
H2_W = 7             # conv2 pooled "wide" width (even cols real, odd cols junk)
FC1_K = 4 * H2_W * C2_OC   # 1792
FC1_N = 512          # fc1 500 -> 512
FC2_N = 128          # fc2 10  -> 128


# ---------------------------------------------------------------------------
# Kernel 1: fused conv1 -> pool -> conv2 -> pool, one batch tile per grid step.
# ---------------------------------------------------------------------------
def _conv_tower_kernel(p_ref, w1_ref, b1_ref, w2_ref, b2_ref, o_ref, h1_ref):
    bt = p_ref.shape[0]

    # ---- conv1: single K=32 matmul (taps folded into K). ----
    # Rows are ordered (image, pool-phase, 12x16 spatial); reshape is
    # layout-preserving because the existing sublane extent (192) is 8-aligned.
    a1 = p_ref[...].reshape(bt * 4 * SPATIAL1, K1)                    # bf16
    y1 = jnp.dot(a1, w1_ref[...], preferred_element_type=jnp.float32)
    # 2x2 max-pool = max over the 4 pool phases, a free leading dim.
    y1 = jnp.max(y1.reshape(bt, 4, SPATIAL1, C1_OC), axis=1)          # (bt,192,32)
    # bias + ReLU commute with the max (bias is constant over the window).
    h1 = jnp.maximum(y1 + b1_ref[...], 0.0)
    h1_ref[...] = h1.reshape(bt, 12, H1_W, C1_OC)                     # f32 scratch

    # ---- conv2: fold all 25 taps into K=800, one matmul. ----
    # ki indexes a leading dim (free); kj is a small contiguous sublane-offset
    # slice.  No accumulator RMW: the MXU reduces over K.
    slabs = []
    for ki in range(5):
        for kj in range(5):
            win = h1_ref[:, ki:ki + 8, kj:kj + 8, :]                  # (bt,8,8,32)
            slabs.append(win.reshape(bt * 64, C2_CI))
    a2 = jnp.concatenate(slabs, axis=-1).astype(jnp.bfloat16)         # (bt*64,800)
    z2 = jnp.dot(a2, w2_ref[...], preferred_element_type=jnp.float32)  # (bt*64,64)

    # ---- 2x2 max-pool + bias + ReLU. ----
    # Row pairs: split onto a leading dim (free) and max.
    z2 = jnp.max(z2.reshape(bt, 4, 2, 8, C2_OC), axis=2)              # (bt,4,8,64)
    # Column pairs: adjacent-column max; even columns hold the pooled values,
    # odd columns are junk and are zeroed out by the fc1 weight layout.
    zc = jnp.maximum(z2[:, :, 0:7, :], z2[:, :, 1:8, :])              # (bt,4,7,64)
    o_ref[...] = jnp.maximum(zc + b2_ref[...], 0.0).astype(o_ref.dtype)


def _conv_tower(patches, w1, b1, w2, b2, *, bt):
    B = patches.shape[0]
    return pl.pallas_call(
        _conv_tower_kernel,
        out_shape=jax.ShapeDtypeStruct((B, 4, H2_W, C2_OC), jnp.bfloat16),
        grid=(B // bt,),
        in_specs=[
            pl.BlockSpec((bt, 4, SPATIAL1, K1), lambda i: (i, 0, 0, 0)),
            pl.BlockSpec((K1, C1_OC), lambda i: (0, 0)),
            pl.BlockSpec((1, C1_OC), lambda i: (0, 0)),
            pl.BlockSpec((K2, C2_OC), lambda i: (0, 0)),
            pl.BlockSpec((1, C2_OC), lambda i: (0, 0)),
        ],
        out_specs=pl.BlockSpec((bt, 4, H2_W, C2_OC), lambda i: (i, 0, 0, 0)),
        scratch_shapes=[pltpu.VMEM((bt, 12, H1_W, C1_OC), jnp.float32)],
        compiler_params=pltpu.CompilerParams(dimension_semantics=("parallel",)),
    )(patches, w1, b1, w2, b2)


# ---------------------------------------------------------------------------
# Kernel 2: fused fc1 + ReLU + fc2 + log_softmax, tiled over batch rows.
# ---------------------------------------------------------------------------
def _fc_head_kernel(x_ref, w1_ref, b1_ref, w2_ref, b2_ref, o_ref):
    h = jnp.dot(x_ref[...], w1_ref[...], preferred_element_type=jnp.float32)
    h = jnp.maximum(h + b1_ref[...], 0.0)
    z = jnp.dot(h.astype(jnp.bfloat16), w2_ref[...],
                preferred_element_type=jnp.float32)
    z = z + b2_ref[...]
    # Mask padded logit columns with a dtype-aware minimum before the row-wise
    # softmax reduction (review: avoid the hard-coded -1e30).
    col = lax.broadcasted_iota(jnp.int32, z.shape, 1)
    z = jnp.where(col < NUM_CLASSES, z, jnp.finfo(z.dtype).min)
    m = jnp.max(z, axis=-1, keepdims=True)
    s = z - m
    lse = jnp.log(jnp.sum(jnp.exp(s), axis=-1, keepdims=True))
    o_ref[...] = (s - lse).astype(o_ref.dtype)


def _fc_head(x, w1, b1, w2, b2):
    B, K = x.shape
    tm = B if B <= 128 else 128
    # NOTE: if B > 128 and not a multiple of 128, the last grid step reads an
    # OOB-padded x block; its garbage rows are masked on writeback (benign).
    return pl.pallas_call(
        _fc_head_kernel,
        out_shape=jax.ShapeDtypeStruct((B, FC2_N), jnp.float32),
        grid=(pl.cdiv(B, tm),),
        in_specs=[
            pl.BlockSpec((tm, K), lambda i: (i, 0)),
            pl.BlockSpec((K, FC1_N), lambda i: (0, 0)),
            pl.BlockSpec((1, FC1_N), lambda i: (0, 0)),
            pl.BlockSpec((FC1_N, FC2_N), lambda i: (0, 0)),
            pl.BlockSpec((1, FC2_N), lambda i: (0, 0)),
        ],
        out_specs=pl.BlockSpec((tm, FC2_N), lambda i: (i, 0)),
        compiler_params=pltpu.CompilerParams(dimension_semantics=("parallel",)),
    )(x, w1, b1, w2, b2)


# ---------------------------------------------------------------------------
# Wrapper-side conv1 im2col (pure index shuffling, cast to bf16 once).
# Row order per image: (pool-phase q=(sr,sc), spatial s=(pr, pc<16)), K=taps.
# ---------------------------------------------------------------------------
def _conv1_patches(x):
    B = x.shape[0]
    img = x[:, 0]                                                # (B,28,28)
    taps = [img[:, ki:ki + 24, kj:kj + 24] for ki in range(5) for kj in range(5)]
    pat = jnp.stack(taps, axis=-1)                               # (B,24,24,25)
    pat = jnp.pad(pat, ((0, 0), (0, 0), (0, 0), (0, K1 - 25)))   # K 25 -> 32
    pat = pat.reshape(B, 12, 2, 12, 2, K1)                       # (B,pr,sr,pc,sc,K)
    pat = pat.transpose(0, 2, 4, 1, 3, 5)                        # (B,sr,sc,pr,pc,K)
    pat = pat.reshape(B, 4, 12, 12, K1)
    pat = jnp.pad(pat, ((0, 0), (0, 0), (0, 0), (0, H1_W - 12), (0, 0)))
    return pat.reshape(B, 4, SPATIAL1, K1).astype(jnp.bfloat16)


def _pick_batch_tile(B):
    # Largest power-of-two tile <= 8 that divides B and leaves grid >= 2
    # (so v7x's second TensorCore gets work); fall back to 1 image per step.
    for cand in (8, 4, 2):
        if B % cand == 0 and B // cand >= 2:
            return cand
    return 1 if B >= 2 else B


# ---------------------------------------------------------------------------
# Parameters: PyTorch-layout init + one-time conversion to kernel layout.
# ---------------------------------------------------------------------------
def init_params(key):
    ks = jax.random.split(key, 8)

    def rnd(k, shape, scale):
        return (scale * jax.random.normal(k, shape)).astype(jnp.float32)

    return {
        "conv1_w": rnd(ks[0], (20, 1, 5, 5), 0.1),
        "conv1_b": rnd(ks[1], (20,), 0.1),
        "conv2_w": rnd(ks[2], (50, 20, 5, 5), 0.05),
        "conv2_b": rnd(ks[3], (50,), 0.05),
        "fc1_w":   rnd(ks[4], (500, 800), 0.03),   # (out, in) like nn.Linear
        "fc1_b":   rnd(ks[5], (500,), 0.03),
        "fc2_w":   rnd(ks[6], (10, 500), 0.05),
        "fc2_b":   rnd(ks[7], (10,), 0.05),
    }


def prepare_params(p):
    """One-time permutation / zero-padding of PyTorch weights to kernel layout."""
    # conv1: (20,1,5,5) -> (32, 32): row = tap ki*5+kj, col = out channel.
    c1 = p["conv1_w"].transpose(2, 3, 1, 0).reshape(25, 20)
    c1 = jnp.pad(c1, ((0, K1 - 25), (0, C1_OC - 20)))
    c1b = jnp.pad(p["conv1_b"], (0, C1_OC - 20)).reshape(1, C1_OC)
    # conv2: (50,20,5,5) -> (800, 64): row = (ki*5+kj)*32 + cin, col = out channel.
    c2 = p["conv2_w"].transpose(2, 3, 1, 0)                       # (5,5,20,50)
    c2 = jnp.pad(c2, ((0, 0), (0, 0), (0, C2_CI - 20), (0, C2_OC - 50)))
    c2 = c2.reshape(K2, C2_OC)
    c2b = jnp.pad(p["conv2_b"], (0, C2_OC - 50)).reshape(1, C2_OC)
    # fc1: torch input index = c*16 + py*4 + px.  Kernel-1 output flat index is
    # py*(7*64) + ox*64 + c with real data only at even ox = 2*px; odd columns
    # and pad channels get zero weight rows (so the kernel never compacts).
    f1 = p["fc1_w"].reshape(500, 50, 4, 4).transpose(2, 3, 1, 0)  # (py,px,c,n)
    f1 = jnp.pad(f1, ((0, 0), (0, 0), (0, C2_OC - 50), (0, FC1_N - 500)))
    f1e = jnp.zeros((4, H2_W, C2_OC, FC1_N), f1.dtype).at[:, 0::2, :, :].set(f1)
    f1e = f1e.reshape(FC1_K, FC1_N)
    f1b = jnp.pad(p["fc1_b"], (0, FC1_N - 500)).reshape(1, FC1_N)
    # fc2: (10,500) -> (512, 128).
    f2 = jnp.pad(p["fc2_w"].T, ((0, FC1_N - 500), (0, FC2_N - 10)))
    f2b = jnp.pad(p["fc2_b"], (0, FC2_N - 10)).reshape(1, FC2_N)
    return {
        "c1w": c1.astype(jnp.bfloat16), "c1b": c1b.astype(jnp.float32),
        "c2w": c2.astype(jnp.bfloat16), "c2b": c2b.astype(jnp.float32),
        "f1w": f1e.astype(jnp.bfloat16), "f1b": f1b.astype(jnp.float32),
        "f2w": f2.astype(jnp.bfloat16), "f2b": f2b.astype(jnp.float32),
    }


# ---------------------------------------------------------------------------
# Forward pass (2 pallas_calls; wrapper does only index shuffling / free reshapes)
# ---------------------------------------------------------------------------
def net_forward(params, x):
    B = x.shape[0]
    patches = _conv1_patches(x)                                  # (B,4,192,32) bf16
    bt = _pick_batch_tile(B)
    h2 = _conv_tower(patches, params["c1w"], params["c1b"],
                     params["c2w"], params["c2b"], bt=bt)        # (B,4,7,64) bf16
    h2f = h2.reshape(B, FC1_K)                                   # free reshape
    out = _fc_head(h2f, params["f1w"], params["f1b"],
                   params["f2w"], params["f2b"])                 # (B,128) f32
    return out[:, :NUM_CLASSES]                                  # (B,10)


# ---------------------------------------------------------------------------
# Pure-JAX reference (PyTorch semantics, f32) for a correctness check.
# ---------------------------------------------------------------------------
def reference_forward(p, x):
    dn = ("NCHW", "OIHW", "NCHW")
    y = lax.conv_general_dilated(x, p["conv1_w"], (1, 1), "VALID", dimension_numbers=dn)
    y = jax.nn.relu(y + p["conv1_b"][None, :, None, None])
    y = lax.reduce_window(y, -jnp.inf, lax.max, (1, 1, 2, 2), (1, 1, 2, 2), "VALID")
    y = lax.conv_general_dilated(y, p["conv2_w"], (1, 1), "VALID", dimension_numbers=dn)
    y = jax.nn.relu(y + p["conv2_b"][None, :, None, None])
    y = lax.reduce_window(y, -jnp.inf, lax.max, (1, 1, 2, 2), (1, 1, 2, 2), "VALID")
    y = y.reshape(y.shape[0], -1)
    y = jax.nn.relu(y @ p["fc1_w"].T + p["fc1_b"])
    y = y @ p["fc2_w"].T + p["fc2_b"]
    return jax.nn.log_softmax(y, axis=-1)


if __name__ == "__main__":
    key = jax.random.PRNGKey(0)
    k_param, k_x = jax.random.split(key)
    torch_params = init_params(k_param)
    params = prepare_params(torch_params)            # one-time layout conversion
    x = jax.random.normal(k_x, (2, 1, 28, 28), dtype=jnp.float32)

    out = jax.block_until_ready(jax.jit(net_forward)(params, x))

    assert out.shape == (2, NUM_CLASSES)
    # log_softmax rows sum to 1 in prob space
    assert jnp.allclose(jnp.sum(jnp.exp(out), axis=1), 1.0, atol=1e-3)
    # matches the f32 reference (loose tol: matmuls run bf16 on the MXU)
    ref = reference_forward(torch_params, x)
    err = float(jnp.max(jnp.abs(out - ref)))
    assert jnp.allclose(out, ref, atol=0.2, rtol=0.05), err
    print("KERNEL_OK")
</pallas_src>

<mosaic_0001>
module attributes {stable_mosaic.version = 11 : i64} {
  func.func @_conv_tower_kernel(%arg0: i32, %arg1: memref<1x4x192x32xbf16, #tpu.memory_space<vmem>>, %arg2: memref<32x32xbf16, #tpu.memory_space<vmem>>, %arg3: memref<1x32xf32, #tpu.memory_space<vmem>>, %arg4: memref<800x64xbf16, #tpu.memory_space<vmem>>, %arg5: memref<1x64xf32, #tpu.memory_space<vmem>>, %arg6: memref<1x4x7x64xbf16, #tpu.memory_space<vmem>>, %arg7: memref<1x12x16x32xf32, #tpu.memory_space<vmem>>) attributes {dimension_semantics = [#tpu.dimension_semantics<parallel>], iteration_bounds = array<i64: 2>, scalar_prefetch = 0 : i64, scratch_operands = 1 : i64, tpu.core_type = #tpu.core_type<tc>, window_params = [{transform_indices = @transform_0, window_bounds = array<i64: 1, 4, 192, 32>}, {pipeline_mode = #tpu.pipeline_mode<synchronous>, transform_indices = @transform_1, window_bounds = array<i64: 32, 32>}, {pipeline_mode = #tpu.pipeline_mode<synchronous>, transform_indices = @transform_2, window_bounds = array<i64: 1, 32>}, {pipeline_mode = #tpu.pipeline_mode<synchronous>, transform_indices = @transform_3, window_bounds = array<i64: 800, 64>}, {pipeline_mode = #tpu.pipeline_mode<synchronous>, transform_indices = @transform_4, window_bounds = array<i64: 1, 64>}, {transform_indices = @transform_5, window_bounds = array<i64: 1, 4, 7, 64>}]} {
    %c0 = arith.constant 0 : index
    %c0_0 = arith.constant 0 : index
    %c0_1 = arith.constant 0 : index
    %c0_2 = arith.constant 0 : index
    %0 = vector.load %arg1[%c0, %c0_0, %c0_1, %c0_2] : memref<1x4x192x32xbf16, #tpu.memory_space<vmem>>, vector<1x4x192x32xbf16>
    %1 = vector.shape_cast %0 : vector<1x4x192x32xbf16> to vector<768x32xbf16>
    %c0_3 = arith.constant 0 : index
    %c0_4 = arith.constant 0 : index
    %2 = vector.load %arg2[%c0_3, %c0_4] : memref<32x32xbf16, #tpu.memory_space<vmem>>, vector<32x32xbf16>
    %cst = arith.constant dense<0.000000e+00> : vector<768x32xf32>
    %3 = tpu.matmul %1, %2, %cst {dimension_numbers = #tpu.dot_dimension_numbers<[1], [0], [0], [1], [0, 0, 1, 1], [], []>} : vector<768x32xbf16>, vector<32x32xbf16>, vector<768x32xf32> -> vector<768x32xf32>
    %4 = vector.shape_cast %3 : vector<768x32xf32> to vector<1x4x192x32xf32>
    %cst_5 = arith.constant dense<0xFF800000> : vector<1x192x32xf32>
    %5 = vector.multi_reduction <maximumf>, %4, %cst_5 [1] : vector<1x4x192x32xf32> to vector<1x192x32xf32>
    %c0_6 = arith.constant 0 : index
    %c0_7 = arith.constant 0 : index
    %6 = vector.load %arg3[%c0_6, %c0_7] : memref<1x32xf32, #tpu.memory_space<vmem>>, vector<1x32xf32>
    %7 = vector.shape_cast %6 : vector<1x32xf32> to vector<1x1x32xf32>
    %8 = vector.broadcast %7 : vector<1x1x32xf32> to vector<1x192x32xf32>
    %9 = arith.addf %5, %8 : vector<1x192x32xf32>
    %cst_8 = arith.constant 0.000000e+00 : f32
    %10 = vector.broadcast %cst_8 : f32 to vector<1x192x32xf32>
    %11 = arith.maximumf %9, %10 : vector<1x192x32xf32>
    %12 = vector.shape_cast %11 : vector<1x192x32xf32> to vector<1x12x16x32xf32>
    %c0_9 = arith.constant 0 : index
    %c0_10 = arith.constant 0 : index
    %c0_11 = arith.constant 0 : index
    %c0_12 = arith.constant 0 : index
    %13 = vector.load %arg7[%c0_9, %c0_10, %c0_11, %c0_12] : memref<1x12x16x32xf32, #tpu.memory_space<vmem>>, vector<1x12x16x32xf32>
    tpu.vector_store %arg7[%c0_9, %c0_10, %c0_11, %c0_12], %12 {strides = array<i32>} : memref<1x12x16x32xf32, #tpu.memory_space<vmem>>, vector<1x12x16x32xf32>,
    %c0_13 = arith.constant 0 : index
    %c0_14 = arith.constant 0 : index
    %c0_15 = arith.constant 0 : index
    %c0_16 = arith.constant 0 : index
    %14 = vector.load %arg7[%c0_13, %c0_14, %c0_15, %c0_16] : memref<1x12x16x32xf32, #tpu.memory_space<vmem>>, vector<1x8x8x32xf32>
    %15 = vector.shape_cast %14 : vector<1x8x8x32xf32> to vector<64x32xf32>
    %c0_17 = arith.constant 0 : index
    %c0_18 = arith.constant 0 : index
    %c1 = arith.constant 1 : index
    %c0_19 = arith.constant 0 : index
    %16 = vector.load %arg7[%c0_17, %c0_18, %c1, %c0_19] : memref<1x12x16x32xf32, #tpu.memory_space<vmem>>, vector<1x8x8x32xf32>
    %17 = vector.shape_cast %16 : vector<1x8x8x32xf32> to vector<64x32xf32>
    %c0_20 = arith.constant 0 : index
    %c0_21 = arith.constant 0 : index
    %c2 = arith.constant 2 : index
    %c0_22 = arith.constant 0 : index
    %18 = vector.load %arg7[%c0_20, %c0_21, %c2, %c0_22] : memref<1x12x16x32xf32, #tpu.memory_space<vmem>>, vector<1x8x8x32xf32>
    %19 = vector.shape_cast %18 : vector<1x8x8x32xf32> to vector<64x32xf32>
    %c0_23 = arith.constant 0 : index
    %c0_24 = arith.constant 0 : index
    %c3 = arith.constant 3 : index
    %c0_25 = arith.constant 0 : index
    %20 = vector.load %arg7[%c0_23, %c0_24, %c3, %c0_25] : memref<1x12x16x32xf32, #tpu.memory_space<vmem>>, vector<1x8x8x32xf32>
    %21 = vector.shape_cast %20 : vector<1x8x8x32xf32> to vector<64x32xf32>
    %c0_26 = arith.constant 0 : index
    %c0_27 = arith.constant 0 : index
    %c4 = arith.constant 4 : index
    %c0_28 = arith.constant 0 : index
    %22 = vector.load %arg7[%c0_26, %c0_27, %c4, %c0_28] : memref<1x12x16x32xf32, #tpu.memory_space<vmem>>, vector<1x8x8x32xf32>
    %23 = vector.shape_cast %22 : vector<1x8x8x32xf32> to vector<64x32xf32>
    %c0_29 = arith.constant 0 : index
    %c1_30 = arith.constant 1 : index
    %c0_31 = arith.constant 0 : index
    %c0_32 = arith.constant 0 : index
    %24 = vector.load %arg7[%c0_29, %c1_30, %c0_31, %c0_32] : memref<1x12x16x32xf32, #tpu.memory_space<vmem>>, vector<1x8x8x32xf32>
    %25 = vector.shape_cast %24 : vector<1x8x8x32xf32> to vector<64x32xf32>
    %c0_33 = arith.constant 0 : index
    %c1_34 = arith.constant 1 : index
    %c1_35 = arith.constant 1 : index
    %c0_36 = arith.constant 0 : index
    %26 = vector.load %arg7[%c0_33, %c1_34, %c1_35, %c0_36] : memref<1x12x16x32xf32, #tpu.memory_space<vmem>>, vector<1x8x8x32xf32>
    %27 = vector.shape_cast %26 : vector<1x8x8x32xf32> to vector<64x32xf32>
    %c0_37 = arith.constant 0 : index
    %c1_38 = arith.constant 1 : index
    %c2_39 = arith.constant 2 : index
    %c0_40 = arith.constant 0 : index
    %28 = vector.load %arg7[%c0_37, %c1_38, %c2_39, %c0_40] : memref<1x12x16x32xf32, #tpu.memory_space<vmem>>, vector<1x8x8x32xf32>
    %29 = vector.shape_cast %28 : vector<1x8x8x32xf32> to vector<64x32xf32>
    %c0_41 = arith.constant 0 : index
    %c1_42 = arith.constant 1 : index
    %c3_43 = arith.constant 3 : index
    %c0_44 = arith.constant 0 : index
    %30 = vector.load %arg7[%c0_41, %c1_42, %c3_43, %c0_44] : memref<1x12x16x32xf32, #tpu.memory_space<vmem>>, vector<1x8x8x32xf32>
    %31 = vector.shape_cast %30 : vector<1x8x8x32xf32> to vector<64x32xf32>
    %c0_45 = arith.constant 0 : index
    %c1_46 = arith.constant 1 : index
    %c4_47 = arith.constant 4 : index
    %c0_48 = arith.constant 0 : index
    %32 = vector.load %arg7[%c0_45, %c1_46, %c4_47, %c0_48] : memref<1x12x16x32xf32, #tpu.memory_space<vmem>>, vector<1x8x8x32xf32>
    %33 = vector.shape_cast %32 : vector<1x8x8x32xf32> to vector<64x32xf32>
    %c0_49 = arith.constant 0 : index
    %c2_50 = arith.constant 2 : index
    %c0_51 = arith.constant 0 : index
    %c0_52 = arith.constant 0 : index
    %34 = vector.load %arg7[%c0_49, %c2_50, %c0_51, %c0_52] : memref<1x12x16x32xf32, #tpu.memory_space<vmem>>, vector<1x8x8x32xf32>
    %35 = vector.shape_cast %34 : vector<1x8x8x32xf32> to vector<64x32xf32>
    %c0_53 = arith.constant 0 : index
    %c2_54 = arith.constant 2 : index
    %c1_55 = arith.constant 1 : index
    %c0_56 = arith.constant 0 : index
    %36 = vector.load %arg7[%c0_53, %c2_54, %c1_55, %c0_56] : memref<1x12x16x32xf32, #tpu.memory_space<vmem>>, vector<1x8x8x32xf32>
    %37 = vector.shape_cast %36 : vector<1x8x8x32xf32> to vector<64x32xf32>
    %c0_57 = arith.constant 0 : index
    %c2_58 = arith.constant 2 : index
    %c2_59 = arith.constant 2 : index
    %c0_60 = arith.constant 0 : index
    %38 = vector.load %arg7[%c0_57, %c2_58, %c2_59, %c0_60] : memref<1x12x16x32xf32, #tpu.memory_space<vmem>>, vector<1x8x8x32xf32>
    %39 = vector.shape_cast %38 : vector<1x8x8x32xf32> to vector<64x32xf32>
    %c0_61 = arith.constant 0 : index
    %c2_62 = arith.constant 2 : index
    %c3_63 = arith.constant 3 : index
    %c0_64 = arith.constant 0 : index
    %40 = vector.load %arg7[%c0_61, %c2_62, %c3_63, %c0_64] : memref<1x12x16x32xf32, #tpu.memory_space<vmem>>, vector<1x8x8x32xf32>
    %41 = vector.shape_cast %40 : vector<1x8x8x32xf32> to vector<64x32xf32>
    %c0_65 = arith.constant 0 : index
    %c2_66 = arith.constant 2 : index
    %c4_67 = arith.constant 4 : index
    %c0_68 = arith.constant 0 : index
    %42 = vector.load %arg7[%c0_65, %c2_66, %c4_67, %c0_68] : memref<1x12x16x32xf32, #tpu.memory_space<vmem>>, vector<1x8x8x32xf32>
    %43 = vector.shape_cast %42 : vector<1x8x8x32xf32> to vector<64x32xf32>
    %c0_69 = arith.constant 0 : index
    %c3_70 = arith.constant 3 : index
    %c0_71 = arith.constant 0 : index
    %c0_72 = arith.constant 0 : index
    %44 = vector.load %arg7[%c0_69, %c3_70, %c0_71, %c0_72] : memref<1x12x16x32xf32, #tpu.memory_space<vmem>>, vector<1x8x8x32xf32>
    %45 = vector.shape_cast %44 : vector<1x8x8x32xf32> to vector<64x32xf32>
    %c0_73 = arith.constant 0 : index
    %c3_74 = arith.constant 3 : index
    %c1_75 = arith.constant 1 : index
    %c0_76 = arith.constant 0 : index
    %46 = vector.load %arg7[%c0_73, %c3_74, %c1_75, %c0_76] : memref<1x12x16x32xf32, #tpu.memory_space<vmem>>, vector<1x8x8x32xf32>
    %47 = vector.shape_cast %46 : vector<1x8x8x32xf32> to vector<64x32xf32>
    %c0_77 = arith.constant 0 : index
    %c3_78 = arith.constant 3 : index
    %c2_79 = arith.constant 2 : index
    %c0_80 = arith.constant 0 : index
    %48 = vector.load %arg7[%c0_77, %c3_78, %c2_79, %c0_80] : memref<1x12x16x32xf32, #tpu.memory_space<vmem>>, vector<1x8x8x32xf32>
    %49 = vector.shape_cast %48 : vector<1x8x8x32xf32> to vector<64x32xf32>
    %c0_81 = arith.constant 0 : index
    %c3_82 = arith.constant 3 : index
    %c3_83 = arith.constant 3 : index
    %c0_84 = arith.constant 0 : index
    %50 = vector.load %arg7[%c0_81, %c3_82, %c3_83, %c0_84] : memref<1x12x16x32xf32, #tpu.memory_space<vmem>>, vector<1x8x8x32xf32>
    %51 = vector.shape_cast %50 : vector<1x8x8x32xf32> to vector<64x32xf32>
    %c0_85 = arith.constant 0 : index
    %c3_86 = arith.constant 3 : index
    %c4_87 = arith.constant 4 : index
    %c0_88 = arith.constant 0 : index
    %52 = vector.load %arg7[%c0_85, %c3_86, %c4_87, %c0_88] : memref<1x12x16x32xf32, #tpu.memory_space<vmem>>, vector<1x8x8x32xf32>
    %53 = vector.shape_cast %52 : vector<1x8x8x32xf32> to vector<64x32xf32>
    %c0_89 = arith.constant 0 : index
    %c4_90 = arith.constant 4 : index
    %c0_91 = arith.constant 0 : index
    %c0_92 = arith.constant 0 : index
    %54 = vector.load %arg7[%c0_89, %c4_90, %c0_91, %c0_92] : memref<1x12x16x32xf32, #tpu.memory_space<vmem>>, vector<1x8x8x32xf32>
    %55 = vector.shape_cast %54 : vector<1x8x8x32xf32> to vector<64x32xf32>
    %c0_93 = arith.constant 0 : index
    %c4_94 = arith.constant 4 : index
    %c1_95 = arith.constant 1 : index
    %c0_96 = arith.constant 0 : index
    %56 = vector.load %arg7[%c0_93, %c4_94, %c1_95, %c0_96] : memref<1x12x16x32xf32, #tpu.memory_space<vmem>>, vector<1x8x8x32xf32>
    %57 = vector.shape_cast %56 : vector<1x8x8x32xf32> to vector<64x32xf32>
    %c0_97 = arith.constant 0 : index
    %c4_98 = arith.constant 4 : index
    %c2_99 = arith.constant 2 : index
    %c0_100 = arith.constant 0 : index
    %58 = vector.load %arg7[%c0_97, %c4_98, %c2_99, %c0_100] : memref<1x12x16x32xf32, #tpu.memory_space<vmem>>, vector<1x8x8x32xf32>
    %59 = vector.shape_cast %58 : vector<1x8x8x32xf32> to vector<64x32xf32>
    %c0_101 = arith.constant 0 : index
    %c4_102 = arith.constant 4 : index
    %c3_103 = arith.constant 3 : index
    %c0_104 = arith.constant 0 : index
    %60 = vector.load %arg7[%c0_101, %c4_102, %c3_103, %c0_104] : memref<1x12x16x32xf32, #tpu.memory_space<vmem>>, vector<1x8x8x32xf32>
    %61 = vector.shape_cast %60 : vector<1x8x8x32xf32> to vector<64x32xf32>
    %c0_105 = arith.constant 0 : index
    %c4_106 = arith.constant 4 : index
    %c4_107 = arith.constant 4 : index
    %c0_108 = arith.constant 0 : index
    %62 = vector.load %arg7[%c0_105, %c4_106, %c4_107, %c0_108] : memref<1x12x16x32xf32, #tpu.memory_space<vmem>>, vector<1x8x8x32xf32>
    %63 = vector.shape_cast %62 : vector<1x8x8x32xf32> to vector<64x32xf32>
    %64 = tpu.concatenate %15, %17, %19, %21, %23, %25, %27, %29, %31, %33, %35, %37, %39, %41, %43, %45 in 1 : vector<64x32xf32>, vector<64x32xf32>, vector<64x32xf32>, vector<64x32xf32>, vector<64x32xf32>, vector<64x32xf32>, vector<64x32xf32>, vector<64x32xf32>, vector<64x32xf32>, vector<64x32xf32>, vector<64x32xf32>, vector<64x32xf32>, vector<64x32xf32>, vector<64x32xf32>, vector<64x32xf32>, vector<64x32xf32> -> vector<64x512xf32>
    %65 = tpu.concatenate %47, %49, %51, %53, %55, %57, %59, %61, %63 in 1 : vector<64x32xf32>, vector<64x32xf32>, vector<64x32xf32>, vector<64x32xf32>, vector<64x32xf32>, vector<64x32xf32>, vector<64x32xf32>, vector<64x32xf32>, vector<64x32xf32> -> vector<64x288xf32>
    %66 = tpu.concatenate %64, %65 in 1 : vector<64x512xf32>, vector<64x288xf32> -> vector<64x800xf32>
    %67 = arith.truncf %66 : vector<64x800xf32> to vector<64x800xbf16>
    %c0_109 = arith.constant 0 : index
    %c0_110 = arith.constant 0 : index
    %68 = vector.load %arg4[%c0_109, %c0_110] : memref<800x64xbf16, #tpu.memory_space<vmem>>, vector<800x64xbf16>
    %cst_111 = arith.constant dense<0.000000e+00> : vector<64x64xf32>
    %69 = tpu.matmul %67, %68, %cst_111 {dimension_numbers = #tpu.dot_dimension_numbers<[1], [0], [0], [1], [0, 0, 1, 1], [], []>} : vector<64x800xbf16>, vector<800x64xbf16>, vector<64x64xf32> -> vector<64x64xf32>
    %70 = vector.shape_cast %69 : vector<64x64xf32> to vector<1x4x2x8x64xf32>
    %cst_112 = arith.constant dense<0xFF800000> : vector<1x4x8x64xf32>
    %71 = vector.multi_reduction <maximumf>, %70, %cst_112 [2] : vector<1x4x2x8x64xf32> to vector<1x4x8x64xf32>
    %72 = vector.extract_strided_slice %71 {offsets = [0, 0, 0, 0], sizes = [1, 4, 7, 64], strides = [1, 1, 1, 1]} : vector<1x4x8x64xf32> to vector<1x4x7x64xf32>
    %73 = vector.extract_strided_slice %71 {offsets = [0, 0, 1, 0], sizes = [1, 4, 7, 64], strides = [1, 1, 1, 1]} : vector<1x4x8x64xf32> to vector<1x4x7x64xf32>
    %74 = arith.maximumf %72, %73 : vector<1x4x7x64xf32>
    %c0_113 = arith.constant 0 : index
    %c0_114 = arith.constant 0 : index
    %75 = vector.load %arg5[%c0_113, %c0_114] : memref<1x64xf32, #tpu.memory_space<vmem>>, vector<1x64xf32>
    %76 = vector.shape_cast %75 : vector<1x64xf32> to vector<1x1x1x64xf32>
    %77 = vector.broadcast %76 : vector<1x1x1x64xf32> to vector<1x4x7x64xf32>
    %78 = arith.addf %74, %77 : vector<1x4x7x64xf32>
    %cst_115 = arith.constant 0.000000e+00 : f32
    %79 = vector.broadcast %cst_115 : f32 to vector<1x4x7x64xf32>
    %80 = arith.maximumf %78, %79 : vector<1x4x7x64xf32>
    %81 = arith.truncf %80 : vector<1x4x7x64xf32> to vector<1x4x7x64xbf16>
    %c0_116 = arith.constant 0 : index
    %c0_117 = arith.constant 0 : index
    %c0_118 = arith.constant 0 : index
    %c0_119 = arith.constant 0 : index
    %82 = vector.load %arg6[%c0_116, %c0_117, %c0_118, %c0_119] : memref<1x4x7x64xbf16, #tpu.memory_space<vmem>>, vector<1x4x7x64xbf16>
    tpu.vector_store %arg6[%c0_116, %c0_117, %c0_118, %c0_119], %81 {strides = array<i32>} : memref<1x4x7x64xbf16, #tpu.memory_space<vmem>>, vector<1x4x7x64xbf16>,
    return
  }
  func.func @transform_0(%arg0: i32) -> (i32, i32, i32, i32) {
    %c0_i32 = arith.constant 0 : i32
    %c0_i32_0 = arith.constant 0 : i32
    %c0_i32_1 = arith.constant 0 : i32
    %c0_i32_2 = arith.constant 0 : i32
    return %arg0, %c0_i32, %c0_i32_0, %c0_i32_1 : i32, i32, i32, i32
  }
  func.func @transform_1(%arg0: i32) -> (i32, i32) {
    %c0_i32 = arith.constant 0 : i32
    %c0_i32_0 = arith.constant 0 : i32
    %c0_i32_1 = arith.constant 0 : i32
    return %c0_i32, %c0_i32_0 : i32, i32
  }
  func.func @transform_2(%arg0: i32) -> (i32, i32) {
    %c0_i32 = arith.constant 0 : i32
    %c0_i32_0 = arith.constant 0 : i32
    %c0_i32_1 = arith.constant 0 : i32
    return %c0_i32, %c0_i32_0 : i32, i32
  }
  func.func @transform_3(%arg0: i32) -> (i32, i32) {
    %c0_i32 = arith.constant 0 : i32
    %c0_i32_0 = arith.constant 0 : i32
    %c0_i32_1 = arith.constant 0 : i32
    return %c0_i32, %c0_i32_0 : i32, i32
  }
  func.func @transform_4(%arg0: i32) -> (i32, i32) {
    %c0_i32 = arith.constant 0 : i32
    %c0_i32_0 = arith.constant 0 : i32
    %c0_i32_1 = arith.constant 0 : i32
    return %c0_i32, %c0_i32_0 : i32, i32
  }
  func.func @transform_5(%arg0: i32) -> (i32, i32, i32, i32) {
    %c0_i32 = arith.constant 0 : i32
    %c0_i32_0 = arith.constant 0 : i32
    %c0_i32_1 = arith.constant 0 : i32
    %c0_i32_2 = arith.constant 0 : i32
    return %arg0, %c0_i32, %c0_i32_0, %c0_i32_1 : i32, i32, i32, i32
  }
}

module attributes {stable_mosaic.version = 11 : i64} {
  func.func @_fc_head_kernel(%arg0: i32, %arg1: memref<2x1792xbf16, #tpu.memory_space<vmem>>, %arg2: memref<1792x512xbf16, #tpu.memory_space<vmem>>, %arg3: memref<1x512xf32, #tpu.memory_space<vmem>>, %arg4: memref<512x128xbf16, #tpu.memory_space<vmem>>, %arg5: memref<1x128xf32, #tpu.memory_space<vmem>>, %arg6: memref<2x128xf32, #tpu.memory_space<vmem>>) attributes {dimension_semantics = [#tpu.dimension_semantics<parallel>], iteration_bounds = array<i64: 1>, scalar_prefetch = 0 : i64, scratch_operands = 0 : i64, tpu.core_type = #tpu.core_type<tc>, window_params = [{transform_indices = @transform_0, window_bounds = array<i64: 2, 1792>}, {pipeline_mode = #tpu.pipeline_mode<synchronous>, transform_indices = @transform_1, window_bounds = array<i64: 1792, 512>}, {pipeline_mode = #tpu.pipeline_mode<synchronous>, transform_indices = @transform_2, window_bounds = array<i64: 1, 512>}, {pipeline_mode = #tpu.pipeline_mode<synchronous>, transform_indices = @transform_3, window_bounds = array<i64: 512, 128>}, {pipeline_mode = #tpu.pipeline_mode<synchronous>, transform_indices = @transform_4, window_bounds = array<i64: 1, 128>}, {transform_indices = @transform_5, window_bounds = array<i64: 2, 128>}]} {
    %c0 = arith.constant 0 : index
    %c0_0 = arith.constant 0 : index
    %0 = vector.load %arg1[%c0, %c0_0] : memref<2x1792xbf16, #tpu.memory_space<vmem>>, vector<2x1792xbf16>
    %c0_1 = arith.constant 0 : index
    %c0_2 = arith.constant 0 : index
    %1 = vector.load %arg2[%c0_1, %c0_2] : memref<1792x512xbf16, #tpu.memory_space<vmem>>, vector<1792x512xbf16>
    %cst = arith.constant dense<0.000000e+00> : vector<2x512xf32>
    %2 = tpu.matmul %0, %1, %cst {dimension_numbers = #tpu.dot_dimension_numbers<[1], [0], [0], [1], [0, 0, 1, 1], [], []>} : vector<2x1792xbf16>, vector<1792x512xbf16>, vector<2x512xf32> -> vector<2x512xf32>
    %c0_3 = arith.constant 0 : index
    %c0_4 = arith.constant 0 : index
    %3 = vector.load %arg3[%c0_3, %c0_4] : memref<1x512xf32, #tpu.memory_space<vmem>>, vector<1x512xf32>
    %4 = vector.broadcast %3 : vector<1x512xf32> to vector<2x512xf32>
    %5 = arith.addf %2, %4 : vector<2x512xf32>
    %cst_5 = arith.constant 0.000000e+00 : f32
    %6 = vector.broadcast %cst_5 : f32 to vector<2x512xf32>
    %7 = arith.maximumf %5, %6 : vector<2x512xf32>
    %8 = arith.truncf %7 : vector<2x512xf32> to vector<2x512xbf16>
    %c0_6 = arith.constant 0 : index
    %c0_7 = arith.constant 0 : index
    %9 = vector.load %arg4[%c0_6, %c0_7] : memref<512x128xbf16, #tpu.memory_space<vmem>>, vector<512x128xbf16>
    %cst_8 = arith.constant dense<0.000000e+00> : vector<2x128xf32>
    %10 = tpu.matmul %8, %9, %cst_8 {dimension_numbers = #tpu.dot_dimension_numbers<[1], [0], [0], [1], [0, 0, 1, 1], [], []>} : vector<2x512xbf16>, vector<512x128xbf16>, vector<2x128xf32> -> vector<2x128xf32>
    %c0_9 = arith.constant 0 : index
    %c0_10 = arith.constant 0 : index
    %11 = vector.load %arg5[%c0_9, %c0_10] : memref<1x128xf32, #tpu.memory_space<vmem>>, vector<1x128xf32>
    %12 = vector.broadcast %11 : vector<1x128xf32> to vector<2x128xf32>
    %13 = arith.addf %10, %12 : vector<2x128xf32>
    %14 = tpu.iota {dimensions = array<i32: 1>} : vector<2x128xi32>
    %c10_i32 = arith.constant 10 : i32
    %15 = vector.broadcast %c10_i32 : i32 to vector<2x128xi32>
    %16 = arith.cmpi slt, %14, %15 : vector<2x128xi32>
    %cst_11 = arith.constant -3.40282347E+38 : f32
    %17 = vector.broadcast %cst_11 : f32 to vector<2x128xf32>
    %18 = arith.select %16, %13, %17 : vector<2x128xi1>, vector<2x128xf32>
    %cst_12 = arith.constant dense<0xFF800000> : vector<2xf32>
    %19 = vector.multi_reduction <maximumf>, %18, %cst_12 [1] : vector<2x128xf32> to vector<2xf32>
    %20 = vector.shape_cast %19 : vector<2xf32> to vector<2x1xf32>
    %21 = vector.broadcast %20 : vector<2x1xf32> to vector<2x128xf32>
    %22 = arith.subf %18, %21 : vector<2x128xf32>
    %23 = math.exp %22 : vector<2x128xf32>
    %cst_13 = arith.constant dense<0.000000e+00> : vector<2xf32>
    %24 = vector.multi_reduction <add>, %23, %cst_13 [1] : vector<2x128xf32> to vector<2xf32>
    %25 = vector.shape_cast %24 : vector<2xf32> to vector<2x1xf32>
    %26 = math.log %25 : vector<2x1xf32>
    %27 = vector.broadcast %26 : vector<2x1xf32> to vector<2x128xf32>
    %28 = arith.subf %22, %27 : vector<2x128xf32>
    %c0_14 = arith.constant 0 : index
    %c0_15 = arith.constant 0 : index
    %29 = vector.load %arg6[%c0_14, %c0_15] : memref<2x128xf32, #tpu.memory_space<vmem>>, vector<2x128xf32>
    tpu.vector_store %arg6[%c0_14, %c0_15], %28 {strides = array<i32>} : memref<2x128xf32, #tpu.memory_space<vmem>>, vector<2x128xf32>,
    return
  }
  func.func @transform_0(%arg0: i32) -> (i32, i32) {
    %c0_i32 = arith.constant 0 : i32
    %c0_i32_0 = arith.constant 0 : i32
    return %arg0, %c0_i32 : i32, i32
  }
  func.func @transform_1(%arg0: i32) -> (i32, i32) {
    %c0_i32 = arith.constant 0 : i32
    %c0_i32_0 = arith.constant 0 : i32
    %c0_i32_1 = arith.constant 0 : i32
    return %c0_i32, %c0_i32_0 : i32, i32
  }
  func.func @transform_2(%arg0: i32) -> (i32, i32) {
    %c0_i32 = arith.constant 0 : i32
    %c0_i32_0 = arith.constant 0 : i32
    %c0_i32_1 = arith.constant 0 : i32
    return %c0_i32, %c0_i32_0 : i32, i32
  }
  func.func @transform_3(%arg0: i32) -> (i32, i32) {
    %c0_i32 = arith.constant 0 : i32
    %c0_i32_0 = arith.constant 0 : i32
    %c0_i32_1 = arith.constant 0 : i32
    return %c0_i32, %c0_i32_0 : i32, i32
  }
  func.func @transform_4(%arg0: i32) -> (i32, i32) {
    %c0_i32 = arith.constant 0 : i32
    %c0_i32_0 = arith.constant 0 : i32
    %c0_i32_1 = arith.constant 0 : i32
    return %c0_i32, %c0_i32_0 : i32, i32
  }
  func.func @transform_5(%arg0: i32) -> (i32, i32) {
    %c0_i32 = arith.constant 0 : i32
    %c0_i32_0 = arith.constant 0 : i32
    return %arg0, %c0_i32 : i32, i32
  }
}

</mosaic_0001>

<llo_original>
// kernel: net_forward.2
$region0: #{net_forward.2}
  #allocation0 [shape = 'u32[]', space=smem, size = 0x4, offset = 0x4, fixed_abs, tag = 'smem constant byte address 0x4 - core index']
  #allocation1 [shape = 'u32[144,128]{1,0:T(1,128)}', space=vmem, size = 0x12000, scoped, tag = 'internal scratch']
  #allocation2 [shape = 'f32[1,12,16,32]{3,2,1,0:T(8,128)}', space=vmem, size = 0x18000, scoped, tag = 'scratch operand']
  %s0 = inlined_call_operand.vmem [shape: bf16[2,4,192,32], index: 0, kind: input, shape index: {}]
  %s1 = inlined_call_operand.vmem [shape: bf16[32,32], index: 1, kind: input, shape index: {}]
  %s2 = inlined_call_operand.vmem [shape: f32[1,32], index: 2, kind: input, shape index: {}]
  %s3 = inlined_call_operand.vmem [shape: bf16[800,64], index: 3, kind: input, shape index: {}]
  %s4 = inlined_call_operand.vmem [shape: f32[1,64], index: 4, kind: input, shape index: {}]
  %s5 = inlined_call_operand.vmem [shape: bf16[2,4,7,64], index: 5, kind: output, shape index: {}]
  %s6 = sld [smem:[#allocation0]]
  $region53: #{net_forward.2} parent=0
    _
  %s8 = ssub.s32 1, %s6
  %s9 = scalar_select 0, %s8, %s6
  loop: start=0, step=1, limit=4
  $region2: #{net_forward.2} parent=0 // loop_pre_header
    _
  $region3: #{net_forward.2} parent=0 // loop_header
    %s11 = sphi 0, %s15
    %p12 = scmp.ge.s32.totalorder %s11, 4
    %s21 = sphi 0, %s23
    %s24 = sphi 0, %s21
    %s25 = sphi 0, %s24
    %s41 = sphi 0, %s25
    %s45 = sphi 0, %s45
    %s47 = sphi 0, %s45
    %s48 = sphi 0, %s47
    %s62 = sphi 0, %s48
    %s66 = sphi 0, %s66
    %s68 = sphi 0, %s66
    %s69 = sphi 0, %s68
    %s83 = sphi 0, %s69
    %s87 = sphi 0, %s87
    %s89 = sphi 0, %s87
    %s90 = sphi 0, %s89
    %s104 = sphi 0, %s90
    %s108 = sphi 0, %s108
    %s110 = sphi 0, %s108
    %s111 = sphi 0, %s110
    %s125 = sphi 0, %s111
    %s131 = sphi 0, %s133
    %s134 = sphi 0, %s131
    %s135 = sphi 0, %s134
    %s151 = sphi 0, %s135
  $region4: #{net_forward.2} parent=0 // loop_header_branch
    %14 = sbr.rel (%p12) target = $region8
  $region5: #{net_forward.2} parent=0 // loop_body
    %s16 = ssub.s32 %s11, 1
    %s17 = ssub.s32 %s11, 2
    %s18 = sadd.s32 %s11, 1
    %s19 = ssub.s32 %s11, %s18
    %p20 = scmp.eq.s32.totalorder %s19, 0
    %s22 = sadd.s32 %s21, 1
    %s23 = scalar_select %p20, %s21, %s22
    %p26 = pneg %p20
    %p27 = scmp.eq.s32.totalorder %s11, 1
    %p28 = por %p26, %p27
    %p29 = scmp.ne.s32.totalorder %s21, %s24
    %p30 = scmp.eq.s32.totalorder %s11, 0
    %p31 = por %p29, %p30
    %p32 = scmp.ne.s32.totalorder %s21, %s24
    %p33 = scmp.eq.s32.totalorder %s16, 1
    %p34 = por %p32, %p33
    %p35 = scmp.ne.s32.totalorder %s24, %s25
    %p36 = scmp.eq.s32.totalorder %s16, 0
    %p37 = por %p35, %p36
    %p38 = scmp.ne.s32.totalorder %s24, %s25
    %p39 = scmp.eq.s32.totalorder %s17, 1
    %p40 = por %p38, %p39
    %p42 = scmp.ne.s32.totalorder %s25, %s41
    %p43 = scmp.eq.s32.totalorder %s17, 0
    %p44 = por %p42, %p43
    %s46 = sadd.s32 %s45, 1
    %p49 = scmp.eq.s32.totalorder %s11, 1
    %p50 = scmp.ne.s32.totalorder %s45, %s47
    %p51 = scmp.eq.s32.totalorder %s11, 0
    %p52 = por %p50, %p51
    %p53 = scmp.ne.s32.totalorder %s45, %s47
    %p54 = scmp.eq.s32.totalorder %s16, 1
    %p55 = por %p53, %p54
    %p56 = scmp.ne.s32.totalorder %s47, %s48
    %p57 = scmp.eq.s32.totalorder %s16, 0
    %p58 = por %p56, %p57
    %p59 = scmp.ne.s32.totalorder %s47, %s48
    %p60 = scmp.eq.s32.totalorder %s17, 1
    %p61 = por %p59, %p60
    %p63 = scmp.ne.s32.totalorder %s48, %s62
    %p64 = scmp.eq.s32.totalorder %s17, 0
    %p65 = por %p63, %p64
    %s67 = sadd.s32 %s66, 1
    %p70 = scmp.eq.s32.totalorder %s11, 1
    %p71 = scmp.ne.s32.totalorder %s66, %s68
    %p72 = scmp.eq.s32.totalorder %s11, 0
    %p73 = por %p71, %p72
    %p74 = scmp.ne.s32.totalorder %s66, %s68
    %p75 = scmp.eq.s32.totalorder %s16, 1
    %p76 = por %p74, %p75
    %p77 = scmp.ne.s32.totalorder %s68, %s69
    %p78 = scmp.eq.s32.totalorder %s16, 0
    %p79 = por %p77, %p78
    %p80 = scmp.ne.s32.totalorder %s68, %s69
    %p81 = scmp.eq.s32.totalorder %s17, 1
    %p82 = por %p80, %p81
    %p84 = scmp.ne.s32.totalorder %s69, %s83
    %p85 = scmp.eq.s32.totalorder %s17, 0
    %p86 = por %p84, %p85
    %s88 = sadd.s32 %s87, 1
    %p91 = scmp.eq.s32.totalorder %s11, 1
    %p92 = scmp.ne.s32.totalorder %s87, %s89
    %p93 = scmp.eq.s32.totalorder %s11, 0
    %p94 = por %p92, %p93
    %p95 = scmp.ne.s32.totalorder %s87, %s89
    %p96 = scmp.eq.s32.totalorder %s16, 1
    %p97 = por %p95, %p96
    %p98 = scmp.ne.s32.totalorder %s89, %s90
    %p99 = scmp.eq.s32.totalorder %s16, 0
    %p100 = por %p98, %p99
    %p101 = scmp.ne.s32.totalorder %s89, %s90
    %p102 = scmp.eq.s32.totalorder %s17, 1
    %p103 = por %p101, %p102
    %p105 = scmp.ne.s32.totalorder %s90, %s104
    %p106 = scmp.eq.s32.totalorder %s17, 0
    %p107 = por %p105, %p106
    %s109 = sadd.s32 %s108, 1
    %p112 = scmp.eq.s32.totalorder %s11, 1
    %p113 = scmp.ne.s32.totalorder %s108, %s110
    %p114 = scmp.eq.s32.totalorder %s11, 0
    %p115 = por %p113, %p114
    %p116 = scmp.ne.s32.totalorder %s108, %s110
    %p117 = scmp.eq.s32.totalorder %s16, 1
    %p118 = por %p116, %p117
    %p119 = scmp.ne.s32.totalorder %s110, %s111
    %p120 = scmp.eq.s32.totalorder %s16, 0
    %p121 = por %p119, %p120
    %p122 = scmp.ne.s32.totalorder %s110, %s111
    %p123 = scmp.eq.s32.totalorder %s17, 1
    %p124 = por %p122, %p123
    %p126 = scmp.ne.s32.totalorder %s111, %s125
    %p127 = scmp.eq.s32.totalorder %s17, 0
    %p128 = por %p126, %p127
    %s129 = ssub.s32 %s11, %s18
    %p130 = scmp.eq.s32.totalorder %s129, 0
    %s132 = sadd.s32 %s131, 1
    %s133 = scalar_select %p130, %s131, %s132
    %p136 = pneg %p130
    %p137 = scmp.eq.s32.totalorder %s11, 1
    %p138 = por %p136, %p137
    %p139 = scmp.ne.s32.totalorder %s131, %s134
    %p140 = scmp.eq.s32.totalorder %s11, 0
    %p141 = por %p139, %p140
    %p142 = scmp.ne.s32.totalorder %s131, %s134
    %p143 = scmp.eq.s32.totalorder %s16, 1
    %p144 = por %p142, %p143
    %p145 = scmp.ne.s32.totalorder %s134, %s135
    %p146 = scmp.eq.s32.totalorder %s16, 0
    %p147 = por %p145, %p146
    %p148 = scmp.ne.s32.totalorder %s134, %s135
    %p149 = scmp.eq.s32.totalorder %s17, 1
    %p150 = por %p148, %p149
    %p152 = scmp.ne.s32.totalorder %s135, %s151
    %p153 = scmp.eq.s32.totalorder %s17, 0
    %p154 = por %p152, %p153
    %p155 = scmp.le.s32.totalorder 1, %s11
    %p156 = scmp.lt.s32.totalorder %s11, 3
    %p157 = pnand %p155, %p156
    %p158 = pneg %p157
    // Predicated region
    $region9: #{net_forward.2} parent=5 // pred_check
      _
    $region10: #{net_forward.2} parent=5 // pred_check_branch
      %160 = sbr.rel (%p157) target = $region12
    $region11: #{net_forward.2} parent=5 // pred_region
      %s161 = ssub.s32 %s11, 1
      // Predicated region
      $region13: #{net_forward.2} parent=11 // pred_check
        %p162 = pneg %p58
      $region14: #{net_forward.2} parent=11 // pred_check_branch
        %164 = sbr.rel (%p162) target = $region16
      $region15: #{net_forward.2} parent=11 // pred_region
        _
      $region16: #{net_forward.2} parent=11 // pred_fallthru
        _
      // Predicated region
      $region17: #{net_forward.2} parent=11 // pred_check
        %p165 = pneg %p79
      $region18: #{net_forward.2} parent=11 // pred_check_branch
        %167 = sbr.rel (%p165) target = $region20
      $region19: #{net_forward.2} parent=11 // pred_region
        _
      $region20: #{net_forward.2} parent=11 // pred_fallthru
        _
      // Predicated region
      $region21: #{net_forward.2} parent=11 // pred_check
        %p168 = pneg %p100
      $region22: #{net_forward.2} parent=11 // pred_check_branch
        %170 = sbr.rel (%p168) target = $region24
      $region23: #{net_forward.2} parent=11 // pred_region
        _
      $region24: #{net_forward.2} parent=11 // pred_fallthru
        _
      // Predicated region
      $region25: #{net_forward.2} parent=11 // pred_check
        %p171 = pneg %p121
      $region26: #{net_forward.2} parent=11 // pred_check_branch
        %173 = sbr.rel (%p171) target = $region28
      $region27: #{net_forward.2} parent=11 // pred_region
        _
      $region28: #{net_forward.2} parent=11 // pred_fallthru
        _
    $region12: #{net_forward.2} parent=5 // pred_fallthru
      _
    %p174 = scmp.lt.s32.totalorder %s11, 2
    // Predicated region
    $region29: #{net_forward.2} parent=5 // pred_check
      %p175 = pneg %p174
    $region30: #{net_forward.2} parent=5 // pred_check_branch
      %177 = sbr.rel (%p175) target = $region32
    $region31: #{net_forward.2} parent=5 // pred_region
      // Predicated region
      $region33: #{net_forward.2} parent=31 // pred_check
        %p178 = pneg %p31
      $region34: #{net_forward.2} parent=31 // pred_check_branch
        %180 = sbr.rel (%p178) target = $region36
      $region35: #{net_forward.2} parent=31 // pred_region
        %p181 = scmp.lt.s32.totalorder %s11, 1
        %s182 = scalar_select %p181, %s11, 1
        %s183 = smul.addr %s182, 96
        %s184 = smul.addr %s183, 4
        %s185 = scalar_lea.vmem %s0, %s184
      $region36: #{net_forward.2} parent=31 // pred_fallthru
        _
    $region32: #{net_forward.2} parent=5 // pred_fallthru
      _
    %p186 = scmp.le.s32.totalorder 1, %s11
    %p187 = scmp.lt.s32.totalorder %s11, 3
    %p188 = pnand %p186, %p187
    %p189 = pneg %p188
    // Predicated region
    $region37: #{net_forward.2} parent=5 // pred_check
      _
    $region38: #{net_forward.2} parent=5 // pred_check_branch
      %191 = sbr.rel (%p188) target = $region40
    $region39: #{net_forward.2} parent=5 // pred_region
      %s192 = ssub.s32 %s11, 1
      %p193 = scmp.lt.s32.totalorder %s16, 1
      %s194 = scalar_select %p193, %s16, 1
      %s195 = smul.addr %s194, 96
      %s196 = smul.addr %s195, 4
      %s197 = scalar_lea.vmem %s0, %s196
      %p198 = pneg %p37
      %p199 = pneg %p34
      %p200 = pneg %p58
      %p201 = pneg %p55
      %p202 = pneg %p79
      %p203 = pneg %p76
      %p204 = pneg %p100
      %p205 = pneg %p97
      %p206 = pneg %p121
      %p207 = pneg %p118
      %p208 = pneg %p147
      %p209 = pneg %p144
      %p210 = scmp.lt.s32.totalorder %s16, 1
      %s211 = scalar_select %p210, %s16, 1
      %s212 = smul.addr %s211, 4
      %s213 = smul.addr %s212, 4
      %s214 = scalar_lea.vmem %s5, %s213
      %p215 = scmp.lt.s32.totalorder %s16, 1
      %s216 = scalar_select %p215, %s16, 1
      %s217 = smul.addr %s216, 96
      %s218 = smul.addr %s217, 4
      %s219 = scalar_lea.vmem %s0, %s218
      %p220 = scmp.lt.s32.totalorder %s16, 1
      %s221 = scalar_select %p220, %s16, 1
      %s222 = smul.addr %s221, 4
      %s223 = smul.addr %s222, 4
      %s224 = scalar_lea.vmem %s5, %s223
      %v226 = vld [vmem:[%s219] sm:$0xf]
      %v227 = vld [vmem:[%s219 + $0x4] sm:$0xf]
      %v228 = vld [vmem:[%s219 + $0x8] sm:$0xf]
      %v229 = vld [vmem:[%s219 + $0xc] sm:$0xf]
      %v230 = vld [vmem:[%s219 + $0x10] sm:$0xf]
      %v231 = vld [vmem:[%s219 + $0x14] sm:$0xf]
      %v232 = vld [vmem:[%s219 + $0x18] sm:$0xf]
      %v233 = vld [vmem:[%s219 + $0x1c] sm:$0xf]
      %v234 = vld [vmem:[%s219 + $0x20] sm:$0xf]
      %v235 = vld [vmem:[%s219 + $0x24] sm:$0xf]
      %v236 = vld [vmem:[%s219 + $0x28] sm:$0xf]
      %v237 = vld [vmem:[%s219 + $0x2c] sm:$0xf]
      %v238 = vld [vmem:[%s219 + $0x30] sm:$0xf]
      %v239 = vld [vmem:[%s219 + $0x34] sm:$0xf]
      %v240 = vld [vmem:[%s219 + $0x38] sm:$0xf]
      %v241 = vld [vmem:[%s219 + $0x3c] sm:$0xf]
      %v242 = vld [vmem:[%s219 + $0x40] sm:$0xf]
      %v243 = vld [vmem:[%s219 + $0x44] sm:$0xf]
      %v244 = vld [vmem:[%s219 + $0x48] sm:$0xf]
      %v245 = vld [vmem:[%s219 + $0x4c] sm:$0xf]
      %v246 = vld [vmem:[%s219 + $0x50] sm:$0xf]
      %v247 = vld [vmem:[%s219 + $0x54] sm:$0xf]
      %v248 = vld [vmem:[%s219 + $0x58] sm:$0xf]
      %v249 = vld [vmem:[%s219 + $0x5c] sm:$0xf]
      %v250 = vld [vmem:[%s219 + $0x60] sm:$0xf]
      %v251 = vld [vmem:[%s219 + $0x64] sm:$0xf]
      %v252 = vld [vmem:[%s219 + $0x68] sm:$0xf]
      %v253 = vld [vmem:[%s219 + $0x6c] sm:$0xf]
      %v254 = vld [vmem:[%s219 + $0x70] sm:$0xf]
      %v255 = vld [vmem:[%s219 + $0x74] sm:$0xf]
      %v256 = vld [vmem:[%s219 + $0x78] sm:$0xf]
      %v257 = vld [vmem:[%s219 + $0x7c] sm:$0xf]
      %v258 = vld [vmem:[%s219 + $0x80] sm:$0xf]
      %v259 = vld [vmem:[%s219 + $0x84] sm:$0xf]
      %v260 = vld [vmem:[%s219 + $0x88] sm:$0xf]
      %v261 = vld [vmem:[%s219 + $0x8c] sm:$0xf]
      %v262 = vld [vmem:[%s219 + $0x90] sm:$0xf]
      %v263 = vld [vmem:[%s219 + $0x94] sm:$0xf]
      %v264 = vld [vmem:[%s219 + $0x98] sm:$0xf]
      %v265 = vld [vmem:[%s219 + $0x9c] sm:$0xf]
      %v266 = vld [vmem:[%s219 + $0xa0] sm:$0xf]
      %v267 = vld [vmem:[%s219 + $0xa4] sm:$0xf]
      %v268 = vld [vmem:[%s219 + $0xa8] sm:$0xf]
      %v269 = vld [vmem:[%s219 + $0xac] sm:$0xf]
      %v270 = vld [vmem:[%s219 + $0xb0] sm:$0xf]
      %v271 = vld [vmem:[%s219 + $0xb4] sm:$0xf]
      %v272 = vld [vmem:[%s219 + $0xb8] sm:$0xf]
      %v273 = vld [vmem:[%s219 + $0xbc] sm:$0xf]
      %v274 = vld [vmem:[%s219 + $0xc0] sm:$0xf]
      %v275 = vld [vmem:[%s219 + $0xc4] sm:$0xf]
      %v276 = vld [vmem:[%s219 + $0xc8] sm:$0xf]
      %v277 = vld [vmem:[%s219 + $0xcc] sm:$0xf]
      %v278 = vld [vmem:[%s219 + $0xd0] sm:$0xf]
      %v279 = vld [vmem:[%s219 + $0xd4] sm:$0xf]
      %v280 = vld [vmem:[%s219 + $0xd8] sm:$0xf]
      %v281 = vld [vmem:[%s219 + $0xdc] sm:$0xf]
      %v282 = vld [vmem:[%s219 + $0xe0] sm:$0xf]
      %v283 = vld [vmem:[%s219 + $0xe4] sm:$0xf]
      %v284 = vld [vmem:[%s219 + $0xe8] sm:$0xf]
      %v285 = vld [vmem:[%s219 + $0xec] sm:$0xf]
      %v286 = vld [vmem:[%s219 + $0xf0] sm:$0xf]
      %v287 = vld [vmem:[%s219 + $0xf4] sm:$0xf]
      %v288 = vld [vmem:[%s219 + $0xf8] sm:$0xf]
      %v289 = vld [vmem:[%s219 + $0xfc] sm:$0xf]
      %v290 = vld [vmem:[%s219 + $0x100] sm:$0xf]
      %v291 = vld [vmem:[%s219 + $0x104] sm:$0xf]
      %v292 = vld [vmem:[%s219 + $0x108] sm:$0xf]
      %v293 = vld [vmem:[%s219 + $0x10c] sm:$0xf]
      %v294 = vld [vmem:[%s219 + $0x110] sm:$0xf]
      %v295 = vld [vmem:[%s219 + $0x114] sm:$0xf]
      %v296 = vld [vmem:[%s219 + $0x118] sm:$0xf]
      %v297 = vld [vmem:[%s219 + $0x11c] sm:$0xf]
      %v298 = vld [vmem:[%s219 + $0x120] sm:$0xf]
      %v299 = vld [vmem:[%s219 + $0x124] sm:$0xf]
      %v300 = vld [vmem:[%s219 + $0x128] sm:$0xf]
      %v301 = vld [vmem:[%s219 + $0x12c] sm:$0xf]
      %v302 = vld [vmem:[%s219 + $0x130] sm:$0xf]
      %v303 = vld [vmem:[%s219 + $0x134] sm:$0xf]
      %v304 = vld [vmem:[%s219 + $0x138] sm:$0xf]
      %v305 = vld [vmem:[%s219 + $0x13c] sm:$0xf]
      %v306 = vld [vmem:[%s219 + $0x140] sm:$0xf]
      %v307 = vld [vmem:[%s219 + $0x144] sm:$0xf]
      %v308 = vld [vmem:[%s219 + $0x148] sm:$0xf]
      %v309 = vld [vmem:[%s219 + $0x14c] sm:$0xf]
      %v310 = vld [vmem:[%s219 + $0x150] sm:$0xf]
      %v311 = vld [vmem:[%s219 + $0x154] sm:$0xf]
      %v312 = vld [vmem:[%s219 + $0x158] sm:$0xf]
      %v313 = vld [vmem:[%s219 + $0x15c] sm:$0xf]
      %v314 = vld [vmem:[%s219 + $0x160] sm:$0xf]
      %v315 = vld [vmem:[%s219 + $0x164] sm:$0xf]
      %v316 = vld [vmem:[%s219 + $0x168] sm:$0xf]
      %v317 = vld [vmem:[%s219 + $0x16c] sm:$0xf]
      %v318 = vld [vmem:[%s219 + $0x170] sm:$0xf]
      %v319 = vld [vmem:[%s219 + $0x174] sm:$0xf]
      %v320 = vld [vmem:[%s219 + $0x178] sm:$0xf]
      %v321 = vld [vmem:[%s219 + $0x17c] sm:$0xf]
      %v322 = vld [vmem:[%s1] sm:$0xf]
      %v323 = vld [vmem:[%s1 + $0x4] sm:$0xf]
      %v324 = vld [vmem:[%s1 + $0x8] sm:$0xf]
      %v325 = vld [vmem:[%s1 + $0xc] sm:$0xf]
      %v422 = vunpack.c.l.b16 %v226
      %v423 = vunpack.c.l.b16 %v227
      %v424 = vunpack.c.l.b16 %v228
      %v425 = vunpack.c.l.b16 %v229
      %v426 = vunpack.c.l.b16 %v230
      %v427 = vunpack.c.l.b16 %v231
      %v428 = vunpack.c.l.b16 %v232
      %v429 = vunpack.c.l.b16 %v233
      %v430 = vunpack.c.l.b16 %v234
      %v431 = vunpack.c.l.b16 %v235
      %v432 = vunpack.c.l.b16 %v236
      %v433 = vunpack.c.l.b16 %v237
      %v434 = vunpack.c.l.b16 %v238
      %v435 = vunpack.c.l.b16 %v239
      %v436 = vunpack.c.l.b16 %v240
      %v437 = vunpack.c.l.b16 %v241
      %v438 = vunpack.c.l.b16 %v242
      %v439 = vunpack.c.l.b16 %v243
      %v440 = vunpack.c.l.b16 %v244
      %v441 = vunpack.c.l.b16 %v245
      %v442 = vunpack.c.l.b16 %v246
      %v443 = vunpack.c.l.b16 %v247
      %v444 = vunpack.c.l.b16 %v248
      %v445 = vunpack.c.l.b16 %v249
      %v446 = vunpack.c.l.b16 %v250
      %v447 = vunpack.c.l.b16 %v251
      %v448 = vunpack.c.l.b16 %v252
      %v449 = vunpack.c.l.b16 %v253
      %v450 = vunpack.c.l.b16 %v254
      %v451 = vunpack.c.l.b16 %v255
      %v452 = vunpack.c.l.b16 %v256
      %v453 = vunpack.c.l.b16 %v257
      %v454 = vunpack.c.l.b16 %v258
      %v455 = vunpack.c.l.b16 %v259
      %v456 = vunpack.c.l.b16 %v260
      %v457 = vunpack.c.l.b16 %v261
      %v458 = vunpack.c.l.b16 %v262
      %v459 = vunpack.c.l.b16 %v263
      %v460 = vunpack.c.l.b16 %v264
      %v461 = vunpack.c.l.b16 %v265
      %v462 = vunpack.c.l.b16 %v266
      %v463 = vunpack.c.l.b16 %v267
      %v464 = vunpack.c.l.b16 %v268
      %v465 = vunpack.c.l.b16 %v269
      %v466 = vunpack.c.l.b16 %v270
      %v467 = vunpack.c.l.b16 %v271
      %v468 = vunpack.c.l.b16 %v272
      %v469 = vunpack.c.l.b16 %v273
      %v470 = vunpack.c.l.b16 %v274
      %v471 = vunpack.c.l.b16 %v275
      %v472 = vunpack.c.l.b16 %v276
      %v473 = vunpack.c.l.b16 %v277
      %v474 = vunpack.c.l.b16 %v278
      %v475 = vunpack.c.l.b16 %v279
      %v476 = vunpack.c.l.b16 %v280
      %v477 = vunpack.c.l.b16 %v281
      %v478 = vunpack.c.l.b16 %v282
      %v479 = vunpack.c.l.b16 %v283
      %v480 = vunpack.c.l.b16 %v284
      %v481 = vunpack.c.l.b16 %v285
      %v482 = vunpack.c.l.b16 %v286
      %v483 = vunpack.c.l.b16 %v287
      %v484 = vunpack.c.l.b16 %v288
      %v485 = vunpack.c.l.b16 %v289
      %v486 = vunpack.c.l.b16 %v290
      %v487 = vunpack.c.l.b16 %v291
      %v488 = vunpack.c.l.b16 %v292
      %v489 = vunpack.c.l.b16 %v293
      %v490 = vunpack.c.l.b16 %v294
      %v491 = vunpack.c.l.b16 %v295
      %v492 = vunpack.c.l.b16 %v296
      %v493 = vunpack.c.l.b16 %v297
      %v494 = vunpack.c.l.b16 %v298
      %v495 = vunpack.c.l.b16 %v299
      %v496 = vunpack.c.l.b16 %v300
      %v497 = vunpack.c.l.b16 %v301
      %v498 = vunpack.c.l.b16 %v302
      %v499 = vunpack.c.l.b16 %v303
      %v500 = vunpack.c.l.b16 %v304
      %v501 = vunpack.c.l.b16 %v305
      %v502 = vunpack.c.l.b16 %v306
      %v503 = vunpack.c.l.b16 %v307
      %v504 = vunpack.c.l.b16 %v308
      %v505 = vunpack.c.l.b16 %v309
      %v506 = vunpack.c.l.b16 %v310
      %v507 = vunpack.c.l.b16 %v311
      %v508 = vunpack.c.l.b16 %v312
      %v509 = vunpack.c.l.b16 %v313
      %v510 = vunpack.c.l.b16 %v314
      %v511 = vunpack.c.l.b16 %v315
      %v512 = vunpack.c.l.b16 %v316
      %v513 = vunpack.c.l.b16 %v317
      %v514 = vunpack.c.l.b16 %v318
      %v515 = vunpack.c.l.b16 %v319
      %v516 = vunpack.c.l.b16 %v320
      %v517 = vunpack.c.l.b16 %v321
      %v518 = vpack.c.b16 %v423, %v422
      %v519 = vpack.c.b16 %v425, %v424
      %v520 = vpack.c.b16 %v427, %v426
      %v521 = vpack.c.b16 %v429, %v428
      %v522 = vpack.c.b16 %v431, %v430
      %v523 = vpack.c.b16 %v433, %v432
      %v524 = vpack.c.b16 %v435, %v434
      %v525 = vpack.c.b16 %v437, %v436
      %v526 = vpack.c.b16 %v439, %v438
      %v527 = vpack.c.b16 %v441, %v440
      %v528 = vpack.c.b16 %v443, %v442
      %v529 = vpack.c.b16 %v445, %v444
      %v530 = vpack.c.b16 %v447, %v446
      %v531 = vpack.c.b16 %v449, %v448
      %v532 = vpack.c.b16 %v451, %v450
      %v533 = vpack.c.b16 %v453, %v452
      %v534 = vpack.c.b16 %v455, %v454
      %v535 = vpack.c.b16 %v457, %v456
      %v536 = vpack.c.b16 %v459, %v458
      %v537 = vpack.c.b16 %v461, %v460
      %v538 = vpack.c.b16 %v463, %v462
      %v539 = vpack.c.b16 %v465, %v464
      %v540 = vpack.c.b16 %v467, %v466
      %v541 = vpack.c.b16 %v469, %v468
      %v542 = vpack.c.b16 %v471, %v470
      %v543 = vpack.c.b16 %v473, %v472
      %v544 = vpack.c.b16 %v475, %v474
      %v545 = vpack.c.b16 %v477, %v476
      %v546 = vpack.c.b16 %v479, %v478
      %v547 = vpack.c.b16 %v481, %v480
      %v548 = vpack.c.b16 %v483, %v482
      %v549 = vpack.c.b16 %v485, %v484
      %v550 = vpack.c.b16 %v487, %v486
      %v551 = vpack.c.b16 %v489, %v488
      %v552 = vpack.c.b16 %v491, %v490
      %v553 = vpack.c.b16 %v493, %v492
      %v554 = vpack.c.b16 %v495, %v494
      %v555 = vpack.c.b16 %v497, %v496
      %v556 = vpack.c.b16 %v499, %v498
      %v557 = vpack.c.b16 %v501, %v500
      %v558 = vpack.c.b16 %v503, %v502
      %v559 = vpack.c.b16 %v505, %v504
      %v560 = vpack.c.b16 %v507, %v506
      %v561 = vpack.c.b16 %v509, %v508
      %v562 = vpack.c.b16 %v511, %v510
      %v563 = vpack.c.b16 %v513, %v512
      %v564 = vpack.c.b16 %v515, %v514
      %v565 = vpack.c.b16 %v517, %v516
      %v570 = vunpack.c.l.b16 %v322
      %v571 = vunpack.c.l.b16 %v323
      %v572 = vunpack.c.l.b16 %v324
      %v573 = vunpack.c.l.b16 %v325
      %v574 = vpack.c.b16 %v571, %v570
      %v575 = vpack.c.b16 %v573, %v572
      %vm578 = vcmask 261120
      %v580 = vsel %vm578, %v518, 0
      %v583 = vsel %vm578, %v519, 0
      %v586 = vsel %vm578, %v520, 0
      %v589 = vsel %vm578, %v521, 0
      %v592 = vsel %vm578, %v522, 0
      %v595 = vsel %vm578, %v523, 0
      %v598 = vsel %vm578, %v524, 0
      %v601 = vsel %vm578, %v525, 0
      %v604 = vsel %vm578, %v526, 0
      %v607 = vsel %vm578, %v527, 0
      %v610 = vsel %vm578, %v528, 0
      %v613 = vsel %vm578, %v529, 0
      %v616 = vsel %vm578, %v530, 0
      %v619 = vsel %vm578, %v531, 0
      %v622 = vsel %vm578, %v532, 0
      %v625 = vsel %vm578, %v533, 0
      %v628 = vsel %vm578, %v534, 0
      %v631 = vsel %vm578, %v535, 0
      %v634 = vsel %vm578, %v536, 0
      %v637 = vsel %vm578, %v537, 0
      %v640 = vsel %vm578, %v538, 0
      %v643 = vsel %vm578, %v539, 0
      %v646 = vsel %vm578, %v540, 0
      %v649 = vsel %vm578, %v541, 0
      %v652 = vsel %vm578, %v542, 0
      %v655 = vsel %vm578, %v543, 0
      %v658 = vsel %vm578, %v544, 0
      %v661 = vsel %vm578, %v545, 0
      %v664 = vsel %vm578, %v546, 0
      %v667 = vsel %vm578, %v547, 0
      %v670 = vsel %vm578, %v548, 0
      %v673 = vsel %vm578, %v549, 0
      %v676 = vsel %vm578, %v550, 0
      %v679 = vsel %vm578, %v551, 0
      %v682 = vsel %vm578, %v552, 0
      %v685 = vsel %vm578, %v553, 0
      %v688 = vsel %vm578, %v554, 0
      %v691 = vsel %vm578, %v555, 0
      %v694 = vsel %vm578, %v556, 0
      %v697 = vsel %vm578, %v557, 0
      %v700 = vsel %vm578, %v558, 0
      %v703 = vsel %vm578, %v559, 0
      %v706 = vsel %vm578, %v560, 0
      %v709 = vsel %vm578, %v561, 0
      %v712 = vsel %vm578, %v562, 0
      %v715 = vsel %vm578, %v563, 0
      %v718 = vsel %vm578, %v564, 0
      %v721 = vsel %vm578, %v565, 0
      %723 = vmatprep.subr.bf16.mxu0 0
      %724 = vmatpush1.bf16.msra.mxu0 0
      %725 = vmatprep.subr.bf16.mxu0 0
      %726 = vmatpush1.bf16.msra.mxu0 0
      %727 = vmatprep.subr.bf16.mxu0 0
      %728 = vmatpush1.bf16.msra.mxu0 0
      %729 = vmatprep.subr.bf16.mxu0 0
      %730 = vmatpush1.bf16.msra.mxu0 0
      %731 = vmatprep.subr.bf16.mxu0 0
      %732 = vmatpush1.bf16.msra.mxu0 0
      %733 = vmatprep.subr.bf16.mxu0 0
      %734 = vmatpush1.bf16.msra.mxu0 0
      %735 = vmatprep.subr.bf16.mxu0 0
      %736 = vmatpush1.bf16.msra.mxu0 %v575
      %737 = vmatprep.subr.bf16.mxu0 0
      %738 = vmatpush1.bf16.msra.mxu0 %v574
      %739 = vmatprep.subr.bf16.mxu0 0
      %740 = vmatpush2.bf16.msra.mxu0 0
      %741 = vmatprep.subr.bf16.mxu0 0
      %742 = vmatpush2.bf16.msra.mxu0 0
      %743 = vmatprep.subr.bf16.mxu0 0
      %744 = vmatpush2.bf16.msra.mxu0 0
      %745 = vmatprep.subr.bf16.mxu0 0
      %746 = vmatpush2.bf16.msra.mxu0 0
      %747 = vmatprep.subr.bf16.mxu0 0
      %748 = vmatpush2.bf16.msra.mxu0 0
      %749 = vmatprep.subr.bf16.mxu0 0
      %750 = vmatpush2.bf16.msra.mxu0 0
      %751 = vmatprep.subr.bf16.mxu0 0
      %752 = vmatpush2.bf16.msra.mxu0 0
      %753 = vmatprep.subr.bf16.mxu0 0
      %754 = vmatpush2.bf16.msra.mxu0 0
      %755 = vmatprep.mubr.bf16.mxu0 0
      %756 = vmatmul.mubr.bf16.gmra.mxu0 %v580
      %v757 = vpop.f32.mrf.mxu0
      %v758 = vadd.f32 0.0, %v757
      %v759 = vpop.f32.mrf.mxu0
      %v760 = vpop.f32.mrf.mxu0
      %v761 = vadd.f32 0.0, %v760
      %v762 = vpop.f32.mrf.mxu0
      %763 = vmatprep.mubr.bf16.mxu0 0
      %764 = vmatmul.mubr.bf16.gmra.mxu0 %v583
      %v765 = vpop.f32.mrf.mxu0
      %v766 = vadd.f32 0.0, %v765
      %v767 = vpop.f32.mrf.mxu0
      %v768 = vpop.f32.mrf.mxu0
      %v769 = vadd.f32 0.0, %v768
      %v770 = vpop.f32.mrf.mxu0
      %771 = vmatprep.mubr.bf16.mxu0 0
      %772 = vmatmul.mubr.bf16.gmra.mxu0 %v586
      %v773 = vpop.f32.mrf.mxu0
      %v774 = vadd.f32 0.0, %v773
      %v775 = vpop.f32.mrf.mxu0
      %v776 = vpop.f32.mrf.mxu0
      %v777 = vadd.f32 0.0, %v776
      %v778 = vpop.f32.mrf.mxu0
      %779 = vmatprep.mubr.bf16.mxu0 0
      %780 = vmatmul.mubr.bf16.gmra.mxu0 %v589
      %v781 = vpop.f32.mrf.mxu0
      %v782 = vadd.f32 0.0, %v781
      %v783 = vpop.f32.mrf.mxu0
      %v784 = vpop.f32.mrf.mxu0
      %v785 = vadd.f32 0.0, %v784
      %v786 = vpop.f32.mrf.mxu0
      %787 = vmatprep.mubr.bf16.mxu0 0
      %788 = vmatmul.mubr.bf16.gmra.mxu0 %v592
      %v789 = vpop.f32.mrf.mxu0
      %v790 = vadd.f32 0.0, %v789
      %v791 = vpop.f32.mrf.mxu0
      %v792 = vpop.f32.mrf.mxu0
      %v793 = vadd.f32 0.0, %v792
      %v794 = vpop.f32.mrf.mxu0
      %795 = vmatprep.mubr.bf16.mxu0 0
      %796 = vmatmul.mubr.bf16.gmra.mxu0 %v595
      %v797 = vpop.f32.mrf.mxu0
      %v798 = vadd.f32 0.0, %v797
      %v799 = vpop.f32.mrf.mxu0
      %v800 = vpop.f32.mrf.mxu0
      %v801 = vadd.f32 0.0, %v800
      %v802 = vpop.f32.mrf.mxu0
      %803 = vmatprep.mubr.bf16.mxu0 0
      %804 = vmatmul.mubr.bf16.gmra.mxu0 %v598
      %v805 = vpop.f32.mrf.mxu0
      %v806 = vadd.f32 0.0, %v805
      %v807 = vpop.f32.mrf.mxu0
      %v808 = vpop.f32.mrf.mxu0
      %v809 = vadd.f32 0.0, %v808
      %v810 = vpop.f32.mrf.mxu0
      %811 = vmatprep.mubr.bf16.mxu0 0
      %812 = vmatmul.mubr.bf16.gmra.mxu0 %v601
      %v813 = vpop.f32.mrf.mxu0
      %v814 = vadd.f32 0.0, %v813
      %v815 = vpop.f32.mrf.mxu0
      %v816 = vpop.f32.mrf.mxu0
      %v817 = vadd.f32 0.0, %v816
      %v818 = vpop.f32.mrf.mxu0
      %819 = vmatprep.mubr.bf16.mxu0 0
      %820 = vmatmul.mubr.bf16.gmra.mxu0 %v604
      %v821 = vpop.f32.mrf.mxu0
      %v822 = vadd.f32 0.0, %v821
      %v823 = vpop.f32.mrf.mxu0
      %v824 = vpop.f32.mrf.mxu0
      %v825 = vadd.f32 0.0, %v824
      %v826 = vpop.f32.mrf.mxu0
      %827 = vmatprep.mubr.bf16.mxu0 0
      %828 = vmatmul.mubr.bf16.gmra.mxu0 %v607
      %v829 = vpop.f32.mrf.mxu0
      %v830 = vadd.f32 0.0, %v829
      %v831 = vpop.f32.mrf.mxu0
      %v832 = vpop.f32.mrf.mxu0
      %v833 = vadd.f32 0.0, %v832
      %v834 = vpop.f32.mrf.mxu0
      %835 = vmatprep.mubr.bf16.mxu0 0
      %836 = vmatmul.mubr.bf16.gmra.mxu0 %v610
      %v837 = vpop.f32.mrf.mxu0
      %v838 = vadd.f32 0.0, %v837
      %v839 = vpop.f32.mrf.mxu0
      %v840 = vpop.f32.mrf.mxu0
      %v841 = vadd.f32 0.0, %v840
      %v842 = vpop.f32.mrf.mxu0
      %843 = vmatprep.mubr.bf16.mxu0 0
      %844 = vmatmul.mubr.bf16.gmra.mxu0 %v613
      %v845 = vpop.f32.mrf.mxu0
      %v846 = vadd.f32 0.0, %v845
      %v847 = vpop.f32.mrf.mxu0
      %v848 = vpop.f32.mrf.mxu0
      %v849 = vadd.f32 0.0, %v848
      %v850 = vpop.f32.mrf.mxu0
      %851 = vmatprep.mubr.bf16.mxu0 0
      %852 = vmatmul.mubr.bf16.gmra.mxu0 %v616
      %v853 = vpop.f32.mrf.mxu0
      %v854 = vadd.f32 0.0, %v853
      %v855 = vpop.f32.mrf.mxu0
      %v856 = vpop.f32.mrf.mxu0
      %v857 = vadd.f32 0.0, %v856
      %v858 = vpop.f32.mrf.mxu0
      %859 = vmatprep.mubr.bf16.mxu0 0
      %860 = vmatmul.mubr.bf16.gmra.mxu0 %v619
      %v861 = vpop.f32.mrf.mxu0
      %v862 = vadd.f32 0.0, %v861
      %v863 = vpop.f32.mrf.mxu0
      %v864 = vpop.f32.mrf.mxu0
      %v865 = vadd.f32 0.0, %v864
      %v866 = vpop.f32.mrf.mxu0
      %867 = vmatprep.mubr.bf16.mxu0 0
      %868 = vmatmul.mubr.bf16.gmra.mxu0 %v622
      %v869 = vpop.f32.mrf.mxu0
      %v870 = vadd.f32 0.0, %v869
      %v871 = vpop.f32.mrf.mxu0
      %v872 = vpop.f32.mrf.mxu0
      %v873 = vadd.f32 0.0, %v872
      %v874 = vpop.f32.mrf.mxu0
      %875 = vmatprep.mubr.bf16.mxu0 0
      %876 = vmatmul.mubr.bf16.gmra.mxu0 %v625
      %v877 = vpop.f32.mrf.mxu0
      %v878 = vadd.f32 0.0, %v877
      %v879 = vpop.f32.mrf.mxu0
      %v880 = vpop.f32.mrf.mxu0
      %v881 = vadd.f32 0.0, %v880
      %v882 = vpop.f32.mrf.mxu0
      %883 = vmatprep.mubr.bf16.mxu0 0
      %884 = vmatmul.mubr.bf16.gmra.mxu0 %v628
      %v885 = vpop.f32.mrf.mxu0
      %v886 = vadd.f32 0.0, %v885
      %v887 = vpop.f32.mrf.mxu0
      %v888 = vpop.f32.mrf.mxu0
      %v889 = vadd.f32 0.0, %v888
      %v890 = vpop.f32.mrf.mxu0
      %891 = vmatprep.mubr.bf16.mxu0 0
      %892 = vmatmul.mubr.bf16.gmra.mxu0 %v631
      %v893 = vpop.f32.mrf.mxu0
      %v894 = vadd.f32 0.0, %v893
      %v895 = vpop.f32.mrf.mxu0
      %v896 = vpop.f32.mrf.mxu0
      %v897 = vadd.f32 0.0, %v896
      %v898 = vpop.f32.mrf.mxu0
      %899 = vmatprep.mubr.bf16.mxu0 0
      %900 = vmatmul.mubr.bf16.gmra.mxu0 %v634
      %v901 = vpop.f32.mrf.mxu0
      %v902 = vadd.f32 0.0, %v901
      %v903 = vpop.f32.mrf.mxu0
      %v904 = vpop.f32.mrf.mxu0
      %v905 = vadd.f32 0.0, %v904
      %v906 = vpop.f32.mrf.mxu0
      %907 = vmatprep.mubr.bf16.mxu0 0
      %908 = vmatmul.mubr.bf16.gmra.mxu0 %v637
      %v909 = vpop.f32.mrf.mxu0
      %v910 = vadd.f32 0.0, %v909
      %v911 = vpop.f32.mrf.mxu0
      %v912 = vpop.f32.mrf.mxu0
      %v913 = vadd.f32 0.0, %v912
      %v914 = vpop.f32.mrf.mxu0
      %915 = vmatprep.mubr.bf16.mxu0 0
      %916 = vmatmul.mubr.bf16.gmra.mxu0 %v640
      %v917 = vpop.f32.mrf.mxu0
      %v918 = vadd.f32 0.0, %v917
      %v919 = vpop.f32.mrf.mxu0
      %v920 = vpop.f32.mrf.mxu0
      %v921 = vadd.f32 0.0, %v920
      %v922 = vpop.f32.mrf.mxu0
      %923 = vmatprep.mubr.bf16.mxu0 0
      %924 = vmatmul.mubr.bf16.gmra.mxu0 %v643
      %v925 = vpop.f32.mrf.mxu0
      %v926 = vadd.f32 0.0, %v925
      %v927 = vpop.f32.mrf.mxu0
      %v928 = vpop.f32.mrf.mxu0
      %v929 = vadd.f32 0.0, %v928
      %v930 = vpop.f32.mrf.mxu0
      %931 = vmatprep.mubr.bf16.mxu0 0
      %932 = vmatmul.mubr.bf16.gmra.mxu0 %v646
      %v933 = vpop.f32.mrf.mxu0
      %v934 = vadd.f32 0.0, %v933
      %v935 = vpop.f32.mrf.mxu0
      %v936 = vpop.f32.mrf.mxu0
      %v937 = vadd.f32 0.0, %v936
      %v938 = vpop.f32.mrf.mxu0
      %939 = vmatprep.mubr.bf16.mxu0 0
      %940 = vmatmul.mubr.bf16.gmra.mxu0 %v649
      %v941 = vpop.f32.mrf.mxu0
      %v942 = vadd.f32 0.0, %v941
      %v943 = vpop.f32.mrf.mxu0
      %v944 = vpop.f32.mrf.mxu0
      %v945 = vadd.f32 0.0, %v944
      %v946 = vpop.f32.mrf.mxu0
      %947 = vmatprep.mubr.bf16.mxu0 0
      %948 = vmatmul.mubr.bf16.gmra.mxu0 %v652
      %v949 = vpop.f32.mrf.mxu0
      %v950 = vadd.f32 0.0, %v949
      %v951 = vpop.f32.mrf.mxu0
      %v952 = vpop.f32.mrf.mxu0
      %v953 = vadd.f32 0.0, %v952
      %v954 = vpop.f32.mrf.mxu0
      %955 = vmatprep.mubr.bf16.mxu0 0
      %956 = vmatmul.mubr.bf16.gmra.mxu0 %v655
      %v957 = vpop.f32.mrf.mxu0
      %v958 = vadd.f32 0.0, %v957
      %v959 = vpop.f32.mrf.mxu0
      %v960 = vpop.f32.mrf.mxu0
      %v961 = vadd.f32 0.0, %v960
      %v962 = vpop.f32.mrf.mxu0
      %963 = vmatprep.mubr.bf16.mxu0 0
      %964 = vmatmul.mubr.bf16.gmra.mxu0 %v658
      %v965 = vpop.f32.mrf.mxu0
      %v966 = vadd.f32 0.0, %v965
      %v967 = vpop.f32.mrf.mxu0
      %v968 = vpop.f32.mrf.mxu0
      %v969 = vadd.f32 0.0, %v968
      %v970 = vpop.f32.mrf.mxu0
      %971 = vmatprep.mubr.bf16.mxu0 0
      %972 = vmatmul.mubr.bf16.gmra.mxu0 %v661
      %v973 = vpop.f32.mrf.mxu0
      %v974 = vadd.f32 0.0, %v973
      %v975 = vpop.f32.mrf.mxu0
      %v976 = vpop.f32.mrf.mxu0
      %v977 = vadd.f32 0.0, %v976
      %v978 = vpop.f32.mrf.mxu0
      %979 = vmatprep.mubr.bf16.mxu0 0
      %980 = vmatmul.mubr.bf16.gmra.mxu0 %v664
      %v981 = vpop.f32.mrf.mxu0
      %v982 = vadd.f32 0.0, %v981
      %v983 = vpop.f32.mrf.mxu0
      %v984 = vpop.f32.mrf.mxu0
      %v985 = vadd.f32 0.0, %v984
      %v986 = vpop.f32.mrf.mxu0
      %987 = vmatprep.mubr.bf16.mxu0 0
      %988 = vmatmul.mubr.bf16.gmra.mxu0 %v667
      %v989 = vpop.f32.mrf.mxu0
      %v990 = vadd.f32 0.0, %v989
      %v991 = vpop.f32.mrf.mxu0
      %v992 = vpop.f32.mrf.mxu0
      %v993 = vadd.f32 0.0, %v992
      %v994 = vpop.f32.mrf.mxu0
      %995 = vmatprep.mubr.bf16.mxu0 0
      %996 = vmatmul.mubr.bf16.gmra.mxu0 %v670
      %v997 = vpop.f32.mrf.mxu0
      %v998 = vadd.f32 0.0, %v997
      %v999 = vpop.f32.mrf.mxu0
      %v1000 = vpop.f32.mrf.mxu0
      %v1001 = vadd.f32 0.0, %v1000
      %v1002 = vpop.f32.mrf.mxu0
      %1003 = vmatprep.mubr.bf16.mxu0 0
      %1004 = vmatmul.mubr.bf16.gmra.mxu0 %v673
      %v1005 = vpop.f32.mrf.mxu0
      %v1006 = vadd.f32 0.0, %v1005
      %v1007 = vpop.f32.mrf.mxu0
      %v1008 = vpop.f32.mrf.mxu0
      %v1009 = vadd.f32 0.0, %v1008
      %v1010 = vpop.f32.mrf.mxu0
      %1011 = vmatprep.mubr.bf16.mxu0 0
      %1012 = vmatmul.mubr.bf16.gmra.mxu0 %v676
      %v1013 = vpop.f32.mrf.mxu0
      %v1014 = vadd.f32 0.0, %v1013
      %v1015 = vpop.f32.mrf.mxu0
      %v1016 = vpop.f32.mrf.mxu0
      %v1017 = vadd.f32 0.0, %v1016
      %v1018 = vpop.f32.mrf.mxu0
      %1019 = vmatprep.mubr.bf16.mxu0 0
      %1020 = vmatmul.mubr.bf16.gmra.mxu0 %v679
      %v1021 = vpop.f32.mrf.mxu0
      %v1022 = vadd.f32 0.0, %v1021
      %v1023 = vpop.f32.mrf.mxu0
      %v1024 = vpop.f32.mrf.mxu0
      %v1025 = vadd.f32 0.0, %v1024
      %v1026 = vpop.f32.mrf.mxu0
      %1027 = vmatprep.mubr.bf16.mxu0 0
      %1028 = vmatmul.mubr.bf16.gmra.mxu0 %v682
      %v1029 = vpop.f32.mrf.mxu0
      %v1030 = vadd.f32 0.0, %v1029
      %v1031 = vpop.f32.mrf.mxu0
      %v1032 = vpop.f32.mrf.mxu0
      %v1033 = vadd.f32 0.0, %v1032
      %v1034 = vpop.f32.mrf.mxu0
      %1035 = vmatprep.mubr.bf16.mxu0 0
      %1036 = vmatmul.mubr.bf16.gmra.mxu0 %v685
      %v1037 = vpop.f32.mrf.mxu0
      %v1038 = vadd.f32 0.0, %v1037
      %v1039 = vpop.f32.mrf.mxu0
      %v1040 = vpop.f32.mrf.mxu0
      %v1041 = vadd.f32 0.0, %v1040
      %v1042 = vpop.f32.mrf.mxu0
      %1043 = vmatprep.mubr.bf16.mxu0 0
      %1044 = vmatmul.mubr.bf16.gmra.mxu0 %v688
      %v1045 = vpop.f32.mrf.mxu0
      %v1046 = vadd.f32 0.0, %v1045
      %v1047 = vpop.f32.mrf.mxu0
      %v1048 = vpop.f32.mrf.mxu0
      %v1049 = vadd.f32 0.0, %v1048
      %v1050 = vpop.f32.mrf.mxu0
      %1051 = vmatprep.mubr.bf16.mxu0 0
      %1052 = vmatmul.mubr.bf16.gmra.mxu0 %v691
      %v1053 = vpop.f32.mrf.mxu0
      %v1054 = vadd.f32 0.0, %v1053
      %v1055 = vpop.f32.mrf.mxu0
      %v1056 = vpop.f32.mrf.mxu0
      %v1057 = vadd.f32 0.0, %v1056
      %v1058 = vpop.f32.mrf.mxu0
      %1059 = vmatprep.mubr.bf16.mxu0 0
      %1060 = vmatmul.mubr.bf16.gmra.mxu0 %v694
      %v1061 = vpop.f32.mrf.mxu0
      %v1062 = vadd.f32 0.0, %v1061
      %v1063 = vpop.f32.mrf.mxu0
      %v1064 = vpop.f32.mrf.mxu0
      %v1065 = vadd.f32 0.0, %v1064
      %v1066 = vpop.f32.mrf.mxu0
      %1067 = vmatprep.mubr.bf16.mxu0 0
      %1068 = vmatmul.mubr.bf16.gmra.mxu0 %v697
      %v1069 = vpop.f32.mrf.mxu0
      %v1070 = vadd.f32 0.0, %v1069
      %v1071 = vpop.f32.mrf.mxu0
      %v1072 = vpop.f32.mrf.mxu0
      %v1073 = vadd.f32 0.0, %v1072
      %v1074 = vpop.f32.mrf.mxu0
      %1075 = vmatprep.mubr.bf16.mxu0 0
      %1076 = vmatmul.mubr.bf16.gmra.mxu0 %v700
      %v1077 = vpop.f32.mrf.mxu0
      %v1078 = vadd.f32 0.0, %v1077
      %v1079 = vpop.f32.mrf.mxu0
      %v1080 = vpop.f32.mrf.mxu0
      %v1081 = vadd.f32 0.0, %v1080
      %v1082 = vpop.f32.mrf.mxu0
      %1083 = vmatprep.mubr.bf16.mxu0 0
      %1084 = vmatmul.mubr.bf16.gmra.mxu0 %v703
      %v1085 = vpop.f32.mrf.mxu0
      %v1086 = vadd.f32 0.0, %v1085
      %v1087 = vpop.f32.mrf.mxu0
      %v1088 = vpop.f32.mrf.mxu0
      %v1089 = vadd.f32 0.0, %v1088
      %v1090 = vpop.f32.mrf.mxu0
      %1091 = vmatprep.mubr.bf16.mxu0 0
      %1092 = vmatmul.mubr.bf16.gmra.mxu0 %v706
      %v1093 = vpop.f32.mrf.mxu0
      %v1094 = vadd.f32 0.0, %v1093
      %v1095 = vpop.f32.mrf.mxu0
      %v1096 = vpop.f32.mrf.mxu0
      %v1097 = vadd.f32 0.0, %v1096
      %v1098 = vpop.f32.mrf.mxu0
      %1099 = vmatprep.mubr.bf16.mxu0 0
      %1100 = vmatmul.mubr.bf16.gmra.mxu0 %v709
      %v1101 = vpop.f32.mrf.mxu0
      %v1102 = vadd.f32 0.0, %v1101
      %v1103 = vpop.f32.mrf.mxu0
      %v1104 = vpop.f32.mrf.mxu0
      %v1105 = vadd.f32 0.0, %v1104
      %v1106 = vpop.f32.mrf.mxu0
      %1107 = vmatprep.mubr.bf16.mxu0 0
      %1108 = vmatmul.mubr.bf16.gmra.mxu0 %v712
      %v1109 = vpop.f32.mrf.mxu0
      %v1110 = vadd.f32 0.0, %v1109
      %v1111 = vpop.f32.mrf.mxu0
      %v1112 = vpop.f32.mrf.mxu0
      %v1113 = vadd.f32 0.0, %v1112
      %v1114 = vpop.f32.mrf.mxu0
      %1115 = vmatprep.mubr.bf16.mxu0 0
      %1116 = vmatmul.mubr.bf16.gmra.mxu0 %v715
      %v1117 = vpop.f32.mrf.mxu0
      %v1118 = vadd.f32 0.0, %v1117
      %v1119 = vpop.f32.mrf.mxu0
      %v1120 = vpop.f32.mrf.mxu0
      %v1121 = vadd.f32 0.0, %v1120
      %v1122 = vpop.f32.mrf.mxu0
      %1123 = vmatprep.mubr.bf16.mxu0 0
      %1124 = vmatmul.mubr.bf16.gmra.mxu0 %v718
      %v1125 = vpop.f32.mrf.mxu0
      %v1126 = vadd.f32 0.0, %v1125
      %v1127 = vpop.f32.mrf.mxu0
      %v1128 = vpop.f32.mrf.mxu0
      %v1129 = vadd.f32 0.0, %v1128
      %v1130 = vpop.f32.mrf.mxu0
      %1131 = vmatprep.mubr.bf16.mxu0 0
      %1132 = vmatmul.mubr.bf16.gmra.mxu0 %v721
      %v1133 = vpop.f32.mrf.mxu0
      %v1134 = vadd.f32 0.0, %v1133
      %v1135 = vpop.f32.mrf.mxu0
      %v1136 = vpop.f32.mrf.mxu0
      %v1137 = vadd.f32 0.0, %v1136
      %v1138 = vpop.f32.mrf.mxu0
      %1139 = vdwg.mxu0
      %v1140 = vsel %vm578, %v758, -inf
      %v1141 = vsel %vm578, %v854, -inf
      %v1142 = vmax.f32 %v1140, %v1141
      %v1143 = vsel %vm578, %v950, -inf
      %v1144 = vmax.f32 %v1142, %v1143
      %v1145 = vsel %vm578, %v1046, -inf
      %v1146 = vmax.f32 %v1144, %v1145
      %v1147 = vsel %vm578, %v761, -inf
      %v1148 = vsel %vm578, %v857, -inf
      %v1149 = vmax.f32 %v1147, %v1148
      %v1150 = vsel %vm578, %v953, -inf
      %v1151 = vmax.f32 %v1149, %v1150
      %v1152 = vsel %vm578, %v1049, -inf
      %v1153 = vmax.f32 %v1151, %v1152
      %v1154 = vsel %vm578, %v766, -inf
      %v1155 = vsel %vm578, %v862, -inf
      %v1156 = vmax.f32 %v1154, %v1155
      %v1157 = vsel %vm578, %v958, -inf
      %v1158 = vmax.f32 %v1156, %v1157
      %v1159 = vsel %vm578, %v1054, -inf
      %v1160 = vmax.f32 %v1158, %v1159
      %v1161 = vsel %vm578, %v769, -inf
      %v1162 = vsel %vm578, %v865, -inf
      %v1163 = vmax.f32 %v1161, %v1162
      %v1164 = vsel %vm578, %v961, -inf
      %v1165 = vmax.f32 %v1163, %v1164
      %v1166 = vsel %vm578, %v1057, -inf
      %v1167 = vmax.f32 %v1165, %v1166
      %v1168 = vsel %vm578, %v774, -inf
      %v1169 = vsel %vm578, %v870, -inf
      %v1170 = vmax.f32 %v1168, %v1169
      %v1171 = vsel %vm578, %v966, -inf
      %v1172 = vmax.f32 %v1170, %v1171
      %v1173 = vsel %vm578, %v1062, -inf
      %v1174 = vmax.f32 %v1172, %v1173
      %v1175 = vsel %vm578, %v777, -inf
      %v1176 = vsel %vm578, %v873, -inf
      %v1177 = vmax.f32 %v1175, %v1176
      %v1178 = vsel %vm578, %v969, -inf
      %v1179 = vmax.f32 %v1177, %v1178
      %v1180 = vsel %vm578, %v1065, -inf
      %v1181 = vmax.f32 %v1179, %v1180
      %v1182 = vsel %vm578, %v782, -inf
      %v1183 = vsel %vm578, %v878, -inf
      %v1184 = vmax.f32 %v1182, %v1183
      %v1185 = vsel %vm578, %v974, -inf
      %v1186 = vmax.f32 %v1184, %v1185
      %v1187 = vsel %vm578, %v1070, -inf
      %v1188 = vmax.f32 %v1186, %v1187
      %v1189 = vsel %vm578, %v785, -inf
      %v1190 = vsel %vm578, %v881, -inf
      %v1191 = vmax.f32 %v1189, %v1190
      %v1192 = vsel %vm578, %v977, -inf
      %v1193 = vmax.f32 %v1191, %v1192
      %v1194 = vsel %vm578, %v1073, -inf
      %v1195 = vmax.f32 %v1193, %v1194
      %v1196 = vsel %vm578, %v790, -inf
      %v1197 = vsel %vm578, %v886, -inf
      %v1198 = vmax.f32 %v1196, %v1197
      %v1199 = vsel %vm578, %v982, -inf
      %v1200 = vmax.f32 %v1198, %v1199
      %v1201 = vsel %vm578, %v1078, -inf
      %v1202 = vmax.f32 %v1200, %v1201
      %v1203 = vsel %vm578, %v793, -inf
      %v1204 = vsel %vm578, %v889, -inf
      %v1205 = vmax.f32 %v1203, %v1204
      %v1206 = vsel %vm578, %v985, -inf
      %v1207 = vmax.f32 %v1205, %v1206
      %v1208 = vsel %vm578, %v1081, -inf
      %v1209 = vmax.f32 %v1207, %v1208
      %v1210 = vsel %vm578, %v798, -inf
      %v1211 = vsel %vm578, %v894, -inf
      %v1212 = vmax.f32 %v1210, %v1211
      %v1213 = vsel %vm578, %v990, -inf
      %v1214 = vmax.f32 %v1212, %v1213
      %v1215 = vsel %vm578, %v1086, -inf
      %v1216 = vmax.f32 %v1214, %v1215
      %v1217 = vsel %vm578, %v801, -inf
      %v1218 = vsel %vm578, %v897, -inf
      %v1219 = vmax.f32 %v1217, %v1218
      %v1220 = vsel %vm578, %v993, -inf
      %v1221 = vmax.f32 %v1219, %v1220
      %v1222 = vsel %vm578, %v1089, -inf
      %v1223 = vmax.f32 %v1221, %v1222
      %v1224 = vsel %vm578, %v806, -inf
      %v1225 = vsel %vm578, %v902, -inf
      %v1226 = vmax.f32 %v1224, %v1225
      %v1227 = vsel %vm578, %v998, -inf
      %v1228 = vmax.f32 %v1226, %v1227
      %v1229 = vsel %vm578, %v1094, -inf
      %v1230 = vmax.f32 %v1228, %v1229
      %v1231 = vsel %vm578, %v809, -inf
      %v1232 = vsel %vm578, %v905, -inf
      %v1233 = vmax.f32 %v1231, %v1232
      %v1234 = vsel %vm578, %v1001, -inf
      %v1235 = vmax.f32 %v1233, %v1234
      %v1236 = vsel %vm578, %v1097, -inf
      %v1237 = vmax.f32 %v1235, %v1236
      %v1238 = vsel %vm578, %v814, -inf
      %v1239 = vsel %vm578, %v910, -inf
      %v1240 = vmax.f32 %v1238, %v1239
      %v1241 = vsel %vm578, %v1006, -inf
      %v1242 = vmax.f32 %v1240, %v1241
      %v1243 = vsel %vm578, %v1102, -inf
      %v1244 = vmax.f32 %v1242, %v1243
      %v1245 = vsel %vm578, %v817, -inf
      %v1246 = vsel %vm578, %v913, -inf
      %v1247 = vmax.f32 %v1245, %v1246
      %v1248 = vsel %vm578, %v1009, -inf
      %v1249 = vmax.f32 %v1247, %v1248
      %v1250 = vsel %vm578, %v1105, -inf
      %v1251 = vmax.f32 %v1249, %v1250
      %v1252 = vsel %vm578, %v822, -inf
      %v1253 = vsel %vm578, %v918, -inf
      %v1254 = vmax.f32 %v1252, %v1253
      %v1255 = vsel %vm578, %v1014, -inf
      %v1256 = vmax.f32 %v1254, %v1255
      %v1257 = vsel %vm578, %v1110, -inf
      %v1258 = vmax.f32 %v1256, %v1257
      %v1259 = vsel %vm578, %v825, -inf
      %v1260 = vsel %vm578, %v921, -inf
      %v1261 = vmax.f32 %v1259, %v1260
      %v1262 = vsel %vm578, %v1017, -inf
      %v1263 = vmax.f32 %v1261, %v1262
      %v1264 = vsel %vm578, %v1113, -inf
      %v1265 = vmax.f32 %v1263, %v1264
      %v1266 = vsel %vm578, %v830, -inf
      %v1267 = vsel %vm578, %v926, -inf
      %v1268 = vmax.f32 %v1266, %v1267
      %v1269 = vsel %vm578, %v1022, -inf
      %v1270 = vmax.f32 %v1268, %v1269
      %v1271 = vsel %vm578, %v1118, -inf
      %v1272 = vmax.f32 %v1270, %v1271
      %v1273 = vsel %vm578, %v833, -inf
      %v1274 = vsel %vm578, %v929, -inf
      %v1275 = vmax.f32 %v1273, %v1274
      %v1276 = vsel %vm578, %v1025, -inf
      %v1277 = vmax.f32 %v1275, %v1276
      %v1278 = vsel %vm578, %v1121, -inf
      %v1279 = vmax.f32 %v1277, %v1278
      %v1280 = vsel %vm578, %v838, -inf
      %v1281 = vsel %vm578, %v934, -inf
      %v1282 = vmax.f32 %v1280, %v1281
      %v1283 = vsel %vm578, %v1030, -inf
      %v1284 = vmax.f32 %v1282, %v1283
      %v1285 = vsel %vm578, %v1126, -inf
      %v1286 = vmax.f32 %v1284, %v1285
      %v1287 = vsel %vm578, %v841, -inf
      %v1288 = vsel %vm578, %v937, -inf
      %v1289 = vmax.f32 %v1287, %v1288
      %v1290 = vsel %vm578, %v1033, -inf
      %v1291 = vmax.f32 %v1289, %v1290
      %v1292 = vsel %vm578, %v1129, -inf
      %v1293 = vmax.f32 %v1291, %v1292
      %v1294 = vsel %vm578, %v846, -inf
      %v1295 = vsel %vm578, %v942, -inf
      %v1296 = vmax.f32 %v1294, %v1295
      %v1297 = vsel %vm578, %v1038, -inf
      %v1298 = vmax.f32 %v1296, %v1297
      %v1299 = vsel %vm578, %v1134, -inf
      %v1300 = vmax.f32 %v1298, %v1299
      %v1301 = vsel %vm578, %v849, -inf
      %v1302 = vsel %vm578, %v945, -inf
      %v1303 = vmax.f32 %v1301, %v1302
      %v1304 = vsel %vm578, %v1041, -inf
      %v1305 = vmax.f32 %v1303, %v1304
      %v1306 = vsel %vm578, %v1137, -inf
      %v1307 = vmax.f32 %v1305, %v1306
      %v1308 = vld [vmem:[%s2] sm:$0x1]
      %v1310 = vlaneseq
      %v1311 = vshrl.u32 %v1310, 7
      %v1312 = vsub.s32 0, %v1311
      %v1313 = vrot.slane %v1308, %v1312
      %v1315 = vadd.f32 %v1146, %v1313
      %v1316 = vadd.f32 %v1153, %v1313
      %v1317 = vadd.f32 %v1160, %v1313
      %v1318 = vadd.f32 %v1167, %v1313
      %v1319 = vadd.f32 %v1174, %v1313
      %v1320 = vadd.f32 %v1181, %v1313
      %v1321 = vadd.f32 %v1188, %v1313
      %v1322 = vadd.f32 %v1195, %v1313
      %v1323 = vadd.f32 %v1202, %v1313
      %v1324 = vadd.f32 %v1209, %v1313
      %v1325 = vadd.f32 %v1216, %v1313
      %v1326 = vadd.f32 %v1223, %v1313
      %v1327 = vadd.f32 %v1230, %v1313
      %v1328 = vadd.f32 %v1237, %v1313
      %v1329 = vadd.f32 %v1244, %v1313
      %v1330 = vadd.f32 %v1251, %v1313
      %v1331 = vadd.f32 %v1258, %v1313
      %v1332 = vadd.f32 %v1265, %v1313
      %v1333 = vadd.f32 %v1272, %v1313
      %v1334 = vadd.f32 %v1279, %v1313
      %v1335 = vadd.f32 %v1286, %v1313
      %v1336 = vadd.f32 %v1293, %v1313
      %v1337 = vadd.f32 %v1300, %v1313
      %v1338 = vadd.f32 %v1307, %v1313
      %v1339 = vmax.f32 %v1315, 0.0
      %v1340 = vmax.f32 %v1316, 0.0
      %v1341 = vmax.f32 %v1317, 0.0
      %v1342 = vmax.f32 %v1318, 0.0
      %v1343 = vmax.f32 %v1319, 0.0
      %v1344 = vmax.f32 %v1320, 0.0
      %v1345 = vmax.f32 %v1321, 0.0
      %v1346 = vmax.f32 %v1322, 0.0
      %v1347 = vmax.f32 %v1323, 0.0
      %v1348 = vmax.f32 %v1324, 0.0
      %v1349 = vmax.f32 %v1325, 0.0
      %v1350 = vmax.f32 %v1326, 0.0
      %v1351 = vmax.f32 %v1327, 0.0
      %v1352 = vmax.f32 %v1328, 0.0
      %v1353 = vmax.f32 %v1329, 0.0
      %v1354 = vmax.f32 %v1330, 0.0
      %v1355 = vmax.f32 %v1331, 0.0
      %v1356 = vmax.f32 %v1332, 0.0
      %v1357 = vmax.f32 %v1333, 0.0
      %v1358 = vmax.f32 %v1334, 0.0
      %v1359 = vmax.f32 %v1335, 0.0
      %v1360 = vmax.f32 %v1336, 0.0
      %v1361 = vmax.f32 %v1337, 0.0
      %v1362 = vmax.f32 %v1338, 0.0
      %1363 = vst.msk [vmem:[#allocation2] sm:$0xff] %vm578, %v1339
      %1364 = vst.msk [vmem:[#allocation2 + $0x8] sm:$0xff] %vm578, %v1340
      %1365 = vst.msk [vmem:[#allocation2 + $0x10] sm:$0xff] %vm578, %v1341
      %1366 = vst.msk [vmem:[#allocation2 + $0x18] sm:$0xff] %vm578, %v1342
      %1367 = vst.msk [vmem:[#allocation2 + $0x20] sm:$0xff] %vm578, %v1343
      %1368 = vst.msk [vmem:[#allocation2 + $0x28] sm:$0xff] %vm578, %v1344
      %1369 = vst.msk [vmem:[#allocation2 + $0x30] sm:$0xff] %vm578, %v1345
      %1370 = vst.msk [vmem:[#allocation2 + $0x38] sm:$0xff] %vm578, %v1346
      %1371 = vst.msk [vmem:[#allocation2 + $0x40] sm:$0xff] %vm578, %v1347
      %1372 = vst.msk [vmem:[#allocation2 + $0x48] sm:$0xff] %vm578, %v1348
      %1373 = vst.msk [vmem:[#allocation2 + $0x50] sm:$0xff] %vm578, %v1349
      %1374 = vst.msk [vmem:[#allocation2 + $0x58] sm:$0xff] %vm578, %v1350
      %1375 = vst.msk [vmem:[#allocation2 + $0x60] sm:$0xff] %vm578, %v1351
      %1376 = vst.msk [vmem:[#allocation2 + $0x68] sm:$0xff] %vm578, %v1352
      %1377 = vst.msk [vmem:[#allocation2 + $0x70] sm:$0xff] %vm578, %v1353
      %1378 = vst.msk [vmem:[#allocation2 + $0x78] sm:$0xff] %vm578, %v1354
      %1379 = vst.msk [vmem:[#allocation2 + $0x80] sm:$0xff] %vm578, %v1355
      %1380 = vst.msk [vmem:[#allocation2 + $0x88] sm:$0xff] %vm578, %v1356
      %1381 = vst.msk [vmem:[#allocation2 + $0x90] sm:$0xff] %vm578, %v1357
      %1382 = vst.msk [vmem:[#allocation2 + $0x98] sm:$0xff] %vm578, %v1358
      %1383 = vst.msk [vmem:[#allocation2 + $0xa0] sm:$0xff] %vm578, %v1359
      %1384 = vst.msk [vmem:[#allocation2 + $0xa8] sm:$0xff] %vm578, %v1360
      %1385 = vst.msk [vmem:[#allocation2 + $0xb0] sm:$0xff] %vm578, %v1361
      %1386 = vst.msk [vmem:[#allocation2 + $0xb8] sm:$0xff] %vm578, %v1362
      %v1387 = vld [vmem:[#allocation2] sm:$0xff]
      %v1388 = vld [vmem:[#allocation2 + $0x10] sm:$0xff]
      %v1389 = vld [vmem:[#allocation2 + $0x20] sm:$0xff]
      %v1390 = vld [vmem:[#allocation2 + $0x30] sm:$0xff]
      %v1391 = vld [vmem:[#allocation2 + $0x40] sm:$0xff]
      %v1392 = vld [vmem:[#allocation2 + $0x50] sm:$0xff]
      %v1393 = vld [vmem:[#allocation2 + $0x60] sm:$0xff]
      %v1394 = vld [vmem:[#allocation2 + $0x70] sm:$0xff]
      %v1395 = vld [vmem:[#allocation2 + $0x1] sm:$0xff]
      %v1396 = vld [vmem:[#allocation2 + $0x11] sm:$0xff]
      %v1397 = vld [vmem:[#allocation2 + $0x21] sm:$0xff]
      %v1398 = vld [vmem:[#allocation2 + $0x31] sm:$0xff]
      %v1399 = vld [vmem:[#allocation2 + $0x41] sm:$0xff]
      %v1400 = vld [vmem:[#allocation2 + $0x51] sm:$0xff]
      %v1401 = vld [vmem:[#allocation2 + $0x61] sm:$0xff]
      %v1402 = vld [vmem:[#allocation2 + $0x71] sm:$0xff]
      %v1403 = vld [vmem:[#allocation2 + $0x2] sm:$0xff]
      %v1404 = vld [vmem:[#allocation2 + $0x12] sm:$0xff]
      %v1405 = vld [vmem:[#allocation2 + $0x22] sm:$0xff]
      %v1406 = vld [vmem:[#allocation2 + $0x32] sm:$0xff]
      %v1407 = vld [vmem:[#allocation2 + $0x42] sm:$0xff]
      %v1408 = vld [vmem:[#allocation2 + $0x52] sm:$0xff]
      %v1409 = vld [vmem:[#allocation2 + $0x62] sm:$0xff]
      %v1410 = vld [vmem:[#allocation2 + $0x72] sm:$0xff]
      %v1411 = vld [vmem:[#allocation2 + $0x3] sm:$0xff]
      %v1412 = vld [vmem:[#allocation2 + $0x13] sm:$0xff]
      %v1413 = vld [vmem:[#allocation2 + $0x23] sm:$0xff]
      %v1414 = vld [vmem:[#allocation2 + $0x33] sm:$0xff]
      %v1415 = vld [vmem:[#allocation2 + $0x43] sm:$0xff]
      %v1416 = vld [vmem:[#allocation2 + $0x53] sm:$0xff]
      %v1417 = vld [vmem:[#allocation2 + $0x63] sm:$0xff]
      %v1418 = vld [vmem:[#allocation2 + $0x73] sm:$0xff]
      %v1419 = vld [vmem:[#allocation2 + $0x4] sm:$0xff]
      %v1420 = vld [vmem:[#allocation2 + $0x14] sm:$0xff]
      %v1421 = vld [vmem:[#allocation2 + $0x24] sm:$0xff]
      %v1422 = vld [vmem:[#allocation2 + $0x34] sm:$0xff]
      %v1423 = vld [vmem:[#allocation2 + $0x44] sm:$0xff]
      %v1424 = vld [vmem:[#allocation2 + $0x54] sm:$0xff]
      %v1425 = vld [vmem:[#allocation2 + $0x64] sm:$0xff]
      %v1426 = vld [vmem:[#allocation2 + $0x74] sm:$0xff]
      %s1427 = scalar_lea.vmem [#allocation2], 16
      %v1428 = vld [vmem:[%s1427] sm:$0xff]
      %v1429 = vld [vmem:[%s1427 + $0x10] sm:$0xff]
      %v1430 = vld [vmem:[%s1427 + $0x20] sm:$0xff]
      %v1431 = vld [vmem:[%s1427 + $0x30] sm:$0xff]
      %v1432 = vld [vmem:[%s1427 + $0x40] sm:$0xff]
      %v1433 = vld [vmem:[%s1427 + $0x50] sm:$0xff]
      %v1434 = vld [vmem:[%s1427 + $0x60] sm:$0xff]
      %v1435 = vld [vmem:[%s1427 + $0x70] sm:$0xff]
      %v1436 = vld [vmem:[%s1427 + $0x1] sm:$0xff]
      %v1437 = vld [vmem:[%s1427 + $0x11] sm:$0xff]
      %v1438 = vld [vmem:[%s1427 + $0x21] sm:$0xff]
      %v1439 = vld [vmem:[%s1427 + $0x31] sm:$0xff]
      %v1440 = vld [vmem:[%s1427 + $0x41] sm:$0xff]
      %v1441 = vld [vmem:[%s1427 + $0x51] sm:$0xff]
      %v1442 = vld [vmem:[%s1427 + $0x61] sm:$0xff]
      %v1443 = vld [vmem:[%s1427 + $0x71] sm:$0xff]
      %v1444 = vld [vmem:[%s1427 + $0x2] sm:$0xff]
      %v1445 = vld [vmem:[%s1427 + $0x12] sm:$0xff]
      %v1446 = vld [vmem:[%s1427 + $0x22] sm:$0xff]
      %v1447 = vld [vmem:[%s1427 + $0x32] sm:$0xff]
      %v1448 = vld [vmem:[%s1427 + $0x42] sm:$0xff]
      %v1449 = vld [vmem:[%s1427 + $0x52] sm:$0xff]
      %v1450 = vld [vmem:[%s1427 + $0x62] sm:$0xff]
      %v1451 = vld [vmem:[%s1427 + $0x72] sm:$0xff]
      %v1452 = vld [vmem:[%s1427 + $0x3] sm:$0xff]
      %v1453 = vld [vmem:[%s1427 + $0x13] sm:$0xff]
      %v1454 = vld [vmem:[%s1427 + $0x23] sm:$0xff]
      %v1455 = vld [vmem:[%s1427 + $0x33] sm:$0xff]
      %v1456 = vld [vmem:[%s1427 + $0x43] sm:$0xff]
      %v1457 = vld [vmem:[%s1427 + $0x53] sm:$0xff]
      %v1458 = vld [vmem:[%s1427 + $0x63] sm:$0xff]
      %v1459 = vld [vmem:[%s1427 + $0x73] sm:$0xff]
      %v1460 = vld [vmem:[%s1427 + $0x4] sm:$0xff]
      %v1461 = vld [vmem:[%s1427 + $0x14] sm:$0xff]
      %v1462 = vld [vmem:[%s1427 + $0x24] sm:$0xff]
      %v1463 = vld [vmem:[%s1427 + $0x34] sm:$0xff]
      %v1464 = vld [vmem:[%s1427 + $0x44] sm:$0xff]
      %v1465 = vld [vmem:[%s1427 + $0x54] sm:$0xff]
      %v1466 = vld [vmem:[%s1427 + $0x64] sm:$0xff]
      %v1467 = vld [vmem:[%s1427 + $0x74] sm:$0xff]
      %s1468 = scalar_lea.vmem [#allocation2], 32
      %v1469 = vld [vmem:[%s1468] sm:$0xff]
      %v1470 = vld [vmem:[%s1468 + $0x10] sm:$0xff]
      %v1471 = vld [vmem:[%s1468 + $0x20] sm:$0xff]
      %v1472 = vld [vmem:[%s1468 + $0x30] sm:$0xff]
      %v1473 = vld [vmem:[%s1468 + $0x40] sm:$0xff]
      %v1474 = vld [vmem:[%s1468 + $0x50] sm:$0xff]
      %v1475 = vld [vmem:[%s1468 + $0x60] sm:$0xff]
      %v1476 = vld [vmem:[%s1468 + $0x70] sm:$0xff]
      %v1477 = vld [vmem:[%s1468 + $0x1] sm:$0xff]
      %v1478 = vld [vmem:[%s1468 + $0x11] sm:$0xff]
      %v1479 = vld [vmem:[%s1468 + $0x21] sm:$0xff]
      %v1480 = vld [vmem:[%s1468 + $0x31] sm:$0xff]
      %v1481 = vld [vmem:[%s1468 + $0x41] sm:$0xff]
      %v1482 = vld [vmem:[%s1468 + $0x51] sm:$0xff]
      %v1483 = vld [vmem:[%s1468 + $0x61] sm:$0xff]
      %v1484 = vld [vmem:[%s1468 + $0x71] sm:$0xff]
      %v1485 = vld [vmem:[%s1468 + $0x2] sm:$0xff]
      %v1486 = vld [vmem:[%s1468 + $0x12] sm:$0xff]
      %v1487 = vld [vmem:[%s1468 + $0x22] sm:$0xff]
      %v1488 = vld [vmem:[%s1468 + $0x32] sm:$0xff]
      %v1489 = vld [vmem:[%s1468 + $0x42] sm:$0xff]
      %v1490 = vld [vmem:[%s1468 + $0x52] sm:$0xff]
      %v1491 = vld [vmem:[%s1468 + $0x62] sm:$0xff]
      %v1492 = vld [vmem:[%s1468 + $0x72] sm:$0xff]
      %v1493 = vld [vmem:[%s1468 + $0x3] sm:$0xff]
      %v1494 = vld [vmem:[%s1468 + $0x13] sm:$0xff]
      %v1495 = vld [vmem:[%s1468 + $0x23] sm:$0xff]
      %v1496 = vld [vmem:[%s1468 + $0x33] sm:$0xff]
      %v1497 = vld [vmem:[%s1468 + $0x43] sm:$0xff]
      %v1498 = vld [vmem:[%s1468 + $0x53] sm:$0xff]
      %v1499 = vld [vmem:[%s1468 + $0x63] sm:$0xff]
      %v1500 = vld [vmem:[%s1468 + $0x73] sm:$0xff]
      %v1501 = vld [vmem:[%s1468 + $0x4] sm:$0xff]
      %v1502 = vld [vmem:[%s1468 + $0x14] sm:$0xff]
      %v1503 = vld [vmem:[%s1468 + $0x24] sm:$0xff]
      %v1504 = vld [vmem:[%s1468 + $0x34] sm:$0xff]
      %v1505 = vld [vmem:[%s1468 + $0x44] sm:$0xff]
      %v1506 = vld [vmem:[%s1468 + $0x54] sm:$0xff]
      %v1507 = vld [vmem:[%s1468 + $0x64] sm:$0xff]
      %v1508 = vld [vmem:[%s1468 + $0x74] sm:$0xff]
      %s1509 = scalar_lea.vmem [#allocation2], 48
      %v1510 = vld [vmem:[%s1509] sm:$0xff]
      %v1511 = vld [vmem:[%s1509 + $0x10] sm:$0xff]
      %v1512 = vld [vmem:[%s1509 + $0x20] sm:$0xff]
      %v1513 = vld [vmem:[%s1509 + $0x30] sm:$0xff]
      %v1514 = vld [vmem:[%s1509 + $0x40] sm:$0xff]
      %v1515 = vld [vmem:[%s1509 + $0x50] sm:$0xff]
      %v1516 = vld [vmem:[%s1509 + $0x60] sm:$0xff]
      %v1517 = vld [vmem:[%s1509 + $0x70] sm:$0xff]
      %v1518 = vld [vmem:[%s1509 + $0x1] sm:$0xff]
      %v1519 = vld [vmem:[%s1509 + $0x11] sm:$0xff]
      %v1520 = vld [vmem:[%s1509 + $0x21] sm:$0xff]
      %v1521 = vld [vmem:[%s1509 + $0x31] sm:$0xff]
      %v1522 = vld [vmem:[%s1509 + $0x41] sm:$0xff]
      %v1523 = vld [vmem:[%s1509 + $0x51] sm:$0xff]
      %v1524 = vld [vmem:[%s1509 + $0x61] sm:$0xff]
      %v1525 = vld [vmem:[%s1509 + $0x71] sm:$0xff]
      %v1526 = vld [vmem:[%s1509 + $0x2] sm:$0xff]
      %v1527 = vld [vmem:[%s1509 + $0x12] sm:$0xff]
      %v1528 = vld [vmem:[%s1509 + $0x22] sm:$0xff]
      %v1529 = vld [vmem:[%s1509 + $0x32] sm:$0xff]
      %v1530 = vld [vmem:[%s1509 + $0x42] sm:$0xff]
      %v1531 = vld [vmem:[%s1509 + $0x52] sm:$0xff]
      %v1532 = vld [vmem:[%s1509 + $0x62] sm:$0xff]
      %v1533 = vld [vmem:[%s1509 + $0x72] sm:$0xff]
      %v1534 = vld [vmem:[%s1509 + $0x3] sm:$0xff]
      %v1535 = vld [vmem:[%s1509 + $0x13] sm:$0xff]
      %v1536 = vld [vmem:[%s1509 + $0x23] sm:$0xff]
      %v1537 = vld [vmem:[%s1509 + $0x33] sm:$0xff]
      %v1538 = vld [vmem:[%s1509 + $0x43] sm:$0xff]
      %v1539 = vld [vmem:[%s1509 + $0x53] sm:$0xff]
      %v1540 = vld [vmem:[%s1509 + $0x63] sm:$0xff]
      %v1541 = vld [vmem:[%s1509 + $0x73] sm:$0xff]
      %v1542 = vld [vmem:[%s1509 + $0x4] sm:$0xff]
      %v1543 = vld [vmem:[%s1509 + $0x14] sm:$0xff]
      %v1544 = vld [vmem:[%s1509 + $0x24] sm:$0xff]
      %v1545 = vld [vmem:[%s1509 + $0x34] sm:$0xff]
      %v1546 = vld [vmem:[%s1509 + $0x44] sm:$0xff]
      %v1547 = vld [vmem:[%s1509 + $0x54] sm:$0xff]
      %v1548 = vld [vmem:[%s1509 + $0x64] sm:$0xff]
      %v1549 = vld [vmem:[%s1509 + $0x74] sm:$0xff]
      %s1550 = scalar_lea.vmem [#allocation2], 64
      %v1551 = vld [vmem:[%s1550] sm:$0xff]
      %v1552 = vld [vmem:[%s1550 + $0x10] sm:$0xff]
      %v1553 = vld [vmem:[%s1550 + $0x20] sm:$0xff]
      %v1554 = vld [vmem:[%s1550 + $0x30] sm:$0xff]
      %v1555 = vld [vmem:[%s1550 + $0x40] sm:$0xff]
      %v1556 = vld [vmem:[%s1550 + $0x50] sm:$0xff]
      %v1557 = vld [vmem:[%s1550 + $0x60] sm:$0xff]
      %v1558 = vld [vmem:[%s1550 + $0x70] sm:$0xff]
      %v1559 = vld [vmem:[%s1550 + $0x1] sm:$0xff]
      %v1560 = vld [vmem:[%s1550 + $0x11] sm:$0xff]
      %v1561 = vld [vmem:[%s1550 + $0x21] sm:$0xff]
      %v1562 = vld [vmem:[%s1550 + $0x31] sm:$0xff]
      %v1563 = vld [vmem:[%s1550 + $0x41] sm:$0xff]
      %v1564 = vld [vmem:[%s1550 + $0x51] sm:$0xff]
      %v1565 = vld [vmem:[%s1550 + $0x61] sm:$0xff]
      %v1566 = vld [vmem:[%s1550 + $0x71] sm:$0xff]
      %v1567 = vld [vmem:[%s1550 + $0x2] sm:$0xff]
      %v1568 = vld [vmem:[%s1550 + $0x12] sm:$0xff]
      %v1569 = vld [vmem:[%s1550 + $0x22] sm:$0xff]
      %v1570 = vld [vmem:[%s1550 + $0x32] sm:$0xff]
      %v1571 = vld [vmem:[%s1550 + $0x42] sm:$0xff]
      %v1572 = vld [vmem:[%s1550 + $0x52] sm:$0xff]
      %v1573 = vld [vmem:[%s1550 + $0x62] sm:$0xff]
      %v1574 = vld [vmem:[%s1550 + $0x72] sm:$0xff]
      %v1575 = vld [vmem:[%s1550 + $0x3] sm:$0xff]
      %v1576 = vld [vmem:[%s1550 + $0x13] sm:$0xff]
      %v1577 = vld [vmem:[%s1550 + $0x23] sm:$0xff]
      %v1578 = vld [vmem:[%s1550 + $0x33] sm:$0xff]
      %v1579 = vld [vmem:[%s1550 + $0x43] sm:$0xff]
      %v1580 = vld [vmem:[%s1550 + $0x53] sm:$0xff]
      %v1581 = vld [vmem:[%s1550 + $0x63] sm:$0xff]
      %v1582 = vld [vmem:[%s1550 + $0x73] sm:$0xff]
      %v1583 = vld [vmem:[%s1550 + $0x4] sm:$0xff]
      %v1584 = vld [vmem:[%s1550 + $0x14] sm:$0xff]
      %v1585 = vld [vmem:[%s1550 + $0x24] sm:$0xff]
      %v1586 = vld [vmem:[%s1550 + $0x34] sm:$0xff]
      %v1587 = vld [vmem:[%s1550 + $0x44] sm:$0xff]
      %v1588 = vld [vmem:[%s1550 + $0x54] sm:$0xff]
      %v1589 = vld [vmem:[%s1550 + $0x64] sm:$0xff]
      %v1590 = vld [vmem:[%s1550 + $0x74] sm:$0xff]
      %1599 = vrot.lane.b32.xlu0 %v1395, 32
      %v1600 = vpop.permute.xlu0 %1599
      %1601 = vrot.lane.b32.xlu0 %v1396, 32
      %v1602 = vpop.permute.xlu0 %1601
      %1603 = vrot.lane.b32.xlu0 %v1397, 32
      %v1604 = vpop.permute.xlu0 %1603
      %1605 = vrot.lane.b32.xlu0 %v1398, 32
      %v1606 = vpop.permute.xlu0 %1605
      %1607 = vrot.lane.b32.xlu0 %v1399, 32
      %v1608 = vpop.permute.xlu0 %1607
      %1609 = vrot.lane.b32.xlu0 %v1400, 32
      %v1610 = vpop.permute.xlu0 %1609
      %1611 = vrot.lane.b32.xlu0 %v1401, 32
      %v1612 = vpop.permute.xlu0 %1611
      %1613 = vrot.lane.b32.xlu0 %v1402, 32
      %v1614 = vpop.permute.xlu0 %1613
      %1631 = vrot.lane.b32.xlu0 %v1403, 64
      %v1632 = vpop.permute.xlu0 %1631
      %1633 = vrot.lane.b32.xlu0 %v1404, 64
      %v1634 = vpop.permute.xlu0 %1633
      %1635 = vrot.lane.b32.xlu0 %v1405, 64
      %v1636 = vpop.permute.xlu0 %1635
      %1637 = vrot.lane.b32.xlu0 %v1406, 64
      %v1638 = vpop.permute.xlu0 %1637
      %1639 = vrot.lane.b32.xlu0 %v1407, 64
      %v1640 = vpop.permute.xlu0 %1639
      %1641 = vrot.lane.b32.xlu0 %v1408, 64
      %v1642 = vpop.permute.xlu0 %1641
      %1643 = vrot.lane.b32.xlu0 %v1409, 64
      %v1644 = vpop.permute.xlu0 %1643
      %1645 = vrot.lane.b32.xlu0 %v1410, 64
      %v1646 = vpop.permute.xlu0 %1645
      %1663 = vrot.lane.b32.xlu0 %v1411, 96
      %v1664 = vpop.permute.xlu0 %1663
      %1665 = vrot.lane.b32.xlu0 %v1412, 96
      %v1666 = vpop.permute.xlu0 %1665
      %1667 = vrot.lane.b32.xlu0 %v1413, 96
      %v1668 = vpop.permute.xlu0 %1667
      %1669 = vrot.lane.b32.xlu0 %v1414, 96
      %v1670 = vpop.permute.xlu0 %1669
      %1671 = vrot.lane.b32.xlu0 %v1415, 96
      %v1672 = vpop.permute.xlu0 %1671
      %1673 = vrot.lane.b32.xlu0 %v1416, 96
      %v1674 = vpop.permute.xlu0 %1673
      %1675 = vrot.lane.b32.xlu0 %v1417, 96
      %v1676 = vpop.permute.xlu0 %1675
      %1677 = vrot.lane.b32.xlu0 %v1418, 96
      %v1678 = vpop.permute.xlu0 %1677
      %1695 = vrot.lane.b32.xlu0 %v1428, 32
      %v1696 = vpop.permute.xlu0 %1695
      %1697 = vrot.lane.b32.xlu0 %v1429, 32
      %v1698 = vpop.permute.xlu0 %1697
      %1699 = vrot.lane.b32.xlu0 %v1430, 32
      %v1700 = vpop.permute.xlu0 %1699
      %1701 = vrot.lane.b32.xlu0 %v1431, 32
      %v1702 = vpop.permute.xlu0 %1701
      %1703 = vrot.lane.b32.xlu0 %v1432, 32
      %v1704 = vpop.permute.xlu0 %1703
      %1705 = vrot.lane.b32.xlu0 %v1433, 32
      %v1706 = vpop.permute.xlu0 %1705
      %1707 = vrot.lane.b32.xlu0 %v1434, 32
      %v1708 = vpop.permute.xlu0 %1707
      %1709 = vrot.lane.b32.xlu0 %v1435, 32
      %v1710 = vpop.permute.xlu0 %1709
      %1727 = vrot.lane.b32.xlu0 %v1436, 64
      %v1728 = vpop.permute.xlu0 %1727
      %1729 = vrot.lane.b32.xlu0 %v1437, 64
      %v1730 = vpop.permute.xlu0 %1729
      %1731 = vrot.lane.b32.xlu0 %v1438, 64
      %v1732 = vpop.permute.xlu0 %1731
      %1733 = vrot.lane.b32.xlu0 %v1439, 64
      %v1734 = vpop.permute.xlu0 %1733
      %1735 = vrot.lane.b32.xlu0 %v1440, 64
      %v1736 = vpop.permute.xlu0 %1735
      %1737 = vrot.lane.b32.xlu0 %v1441, 64
      %v1738 = vpop.permute.xlu0 %1737
      %1739 = vrot.lane.b32.xlu0 %v1442, 64
      %v1740 = vpop.permute.xlu0 %1739
      %1741 = vrot.lane.b32.xlu0 %v1443, 64
      %v1742 = vpop.permute.xlu0 %1741
      %1759 = vrot.lane.b32.xlu0 %v1444, 96
      %v1760 = vpop.permute.xlu0 %1759
      %1761 = vrot.lane.b32.xlu0 %v1445, 96
      %v1762 = vpop.permute.xlu0 %1761
      %1763 = vrot.lane.b32.xlu0 %v1446, 96
      %v1764 = vpop.permute.xlu0 %1763
      %1765 = vrot.lane.b32.xlu0 %v1447, 96
      %v1766 = vpop.permute.xlu0 %1765
      %1767 = vrot.lane.b32.xlu0 %v1448, 96
      %v1768 = vpop.permute.xlu0 %1767
      %1769 = vrot.lane.b32.xlu0 %v1449, 96
      %v1770 = vpop.permute.xlu0 %1769
      %1771 = vrot.lane.b32.xlu0 %v1450, 96
      %v1772 = vpop.permute.xlu0 %1771
      %1773 = vrot.lane.b32.xlu0 %v1451, 96
      %v1774 = vpop.permute.xlu0 %1773
      %1791 = vrot.lane.b32.xlu0 %v1460, 32
      %v1792 = vpop.permute.xlu0 %1791
      %1793 = vrot.lane.b32.xlu0 %v1461, 32
      %v1794 = vpop.permute.xlu0 %1793
      %1795 = vrot.lane.b32.xlu0 %v1462, 32
      %v1796 = vpop.permute.xlu0 %1795
      %1797 = vrot.lane.b32.xlu0 %v1463, 32
      %v1798 = vpop.permute.xlu0 %1797
      %1799 = vrot.lane.b32.xlu0 %v1464, 32
      %v1800 = vpop.permute.xlu0 %1799
      %1801 = vrot.lane.b32.xlu0 %v1465, 32
      %v1802 = vpop.permute.xlu0 %1801
      %1803 = vrot.lane.b32.xlu0 %v1466, 32
      %v1804 = vpop.permute.xlu0 %1803
      %1805 = vrot.lane.b32.xlu0 %v1467, 32
      %v1806 = vpop.permute.xlu0 %1805
      %1823 = vrot.lane.b32.xlu0 %v1469, 64
      %v1824 = vpop.permute.xlu0 %1823
      %1825 = vrot.lane.b32.xlu0 %v1470, 64
      %v1826 = vpop.permute.xlu0 %1825
      %1827 = vrot.lane.b32.xlu0 %v1471, 64
      %v1828 = vpop.permute.xlu0 %1827
      %1829 = vrot.lane.b32.xlu0 %v1472, 64
      %v1830 = vpop.permute.xlu0 %1829
      %1831 = vrot.lane.b32.xlu0 %v1473, 64
      %v1832 = vpop.permute.xlu0 %1831
      %1833 = vrot.lane.b32.xlu0 %v1474, 64
      %v1834 = vpop.permute.xlu0 %1833
      %1835 = vrot.lane.b32.xlu0 %v1475, 64
      %v1836 = vpop.permute.xlu0 %1835
      %1837 = vrot.lane.b32.xlu0 %v1476, 64
      %v1838 = vpop.permute.xlu0 %1837
      %1855 = vrot.lane.b32.xlu0 %v1477, 96
      %v1856 = vpop.permute.xlu0 %1855
      %1857 = vrot.lane.b32.xlu0 %v1478, 96
      %v1858 = vpop.permute.xlu0 %1857
      %1859 = vrot.lane.b32.xlu0 %v1479, 96
      %v1860 = vpop.permute.xlu0 %1859
      %1861 = vrot.lane.b32.xlu0 %v1480, 96
      %v1862 = vpop.permute.xlu0 %1861
      %1863 = vrot.lane.b32.xlu0 %v1481, 96
      %v1864 = vpop.permute.xlu0 %1863
      %1865 = vrot.lane.b32.xlu0 %v1482, 96
      %v1866 = vpop.permute.xlu0 %1865
      %1867 = vrot.lane.b32.xlu0 %v1483, 96
      %v1868 = vpop.permute.xlu0 %1867
      %1869 = vrot.lane.b32.xlu0 %v1484, 96
      %v1870 = vpop.permute.xlu0 %1869
      %1887 = vrot.lane.b32.xlu0 %v1493, 32
      %v1888 = vpop.permute.xlu0 %1887
      %1889 = vrot.lane.b32.xlu0 %v1494, 32
      %v1890 = vpop.permute.xlu0 %1889
      %1891 = vrot.lane.b32.xlu0 %v1495, 32
      %v1892 = vpop.permute.xlu0 %1891
      %1893 = vrot.lane.b32.xlu0 %v1496, 32
      %v1894 = vpop.permute.xlu0 %1893
      %1895 = vrot.lane.b32.xlu0 %v1497, 32
      %v1896 = vpop.permute.xlu0 %1895
      %1897 = vrot.lane.b32.xlu0 %v1498, 32
      %v1898 = vpop.permute.xlu0 %1897
      %1899 = vrot.lane.b32.xlu0 %v1499, 32
      %v1900 = vpop.permute.xlu0 %1899
      %1901 = vrot.lane.b32.xlu0 %v1500, 32
      %v1902 = vpop.permute.xlu0 %1901
      %1919 = vrot.lane.b32.xlu0 %v1501, 64
      %v1920 = vpop.permute.xlu0 %1919
      %1921 = vrot.lane.b32.xlu0 %v1502, 64
      %v1922 = vpop.permute.xlu0 %1921
      %1923 = vrot.lane.b32.xlu0 %v1503, 64
      %v1924 = vpop.permute.xlu0 %1923
      %1925 = vrot.lane.b32.xlu0 %v1504, 64
      %v1926 = vpop.permute.xlu0 %1925
      %1927 = vrot.lane.b32.xlu0 %v1505, 64
      %v1928 = vpop.permute.xlu0 %1927
      %1929 = vrot.lane.b32.xlu0 %v1506, 64
      %v1930 = vpop.permute.xlu0 %1929
      %1931 = vrot.lane.b32.xlu0 %v1507, 64
      %v1932 = vpop.permute.xlu0 %1931
      %1933 = vrot.lane.b32.xlu0 %v1508, 64
      %v1934 = vpop.permute.xlu0 %1933
      %1951 = vrot.lane.b32.xlu0 %v1510, 96
      %v1952 = vpop.permute.xlu0 %1951
      %1953 = vrot.lane.b32.xlu0 %v1511, 96
      %v1954 = vpop.permute.xlu0 %1953
      %1955 = vrot.lane.b32.xlu0 %v1512, 96
      %v1956 = vpop.permute.xlu0 %1955
      %1957 = vrot.lane.b32.xlu0 %v1513, 96
      %v1958 = vpop.permute.xlu0 %1957
      %1959 = vrot.lane.b32.xlu0 %v1514, 96
      %v1960 = vpop.permute.xlu0 %1959
      %1961 = vrot.lane.b32.xlu0 %v1515, 96
      %v1962 = vpop.permute.xlu0 %1961
      %1963 = vrot.lane.b32.xlu0 %v1516, 96
      %v1964 = vpop.permute.xlu0 %1963
      %1965 = vrot.lane.b32.xlu0 %v1517, 96
      %v1966 = vpop.permute.xlu0 %1965
      %v1975 = vsel %vm578, %v1387, %v1600
      %v1976 = vsel %vm578, %v1388, %v1602
      %v1977 = vsel %vm578, %v1389, %v1604
      %v1978 = vsel %vm578, %v1390, %v1606
      %v1979 = vsel %vm578, %v1391, %v1608
      %v1980 = vsel %vm578, %v1392, %v1610
      %v1981 = vsel %vm578, %v1393, %v1612
      %v1982 = vsel %vm578, %v1394, %v1614
      %vm1983 = vcmask 523264
      %v1984 = vsel %vm1983, %v1975, %v1632
      %v1985 = vsel %vm1983, %v1976, %v1634
      %v1986 = vsel %vm1983, %v1977, %v1636
      %v1987 = vsel %vm1983, %v1978, %v1638
      %v1988 = vsel %vm1983, %v1979, %v1640
      %v1989 = vsel %vm1983, %v1980, %v1642
      %v1990 = vsel %vm1983, %v1981, %v1644
      %v1991 = vsel %vm1983, %v1982, %v1646
      %vm1992 = vcmask 785408
      %v1993 = vsel %vm1992, %v1984, %v1664
      %v1994 = vsel %vm1992, %v1985, %v1666
      %v1995 = vsel %vm1992, %v1986, %v1668
      %v1996 = vsel %vm1992, %v1987, %v1670
      %v1997 = vsel %vm1992, %v1988, %v1672
      %v1998 = vsel %vm1992, %v1989, %v1674
      %v1999 = vsel %vm1992, %v1990, %v1676
      %v2000 = vsel %vm1992, %v1991, %v1678
      %v2001 = vsel %vm578, %v1419, %v1696
      %v2002 = vsel %vm578, %v1420, %v1698
      %v2003 = vsel %vm578, %v1421, %v1700
      %v2004 = vsel %vm578, %v1422, %v1702
      %v2005 = vsel %vm578, %v1423, %v1704
      %v2006 = vsel %vm578, %v1424, %v1706
      %v2007 = vsel %vm578, %v1425, %v1708
      %v2008 = vsel %vm578, %v1426, %v1710
      %v2009 = vsel %vm1983, %v2001, %v1728
      %v2010 = vsel %vm1983, %v2002, %v1730
      %v2011 = vsel %vm1983, %v2003, %v1732
      %v2012 = vsel %vm1983, %v2004, %v1734
      %v2013 = vsel %vm1983, %v2005, %v1736
      %v2014 = vsel %vm1983, %v2006, %v1738
      %v2015 = vsel %vm1983, %v2007, %v1740
      %v2016 = vsel %vm1983, %v2008, %v1742
      %v2017 = vsel %vm1992, %v2009, %v1760
      %v2018 = vsel %vm1992, %v2010, %v1762
      %v2019 = vsel %vm1992, %v2011, %v1764
      %v2020 = vsel %vm1992, %v2012, %v1766
      %v2021 = vsel %vm1992, %v2013, %v1768
      %v2022 = vsel %vm1992, %v2014, %v1770
      %v2023 = vsel %vm1992, %v2015, %v1772
      %v2024 = vsel %vm1992, %v2016, %v1774
      %v2025 = vsel %vm578, %v1452, %v1792
      %v2026 = vsel %vm578, %v1453, %v1794
      %v2027 = vsel %vm578, %v1454, %v1796
      %v2028 = vsel %vm578, %v1455, %v1798
      %v2029 = vsel %vm578, %v1456, %v1800
      %v2030 = vsel %vm578, %v1457, %v1802
      %v2031 = vsel %vm578, %v1458, %v1804
      %v2032 = vsel %vm578, %v1459, %v1806
      %v2033 = vsel %vm1983, %v2025, %v1824
      %v2034 = vsel %vm1983, %v2026, %v1826
      %v2035 = vsel %vm1983, %v2027, %v1828
      %v2036 = vsel %vm1983, %v2028, %v1830
      %v2037 = vsel %vm1983, %v2029, %v1832
      %v2038 = vsel %vm1983, %v2030, %v1834
      %v2039 = vsel %vm1983, %v2031, %v1836
      %v2040 = vsel %vm1983, %v2032, %v1838
      %v2041 = vsel %vm1992, %v2033, %v1856
      %v2042 = vsel %vm1992, %v2034, %v1858
      %v2043 = vsel %vm1992, %v2035, %v1860
      %v2044 = vsel %vm1992, %v2036, %v1862
      %v2045 = vsel %vm1992, %v2037, %v1864
      %v2046 = vsel %vm1992, %v2038, %v1866
      %v2047 = vsel %vm1992, %v2039, %v1868
      %v2048 = vsel %vm1992, %v2040, %v1870
      %v2049 = vsel %vm578, %v1485, %v1888
      %v2050 = vsel %vm578, %v1486, %v1890
      %v2051 = vsel %vm578, %v1487, %v1892
      %v2052 = vsel %vm578, %v1488, %v1894
      %v2053 = vsel %vm578, %v1489, %v1896
      %v2054 = vsel %vm578, %v1490, %v1898
      %v2055 = vsel %vm578, %v1491, %v1900
      %v2056 = vsel %vm578, %v1492, %v1902
      %v2057 = vsel %vm1983, %v2049, %v1920
      %v2058 = vsel %vm1983, %v2050, %v1922
      %v2059 = vsel %vm1983, %v2051, %v1924
      %v2060 = vsel %vm1983, %v2052, %v1926
      %v2061 = vsel %vm1983, %v2053, %v1928
      %v2062 = vsel %vm1983, %v2054, %v1930
      %v2063 = vsel %vm1983, %v2055, %v1932
      %v2064 = vsel %vm1983, %v2056, %v1934
      %v2065 = vsel %vm1992, %v2057, %v1952
      %v2066 = vsel %vm1992, %v2058, %v1954
      %v2067 = vsel %vm1992, %v2059, %v1956
      %v2068 = vsel %vm1992, %v2060, %v1958
      %v2069 = vsel %vm1992, %v2061, %v1960
      %v2070 = vsel %vm1992, %v2062, %v1962
      %v2071 = vsel %vm1992, %v2063, %v1964
      %v2072 = vsel %vm1992, %v2064, %v1966
      %2081 = vrot.lane.b32.xlu0 %v1526, 32
      %v2082 = vpop.permute.xlu0 %2081
      %2083 = vrot.lane.b32.xlu0 %v1527, 32
      %v2084 = vpop.permute.xlu0 %2083
      %2085 = vrot.lane.b32.xlu0 %v1528, 32
      %v2086 = vpop.permute.xlu0 %2085
      %2087 = vrot.lane.b32.xlu0 %v1529, 32
      %v2088 = vpop.permute.xlu0 %2087
      %2089 = vrot.lane.b32.xlu0 %v1530, 32
      %v2090 = vpop.permute.xlu0 %2089
      %2091 = vrot.lane.b32.xlu0 %v1531, 32
      %v2092 = vpop.permute.xlu0 %2091
      %2093 = vrot.lane.b32.xlu0 %v1532, 32
      %v2094 = vpop.permute.xlu0 %2093
      %2095 = vrot.lane.b32.xlu0 %v1533, 32
      %v2096 = vpop.permute.xlu0 %2095
      %2113 = vrot.lane.b32.xlu0 %v1534, 64
      %v2114 = vpop.permute.xlu0 %2113
      %2115 = vrot.lane.b32.xlu0 %v1535, 64
      %v2116 = vpop.permute.xlu0 %2115
      %2117 = vrot.lane.b32.xlu0 %v1536, 64
      %v2118 = vpop.permute.xlu0 %2117
      %2119 = vrot.lane.b32.xlu0 %v1537, 64
      %v2120 = vpop.permute.xlu0 %2119
      %2121 = vrot.lane.b32.xlu0 %v1538, 64
      %v2122 = vpop.permute.xlu0 %2121
      %2123 = vrot.lane.b32.xlu0 %v1539, 64
      %v2124 = vpop.permute.xlu0 %2123
      %2125 = vrot.lane.b32.xlu0 %v1540, 64
      %v2126 = vpop.permute.xlu0 %2125
      %2127 = vrot.lane.b32.xlu0 %v1541, 64
      %v2128 = vpop.permute.xlu0 %2127
      %2145 = vrot.lane.b32.xlu0 %v1542, 96
      %v2146 = vpop.permute.xlu0 %2145
      %2147 = vrot.lane.b32.xlu0 %v1543, 96
      %v2148 = vpop.permute.xlu0 %2147
      %2149 = vrot.lane.b32.xlu0 %v1544, 96
      %v2150 = vpop.permute.xlu0 %2149
      %2151 = vrot.lane.b32.xlu0 %v1545, 96
      %v2152 = vpop.permute.xlu0 %2151
      %2153 = vrot.lane.b32.xlu0 %v1546, 96
      %v2154 = vpop.permute.xlu0 %2153
      %2155 = vrot.lane.b32.xlu0 %v1547, 96
      %v2156 = vpop.permute.xlu0 %2155
      %2157 = vrot.lane.b32.xlu0 %v1548, 96
      %v2158 = vpop.permute.xlu0 %2157
      %2159 = vrot.lane.b32.xlu0 %v1549, 96
      %v2160 = vpop.permute.xlu0 %2159
      %2177 = vrot.lane.b32.xlu0 %v1559, 32
      %v2178 = vpop.permute.xlu0 %2177
      %2179 = vrot.lane.b32.xlu0 %v1560, 32
      %v2180 = vpop.permute.xlu0 %2179
      %2181 = vrot.lane.b32.xlu0 %v1561, 32
      %v2182 = vpop.permute.xlu0 %2181
      %2183 = vrot.lane.b32.xlu0 %v1562, 32
      %v2184 = vpop.permute.xlu0 %2183
      %2185 = vrot.lane.b32.xlu0 %v1563, 32
      %v2186 = vpop.permute.xlu0 %2185
      %2187 = vrot.lane.b32.xlu0 %v1564, 32
      %v2188 = vpop.permute.xlu0 %2187
      %2189 = vrot.lane.b32.xlu0 %v1565, 32
      %v2190 = vpop.permute.xlu0 %2189
      %2191 = vrot.lane.b32.xlu0 %v1566, 32
      %v2192 = vpop.permute.xlu0 %2191
      %2209 = vrot.lane.b32.xlu0 %v1567, 64
      %v2210 = vpop.permute.xlu0 %2209
      %2211 = vrot.lane.b32.xlu0 %v1568, 64
      %v2212 = vpop.permute.xlu0 %2211
      %2213 = vrot.lane.b32.xlu0 %v1569, 64
      %v2214 = vpop.permute.xlu0 %2213
      %2215 = vrot.lane.b32.xlu0 %v1570, 64
      %v2216 = vpop.permute.xlu0 %2215
      %2217 = vrot.lane.b32.xlu0 %v1571, 64
      %v2218 = vpop.permute.xlu0 %2217
      %2219 = vrot.lane.b32.xlu0 %v1572, 64
      %v2220 = vpop.permute.xlu0 %2219
      %2221 = vrot.lane.b32.xlu0 %v1573, 64
      %v2222 = vpop.permute.xlu0 %2221
      %2223 = vrot.lane.b32.xlu0 %v1574, 64
      %v2224 = vpop.permute.xlu0 %2223
      %2241 = vrot.lane.b32.xlu0 %v1575, 96
      %v2242 = vpop.permute.xlu0 %2241
      %2243 = vrot.lane.b32.xlu0 %v1576, 96
      %v2244 = vpop.permute.xlu0 %2243
      %2245 = vrot.lane.b32.xlu0 %v1577, 96
      %v2246 = vpop.permute.xlu0 %2245
      %2247 = vrot.lane.b32.xlu0 %v1578, 96
      %v2248 = vpop.permute.xlu0 %2247
      %2249 = vrot.lane.b32.xlu0 %v1579, 96
      %v2250 = vpop.permute.xlu0 %2249
      %2251 = vrot.lane.b32.xlu0 %v1580, 96
      %v2252 = vpop.permute.xlu0 %2251
      %2253 = vrot.lane.b32.xlu0 %v1581, 96
      %v2254 = vpop.permute.xlu0 %2253
      %2255 = vrot.lane.b32.xlu0 %v1582, 96
      %v2256 = vpop.permute.xlu0 %2255
      %v2265 = vsel %vm578, %v1518, %v2082
      %v2266 = vsel %vm578, %v1519, %v2084
      %v2267 = vsel %vm578, %v1520, %v2086
      %v2268 = vsel %vm578, %v1521, %v2088
      %v2269 = vsel %vm578, %v1522, %v2090
      %v2270 = vsel %vm578, %v1523, %v2092
      %v2271 = vsel %vm578, %v1524, %v2094
      %v2272 = vsel %vm578, %v1525, %v2096
      %v2273 = vsel %vm1983, %v2265, %v2114
      %v2274 = vsel %vm1983, %v2266, %v2116
      %v2275 = vsel %vm1983, %v2267, %v2118
      %v2276 = vsel %vm1983, %v2268, %v2120
      %v2277 = vsel %vm1983, %v2269, %v2122
      %v2278 = vsel %vm1983, %v2270, %v2124
      %v2279 = vsel %vm1983, %v2271, %v2126
      %v2280 = vsel %vm1983, %v2272, %v2128
      %v2281 = vsel %vm1992, %v2273, %v2146
      %v2282 = vsel %vm1992, %v2274, %v2148
      %v2283 = vsel %vm1992, %v2275, %v2150
      %v2284 = vsel %vm1992, %v2276, %v2152
      %v2285 = vsel %vm1992, %v2277, %v2154
      %v2286 = vsel %vm1992, %v2278, %v2156
      %v2287 = vsel %vm1992, %v2279, %v2158
      %v2288 = vsel %vm1992, %v2280, %v2160
      %v2289 = vsel %vm578, %v1551, %v2178
      %v2290 = vsel %vm578, %v1552, %v2180
      %v2291 = vsel %vm578, %v1553, %v2182
      %v2292 = vsel %vm578, %v1554, %v2184
      %v2293 = vsel %vm578, %v1555, %v2186
      %v2294 = vsel %vm578, %v1556, %v2188
      %v2295 = vsel %vm578, %v1557, %v2190
      %v2296 = vsel %vm578, %v1558, %v2192
      %v2297 = vsel %vm1983, %v2289, %v2210
      %v2298 = vsel %vm1983, %v2290, %v2212
      %v2299 = vsel %vm1983, %v2291, %v2214
      %v2300 = vsel %vm1983, %v2292, %v2216
      %v2301 = vsel %vm1983, %v2293, %v2218
      %v2302 = vsel %vm1983, %v2294, %v2220
      %v2303 = vsel %vm1983, %v2295, %v2222
      %v2304 = vsel %vm1983, %v2296, %v2224
      %v2305 = vsel %vm1992, %v2297, %v2242
      %v2306 = vsel %vm1992, %v2298, %v2244
      %v2307 = vsel %vm1992, %v2299, %v2246
      %v2308 = vsel %vm1992, %v2300, %v2248
      %v2309 = vsel %vm1992, %v2301, %v2250
      %v2310 = vsel %vm1992, %v2302, %v2252
      %v2311 = vsel %vm1992, %v2303, %v2254
      %v2312 = vsel %vm1992, %v2304, %v2256
      %v2313 = vpack.c.bf16 %v1994, %v1993
      %v2314 = vpack.c.bf16 %v2018, %v2017
      %v2315 = vpack.c.bf16 %v2042, %v2041
      %v2316 = vpack.c.bf16 %v2066, %v2065
      %v2317 = vpack.c.bf16 %v2282, %v2281
      %v2318 = vpack.c.bf16 %v2306, %v2305
      %v2319 = vpack.c.bf16 %v1584, %v1583
      %v2320 = vpack.c.bf16 %v1996, %v1995
      %v2321 = vpack.c.bf16 %v2020, %v2019
      %v2322 = vpack.c.bf16 %v2044, %v2043
      %v2323 = vpack.c.bf16 %v2068, %v2067
      %v2324 = vpack.c.bf16 %v2284, %v2283
      %v2325 = vpack.c.bf16 %v2308, %v2307
      %v2326 = vpack.c.bf16 %v1586, %v1585
      %v2327 = vpack.c.bf16 %v1998, %v1997
      %v2328 = vpack.c.bf16 %v2022, %v2021
      %v2329 = vpack.c.bf16 %v2046, %v2045
      %v2330 = vpack.c.bf16 %v2070, %v2069
      %v2331 = vpack.c.bf16 %v2286, %v2285
      %v2332 = vpack.c.bf16 %v2310, %v2309
      %v2333 = vpack.c.bf16 %v1588, %v1587
      %v2334 = vpack.c.bf16 %v2000, %v1999
      %v2335 = vpack.c.bf16 %v2024, %v2023
      %v2336 = vpack.c.bf16 %v2048, %v2047
      %v2337 = vpack.c.bf16 %v2072, %v2071
      %v2338 = vpack.c.bf16 %v2288, %v2287
      %v2339 = vpack.c.bf16 %v2312, %v2311
      %v2340 = vpack.c.bf16 %v1590, %v1589
      %v2341 = vld [vmem:[%s3] sm:$0xf]
      %v2342 = vld [vmem:[%s3 + $0x4] sm:$0xf]
      %v2343 = vld [vmem:[%s3 + $0x8] sm:$0xf]
      %v2344 = vld [vmem:[%s3 + $0xc] sm:$0xf]
      %v2345 = vld [vmem:[%s3 + $0x10] sm:$0xf]
      %v2346 = vld [vmem:[%s3 + $0x14] sm:$0xf]
      %v2347 = vld [vmem:[%s3 + $0x18] sm:$0xf]
      %v2348 = vld [vmem:[%s3 + $0x1c] sm:$0xf]
      %v2349 = vld [vmem:[%s3 + $0x20] sm:$0xf]
      %v2350 = vld [vmem:[%s3 + $0x24] sm:$0xf]
      %v2351 = vld [vmem:[%s3 + $0x28] sm:$0xf]
      %v2352 = vld [vmem:[%s3 + $0x2c] sm:$0xf]
      %v2353 = vld [vmem:[%s3 + $0x30] sm:$0xf]
      %v2354 = vld [vmem:[%s3 + $0x34] sm:$0xf]
      %v2355 = vld [vmem:[%s3 + $0x38] sm:$0xf]
      %v2356 = vld [vmem:[%s3 + $0x3c] sm:$0xf]
      %v2357 = vld [vmem:[%s3 + $0x40] sm:$0xf]
      %v2358 = vld [vmem:[%s3 + $0x44] sm:$0xf]
      %v2359 = vld [vmem:[%s3 + $0x48] sm:$0xf]
      %v2360 = vld [vmem:[%s3 + $0x4c] sm:$0xf]
      %v2361 = vld [vmem:[%s3 + $0x50] sm:$0xf]
      %v2362 = vld [vmem:[%s3 + $0x54] sm:$0xf]
      %v2363 = vld [vmem:[%s3 + $0x58] sm:$0xf]
      %v2364 = vld [vmem:[%s3 + $0x5c] sm:$0xf]
      %v2365 = vld [vmem:[%s3 + $0x60] sm:$0xf]
      %v2366 = vld [vmem:[%s3 + $0x64] sm:$0xf]
      %v2367 = vld [vmem:[%s3 + $0x68] sm:$0xf]
      %v2368 = vld [vmem:[%s3 + $0x6c] sm:$0xf]
      %v2369 = vld [vmem:[%s3 + $0x70] sm:$0xf]
      %v2370 = vld [vmem:[%s3 + $0x74] sm:$0xf]
      %v2371 = vld [vmem:[%s3 + $0x78] sm:$0xf]
      %v2372 = vld [vmem:[%s3 + $0x7c] sm:$0xf]
      %v2373 = vld [vmem:[%s3 + $0x80] sm:$0xf]
      %v2374 = vld [vmem:[%s3 + $0x84] sm:$0xf]
      %v2375 = vld [vmem:[%s3 + $0x88] sm:$0xf]
      %v2376 = vld [vmem:[%s3 + $0x8c] sm:$0xf]
      %v2377 = vld [vmem:[%s3 + $0x90] sm:$0xf]
      %v2378 = vld [vmem:[%s3 + $0x94] sm:$0xf]
      %v2379 = vld [vmem:[%s3 + $0x98] sm:$0xf]
      %v2380 = vld [vmem:[%s3 + $0x9c] sm:$0xf]
      %v2381 = vld [vmem:[%s3 + $0xa0] sm:$0xf]
      %v2382 = vld [vmem:[%s3 + $0xa4] sm:$0xf]
      %v2383 = vld [vmem:[%s3 + $0xa8] sm:$0xf]
      %v2384 = vld [vmem:[%s3 + $0xac] sm:$0xf]
      %v2385 = vld [vmem:[%s3 + $0xb0] sm:$0xf]
      %v2386 = vld [vmem:[%s3 + $0xb4] sm:$0xf]
      %v2387 = vld [vmem:[%s3 + $0xb8] sm:$0xf]
      %v2388 = vld [vmem:[%s3 + $0xbc] sm:$0xf]
      %v2389 = vld [vmem:[%s3 + $0xc0] sm:$0xf]
      %v2390 = vld [vmem:[%s3 + $0xc4] sm:$0xf]
      %v2391 = vld [vmem:[%s3 + $0xc8] sm:$0xf]
      %v2392 = vld [vmem:[%s3 + $0xcc] sm:$0xf]
      %v2393 = vld [vmem:[%s3 + $0xd0] sm:$0xf]
      %v2394 = vld [vmem:[%s3 + $0xd4] sm:$0xf]
      %v2395 = vld [vmem:[%s3 + $0xd8] sm:$0xf]
      %v2396 = vld [vmem:[%s3 + $0xdc] sm:$0xf]
      %v2397 = vld [vmem:[%s3 + $0xe0] sm:$0xf]
      %v2398 = vld [vmem:[%s3 + $0xe4] sm:$0xf]
      %v2399 = vld [vmem:[%s3 + $0xe8] sm:$0xf]
      %v2400 = vld [vmem:[%s3 + $0xec] sm:$0xf]
      %v2401 = vld [vmem:[%s3 + $0xf0] sm:$0xf]
      %v2402 = vld [vmem:[%s3 + $0xf4] sm:$0xf]
      %v2403 = vld [vmem:[%s3 + $0xf8] sm:$0xf]
      %v2404 = vld [vmem:[%s3 + $0xfc] sm:$0xf]
      %v2405 = vld [vmem:[%s3 + $0x100] sm:$0xf]
      %v2406 = vld [vmem:[%s3 + $0x104] sm:$0xf]
      %v2407 = vld [vmem:[%s3 + $0x108] sm:$0xf]
      %v2408 = vld [vmem:[%s3 + $0x10c] sm:$0xf]
      %v2409 = vld [vmem:[%s3 + $0x110] sm:$0xf]
      %v2410 = vld [vmem:[%s3 + $0x114] sm:$0xf]
      %v2411 = vld [vmem:[%s3 + $0x118] sm:$0xf]
      %v2412 = vld [vmem:[%s3 + $0x11c] sm:$0xf]
      %v2413 = vld [vmem:[%s3 + $0x120] sm:$0xf]
      %v2414 = vld [vmem:[%s3 + $0x124] sm:$0xf]
      %v2415 = vld [vmem:[%s3 + $0x128] sm:$0xf]
      %v2416 = vld [vmem:[%s3 + $0x12c] sm:$0xf]
      %v2417 = vld [vmem:[%s3 + $0x130] sm:$0xf]
      %v2418 = vld [vmem:[%s3 + $0x134] sm:$0xf]
      %v2419 = vld [vmem:[%s3 + $0x138] sm:$0xf]
      %v2420 = vld [vmem:[%s3 + $0x13c] sm:$0xf]
      %v2421 = vld [vmem:[%s3 + $0x140] sm:$0xf]
      %v2422 = vld [vmem:[%s3 + $0x144] sm:$0xf]
      %v2423 = vld [vmem:[%s3 + $0x148] sm:$0xf]
      %v2424 = vld [vmem:[%s3 + $0x14c] sm:$0xf]
      %v2425 = vld [vmem:[%s3 + $0x150] sm:$0xf]
      %v2426 = vld [vmem:[%s3 + $0x154] sm:$0xf]
      %v2427 = vld [vmem:[%s3 + $0x158] sm:$0xf]
      %v2428 = vld [vmem:[%s3 + $0x15c] sm:$0xf]
      %v2429 = vld [vmem:[%s3 + $0x160] sm:$0xf]
      %v2430 = vld [vmem:[%s3 + $0x164] sm:$0xf]
      %v2431 = vld [vmem:[%s3 + $0x168] sm:$0xf]
      %v2432 = vld [vmem:[%s3 + $0x16c] sm:$0xf]
      %v2433 = vld [vmem:[%s3 + $0x170] sm:$0xf]
      %v2434 = vld [vmem:[%s3 + $0x174] sm:$0xf]
      %v2435 = vld [vmem:[%s3 + $0x178] sm:$0xf]
      %v2436 = vld [vmem:[%s3 + $0x17c] sm:$0xf]
      %v2437 = vld [vmem:[%s3 + $0x180] sm:$0xf]
      %v2438 = vld [vmem:[%s3 + $0x184] sm:$0xf]
      %v2439 = vld [vmem:[%s3 + $0x188] sm:$0xf]
      %v2440 = vld [vmem:[%s3 + $0x18c] sm:$0xf]
      %v2541 = vunpack.c.l.b16 %v2341
      %v2542 = vunpack.c.l.b16 %v2342
      %v2543 = vunpack.c.l.b16 %v2343
      %v2544 = vunpack.c.l.b16 %v2344
      %v2545 = vunpack.c.l.b16 %v2345
      %v2546 = vunpack.c.l.b16 %v2346
      %v2547 = vunpack.c.l.b16 %v2347
      %v2548 = vunpack.c.l.b16 %v2348
      %v2549 = vunpack.c.l.b16 %v2349
      %v2550 = vunpack.c.l.b16 %v2350
      %v2551 = vunpack.c.l.b16 %v2351
      %v2552 = vunpack.c.l.b16 %v2352
      %v2553 = vunpack.c.l.b16 %v2353
      %v2554 = vunpack.c.l.b16 %v2354
      %v2555 = vunpack.c.l.b16 %v2355
      %v2556 = vunpack.c.l.b16 %v2356
      %v2557 = vunpack.c.l.b16 %v2357
      %v2558 = vunpack.c.l.b16 %v2358
      %v2559 = vunpack.c.l.b16 %v2359
      %v2560 = vunpack.c.l.b16 %v2360
      %v2561 = vunpack.c.l.b16 %v2361
      %v2562 = vunpack.c.l.b16 %v2362
      %v2563 = vunpack.c.l.b16 %v2363
      %v2564 = vunpack.c.l.b16 %v2364
      %v2565 = vunpack.c.l.b16 %v2365
      %v2566 = vunpack.c.l.b16 %v2366
      %v2567 = vunpack.c.l.b16 %v2367
      %v2568 = vunpack.c.l.b16 %v2368
      %v2569 = vunpack.c.l.b16 %v2369
      %v2570 = vunpack.c.l.b16 %v2370
      %v2571 = vunpack.c.l.b16 %v2371
      %v2572 = vunpack.c.l.b16 %v2372
      %v2573 = vunpack.c.l.b16 %v2373
      %v2574 = vunpack.c.l.b16 %v2374
      %v2575 = vunpack.c.l.b16 %v2375
      %v2576 = vunpack.c.l.b16 %v2376
      %v2577 = vunpack.c.l.b16 %v2377
      %v2578 = vunpack.c.l.b16 %v2378
      %v2579 = vunpack.c.l.b16 %v2379
      %v2580 = vunpack.c.l.b16 %v2380
      %v2581 = vunpack.c.l.b16 %v2381
      %v2582 = vunpack.c.l.b16 %v2382
      %v2583 = vunpack.c.l.b16 %v2383
      %v2584 = vunpack.c.l.b16 %v2384
      %v2585 = vunpack.c.l.b16 %v2385
      %v2586 = vunpack.c.l.b16 %v2386
      %v2587 = vunpack.c.l.b16 %v2387
      %v2588 = vunpack.c.l.b16 %v2388
      %v2589 = vunpack.c.l.b16 %v2389
      %v2590 = vunpack.c.l.b16 %v2390
      %v2591 = vunpack.c.l.b16 %v2391
      %v2592 = vunpack.c.l.b16 %v2392
      %v2593 = vunpack.c.l.b16 %v2393
      %v2594 = vunpack.c.l.b16 %v2394
      %v2595 = vunpack.c.l.b16 %v2395
      %v2596 = vunpack.c.l.b16 %v2396
      %v2597 = vunpack.c.l.b16 %v2397
      %v2598 = vunpack.c.l.b16 %v2398
      %v2599 = vunpack.c.l.b16 %v2399
      %v2600 = vunpack.c.l.b16 %v2400
      %v2601 = vunpack.c.l.b16 %v2401
      %v2602 = vunpack.c.l.b16 %v2402
      %v2603 = vunpack.c.l.b16 %v2403
      %v2604 = vunpack.c.l.b16 %v2404
      %v2605 = vunpack.c.l.b16 %v2405
      %v2606 = vunpack.c.l.b16 %v2406
      %v2607 = vunpack.c.l.b16 %v2407
      %v2608 = vunpack.c.l.b16 %v2408
      %v2609 = vunpack.c.l.b16 %v2409
      %v2610 = vunpack.c.l.b16 %v2410
      %v2611 = vunpack.c.l.b16 %v2411
      %v2612 = vunpack.c.l.b16 %v2412
      %v2613 = vunpack.c.l.b16 %v2413
      %v2614 = vunpack.c.l.b16 %v2414
      %v2615 = vunpack.c.l.b16 %v2415
      %v2616 = vunpack.c.l.b16 %v2416
      %v2617 = vunpack.c.l.b16 %v2417
      %v2618 = vunpack.c.l.b16 %v2418
      %v2619 = vunpack.c.l.b16 %v2419
      %v2620 = vunpack.c.l.b16 %v2420
      %v2621 = vunpack.c.l.b16 %v2421
      %v2622 = vunpack.c.l.b16 %v2422
      %v2623 = vunpack.c.l.b16 %v2423
      %v2624 = vunpack.c.l.b16 %v2424
      %v2625 = vunpack.c.l.b16 %v2425
      %v2626 = vunpack.c.l.b16 %v2426
      %v2627 = vunpack.c.l.b16 %v2427
      %v2628 = vunpack.c.l.b16 %v2428
      %v2629 = vunpack.c.l.b16 %v2429
      %v2630 = vunpack.c.l.b16 %v2430
      %v2631 = vunpack.c.l.b16 %v2431
      %v2632 = vunpack.c.l.b16 %v2432
      %v2633 = vunpack.c.l.b16 %v2433
      %v2634 = vunpack.c.l.b16 %v2434
      %v2635 = vunpack.c.l.b16 %v2435
      %v2636 = vunpack.c.l.b16 %v2436
      %v2637 = vunpack.c.l.b16 %v2437
      %v2638 = vunpack.c.l.b16 %v2438
      %v2639 = vunpack.c.l.b16 %v2439
      %v2640 = vunpack.c.l.b16 %v2440
      %v2641 = vpack.c.b16 %v2542, %v2541
      %v2642 = vpack.c.b16 %v2544, %v2543
      %v2643 = vpack.c.b16 %v2546, %v2545
      %v2644 = vpack.c.b16 %v2548, %v2547
      %v2645 = vpack.c.b16 %v2550, %v2549
      %v2646 = vpack.c.b16 %v2552, %v2551
      %v2647 = vpack.c.b16 %v2554, %v2553
      %v2648 = vpack.c.b16 %v2556, %v2555
      %v2649 = vpack.c.b16 %v2558, %v2557
      %v2650 = vpack.c.b16 %v2560, %v2559
      %v2651 = vpack.c.b16 %v2562, %v2561
      %v2652 = vpack.c.b16 %v2564, %v2563
      %v2653 = vpack.c.b16 %v2566, %v2565
      %v2654 = vpack.c.b16 %v2568, %v2567
      %v2655 = vpack.c.b16 %v2570, %v2569
      %v2656 = vpack.c.b16 %v2572, %v2571
      %v2657 = vpack.c.b16 %v2574, %v2573
      %v2658 = vpack.c.b16 %v2576, %v2575
      %v2659 = vpack.c.b16 %v2578, %v2577
      %v2660 = vpack.c.b16 %v2580, %v2579
      %v2661 = vpack.c.b16 %v2582, %v2581
      %v2662 = vpack.c.b16 %v2584, %v2583
      %v2663 = vpack.c.b16 %v2586, %v2585
      %v2664 = vpack.c.b16 %v2588, %v2587
      %v2665 = vpack.c.b16 %v2590, %v2589
      %v2666 = vpack.c.b16 %v2592, %v2591
      %v2667 = vpack.c.b16 %v2594, %v2593
      %v2668 = vpack.c.b16 %v2596, %v2595
      %v2669 = vpack.c.b16 %v2598, %v2597
      %v2670 = vpack.c.b16 %v2600, %v2599
      %v2671 = vpack.c.b16 %v2602, %v2601
      %v2672 = vpack.c.b16 %v2604, %v2603
      %v2673 = vpack.c.b16 %v2606, %v2605
      %v2674 = vpack.c.b16 %v2608, %v2607
      %v2675 = vpack.c.b16 %v2610, %v2609
      %v2676 = vpack.c.b16 %v2612, %v2611
      %v2677 = vpack.c.b16 %v2614, %v2613
      %v2678 = vpack.c.b16 %v2616, %v2615
      %v2679 = vpack.c.b16 %v2618, %v2617
      %v2680 = vpack.c.b16 %v2620, %v2619
      %v2681 = vpack.c.b16 %v2622, %v2621
      %v2682 = vpack.c.b16 %v2624, %v2623
      %v2683 = vpack.c.b16 %v2626, %v2625
      %v2684 = vpack.c.b16 %v2628, %v2627
      %v2685 = vpack.c.b16 %v2630, %v2629
      %v2686 = vpack.c.b16 %v2632, %v2631
      %v2687 = vpack.c.b16 %v2634, %v2633
      %v2688 = vpack.c.b16 %v2636, %v2635
      %v2689 = vpack.c.b16 %v2638, %v2637
      %v2690 = vpack.c.b16 %v2640, %v2639
      %v2742 = vsel %vm578, %v2319, 0
      %v2745 = vsel %vm578, %v2326, 0
      %v2748 = vsel %vm578, %v2333, 0
      %v2751 = vsel %vm578, %v2340, 0
      %2753 = vmatprep.subr.bf16.mxu0 0
      %2754 = vmatpush1.bf16.msra.mxu0 %v2648
      %2755 = vmatprep.subr.bf16.mxu0 0
      %2756 = vmatpush1.bf16.msra.mxu0 %v2647
      %2757 = vmatprep.subr.bf16.mxu0 0
      %2758 = vmatpush1.bf16.msra.mxu0 %v2646
      %2759 = vmatprep.subr.bf16.mxu0 0
      %2760 = vmatpush1.bf16.msra.mxu0 %v2645
      %2761 = vmatprep.subr.bf16.mxu0 0
      %2762 = vmatpush1.bf16.msra.mxu0 %v2644
      %2763 = vmatprep.subr.bf16.mxu0 0
      %2764 = vmatpush1.bf16.msra.mxu0 %v2643
      %2765 = vmatprep.subr.bf16.mxu0 0
      %2766 = vmatpush1.bf16.msra.mxu0 %v2642
      %2767 = vmatprep.subr.bf16.mxu0 0
      %2768 = vmatpush1.bf16.msra.mxu0 %v2641
      %2769 = vmatprep.subr.bf16.mxu0 0
      %2770 = vmatpush2.bf16.msra.mxu0 %v2656
      %2771 = vmatprep.subr.bf16.mxu0 0
      %2772 = vmatpush2.bf16.msra.mxu0 %v2655
      %2773 = vmatprep.subr.bf16.mxu0 0
      %2774 = vmatpush2.bf16.msra.mxu0 %v2654
      %2775 = vmatprep.subr.bf16.mxu0 0
      %2776 = vmatpush2.bf16.msra.mxu0 %v2653
      %2777 = vmatprep.subr.bf16.mxu0 0
      %2778 = vmatpush2.bf16.msra.mxu0 %v2652
      %2779 = vmatprep.subr.bf16.mxu0 0
      %2780 = vmatpush2.bf16.msra.mxu0 %v2651
      %2781 = vmatprep.subr.bf16.mxu0 0
      %2782 = vmatpush2.bf16.msra.mxu0 %v2650
      %2783 = vmatprep.subr.bf16.mxu0 0
      %2784 = vmatpush2.bf16.msra.mxu0 %v2649
      %2785 = vmatprep.mubr.bf16.mxu0 %v2314
      %2786 = vmatmul.mubr.bf16.gmra.mxu0 %v2313
      %v2787 = vpop.f32.mrf.mxu0
      %v2788 = vadd.f32 0.0, %v2787
      %v2789 = vpop.f32.mrf.mxu0
      %v2790 = vpop.f32.mrf.mxu0
      %v2791 = vadd.f32 0.0, %v2790
      %v2792 = vpop.f32.mrf.mxu0
      %2793 = vmatprep.mubr.bf16.mxu0 %v2321
      %2794 = vmatmul.mubr.bf16.gmra.mxu0 %v2320
      %v2795 = vpop.f32.mrf.mxu0
      %v2796 = vadd.f32 0.0, %v2795
      %v2797 = vpop.f32.mrf.mxu0
      %v2798 = vpop.f32.mrf.mxu0
      %v2799 = vadd.f32 0.0, %v2798
      %v2800 = vpop.f32.mrf.mxu0
      %2801 = vmatprep.mubr.bf16.mxu0 %v2328
      %2802 = vmatmul.mubr.bf16.gmra.mxu0 %v2327
      %v2803 = vpop.f32.mrf.mxu0
      %v2804 = vadd.f32 0.0, %v2803
      %v2805 = vpop.f32.mrf.mxu0
      %v2806 = vpop.f32.mrf.mxu0
      %v2807 = vadd.f32 0.0, %v2806
      %v2808 = vpop.f32.mrf.mxu0
      %2809 = vmatprep.mubr.bf16.mxu0 %v2335
      %2810 = vmatmul.mubr.bf16.gmra.mxu0 %v2334
      %v2811 = vpop.f32.mrf.mxu0
      %v2812 = vadd.f32 0.0, %v2811
      %v2813 = vpop.f32.mrf.mxu0
      %v2814 = vpop.f32.mrf.mxu0
      %v2815 = vadd.f32 0.0, %v2814
      %v2816 = vpop.f32.mrf.mxu0
      %2817 = vdwg.mxu0
      %2818 = vmatprep.subr.bf16.mxu0 0
      %2819 = vmatpush1.bf16.msra.mxu0 %v2664
      %2820 = vmatprep.subr.bf16.mxu0 0
      %2821 = vmatpush1.bf16.msra.mxu0 %v2663
      %2822 = vmatprep.subr.bf16.mxu0 0
      %2823 = vmatpush1.bf16.msra.mxu0 %v2662
      %2824 = vmatprep.subr.bf16.mxu0 0
      %2825 = vmatpush1.bf16.msra.mxu0 %v2661
      %2826 = vmatprep.subr.bf16.mxu0 0
      %2827 = vmatpush1.bf16.msra.mxu0 %v2660
      %2828 = vmatprep.subr.bf16.mxu0 0
      %2829 = vmatpush1.bf16.msra.mxu0 %v2659
      %2830 = vmatprep.subr.bf16.mxu0 0
      %2831 = vmatpush1.bf16.msra.mxu0 %v2658
      %2832 = vmatprep.subr.bf16.mxu0 0
      %2833 = vmatpush1.bf16.msra.mxu0 %v2657
      %2834 = vmatprep.subr.bf16.mxu0 0
      %2835 = vmatpush2.bf16.msra.mxu0 %v2672
      %2836 = vmatprep.subr.bf16.mxu0 0
      %2837 = vmatpush2.bf16.msra.mxu0 %v2671
      %2838 = vmatprep.subr.bf16.mxu0 0
      %2839 = vmatpush2.bf16.msra.mxu0 %v2670
      %2840 = vmatprep.subr.bf16.mxu0 0
      %2841 = vmatpush2.bf16.msra.mxu0 %v2669
      %2842 = vmatprep.subr.bf16.mxu0 0
      %2843 = vmatpush2.bf16.msra.mxu0 %v2668
      %2844 = vmatprep.subr.bf16.mxu0 0
      %2845 = vmatpush2.bf16.msra.mxu0 %v2667
      %2846 = vmatprep.subr.bf16.mxu0 0
      %2847 = vmatpush2.bf16.msra.mxu0 %v2666
      %2848 = vmatprep.subr.bf16.mxu0 0
      %2849 = vmatpush2.bf16.msra.mxu0 %v2665
      %2850 = vmatprep.mubr.bf16.mxu0 %v2316
      %2851 = vmatmul.mubr.bf16.gmra.mxu0 %v2315
      %v2852 = vpop.f32.mrf.mxu0
      %v2853 = vadd.f32 %v2788, %v2852
      %v2854 = vpop.f32.mrf.mxu0
      %v2855 = vpop.f32.mrf.mxu0
      %v2856 = vadd.f32 %v2791, %v2855
      %v2857 = vpop.f32.mrf.mxu0
      %2858 = vmatprep.mubr.bf16.mxu0 %v2323
      %2859 = vmatmul.mubr.bf16.gmra.mxu0 %v2322
      %v2860 = vpop.f32.mrf.mxu0
      %v2861 = vadd.f32 %v2796, %v2860
      %v2862 = vpop.f32.mrf.mxu0
      %v2863 = vpop.f32.mrf.mxu0
      %v2864 = vadd.f32 %v2799, %v2863
      %v2865 = vpop.f32.mrf.mxu0
      %2866 = vmatprep.mubr.bf16.mxu0 %v2330
      %2867 = vmatmul.mubr.bf16.gmra.mxu0 %v2329
      %v2868 = vpop.f32.mrf.mxu0
      %v2869 = vadd.f32 %v2804, %v2868
      %v2870 = vpop.f32.mrf.mxu0
      %v2871 = vpop.f32.mrf.mxu0
      %v2872 = vadd.f32 %v2807, %v2871
      %v2873 = vpop.f32.mrf.mxu0
      %2874 = vmatprep.mubr.bf16.mxu0 %v2337
      %2875 = vmatmul.mubr.bf16.gmra.mxu0 %v2336
      %v2876 = vpop.f32.mrf.mxu0
      %v2877 = vadd.f32 %v2812, %v2876
      %v2878 = vpop.f32.mrf.mxu0
      %v2879 = vpop.f32.mrf.mxu0
      %v2880 = vadd.f32 %v2815, %v2879
      %v2881 = vpop.f32.mrf.mxu0
      %2882 = vdwg.mxu0
      %2883 = vmatprep.subr.bf16.mxu0 0
      %2884 = vmatpush1.bf16.msra.mxu0 %v2680
      %2885 = vmatprep.subr.bf16.mxu0 0
      %2886 = vmatpush1.bf16.msra.mxu0 %v2679
      %2887 = vmatprep.subr.bf16.mxu0 0
      %2888 = vmatpush1.bf16.msra.mxu0 %v2678
      %2889 = vmatprep.subr.bf16.mxu0 0
      %2890 = vmatpush1.bf16.msra.mxu0 %v2677
      %2891 = vmatprep.subr.bf16.mxu0 0
      %2892 = vmatpush1.bf16.msra.mxu0 %v2676
      %2893 = vmatprep.subr.bf16.mxu0 0
      %2894 = vmatpush1.bf16.msra.mxu0 %v2675
      %2895 = vmatprep.subr.bf16.mxu0 0
      %2896 = vmatpush1.bf16.msra.mxu0 %v2674
      %2897 = vmatprep.subr.bf16.mxu0 0
      %2898 = vmatpush1.bf16.msra.mxu0 %v2673
      %2899 = vmatprep.subr.bf16.mxu0 0
      %2900 = vmatpush2.bf16.msra.mxu0 %v2688
      %2901 = vmatprep.subr.bf16.mxu0 0
      %2902 = vmatpush2.bf16.msra.mxu0 %v2687
      %2903 = vmatprep.subr.bf16.mxu0 0
      %2904 = vmatpush2.bf16.msra.mxu0 %v2686
      %2905 = vmatprep.subr.bf16.mxu0 0
      %2906 = vmatpush2.bf16.msra.mxu0 %v2685
      %2907 = vmatprep.subr.bf16.mxu0 0
      %2908 = vmatpush2.bf16.msra.mxu0 %v2684
      %2909 = vmatprep.subr.bf16.mxu0 0
      %2910 = vmatpush2.bf16.msra.mxu0 %v2683
      %2911 = vmatprep.subr.bf16.mxu0 0
      %2912 = vmatpush2.bf16.msra.mxu0 %v2682
      %2913 = vmatprep.subr.bf16.mxu0 0
      %2914 = vmatpush2.bf16.msra.mxu0 %v2681
      %2915 = vmatprep.mubr.bf16.mxu0 %v2318
      %2916 = vmatmul.mubr.bf16.gmra.mxu0 %v2317
      %v2917 = vpop.f32.mrf.mxu0
      %v2918 = vadd.f32 %v2853, %v2917
      %v2919 = vpop.f32.mrf.mxu0
      %v2920 = vpop.f32.mrf.mxu0
      %v2921 = vadd.f32 %v2856, %v2920
      %v2922 = vpop.f32.mrf.mxu0
      %2923 = vmatprep.mubr.bf16.mxu0 %v2325
      %2924 = vmatmul.mubr.bf16.gmra.mxu0 %v2324
      %v2925 = vpop.f32.mrf.mxu0
      %v2926 = vadd.f32 %v2861, %v2925
      %v2927 = vpop.f32.mrf.mxu0
      %v2928 = vpop.f32.mrf.mxu0
      %v2929 = vadd.f32 %v2864, %v2928
      %v2930 = vpop.f32.mrf.mxu0
      %2931 = vmatprep.mubr.bf16.mxu0 %v2332
      %2932 = vmatmul.mubr.bf16.gmra.mxu0 %v2331
      %v2933 = vpop.f32.mrf.mxu0
      %v2934 = vadd.f32 %v2869, %v2933
      %v2935 = vpop.f32.mrf.mxu0
      %v2936 = vpop.f32.mrf.mxu0
      %v2937 = vadd.f32 %v2872, %v2936
      %v2938 = vpop.f32.mrf.mxu0
      %2939 = vmatprep.mubr.bf16.mxu0 %v2339
      %2940 = vmatmul.mubr.bf16.gmra.mxu0 %v2338
      %v2941 = vpop.f32.mrf.mxu0
      %v2942 = vadd.f32 %v2877, %v2941
      %v2943 = vpop.f32.mrf.mxu0
      %v2944 = vpop.f32.mrf.mxu0
      %v2945 = vadd.f32 %v2880, %v2944
      %v2946 = vpop.f32.mrf.mxu0
      %2947 = vdwg.mxu0
      %2948 = vmatprep.subr.bf16.mxu0 0
      %2949 = vmatpush1.bf16.msra.mxu0 0
      %2950 = vmatprep.subr.bf16.mxu0 0
      %2951 = vmatpush1.bf16.msra.mxu0 0
      %2952 = vmatprep.subr.bf16.mxu0 0
      %2953 = vmatpush1.bf16.msra.mxu0 0
      %2954 = vmatprep.subr.bf16.mxu0 0
      %2955 = vmatpush1.bf16.msra.mxu0 0
      %2956 = vmatprep.subr.bf16.mxu0 0
      %2957 = vmatpush1.bf16.msra.mxu0 0
      %2958 = vmatprep.subr.bf16.mxu0 0
      %2959 = vmatpush1.bf16.msra.mxu0 0
      %2960 = vmatprep.subr.bf16.mxu0 0
      %2961 = vmatpush1.bf16.msra.mxu0 %v2690
      %2962 = vmatprep.subr.bf16.mxu0 0
      %2963 = vmatpush1.bf16.msra.mxu0 %v2689
      %2964 = vmatprep.subr.bf16.mxu0 0
      %2965 = vmatpush2.bf16.msra.mxu0 0
      %2966 = vmatprep.subr.bf16.mxu0 0
      %2967 = vmatpush2.bf16.msra.mxu0 0
      %2968 = vmatprep.subr.bf16.mxu0 0
      %2969 = vmatpush2.bf16.msra.mxu0 0
      %2970 = vmatprep.subr.bf16.mxu0 0
      %2971 = vmatpush2.bf16.msra.mxu0 0
      %2972 = vmatprep.subr.bf16.mxu0 0
      %2973 = vmatpush2.bf16.msra.mxu0 0
      %2974 = vmatprep.subr.bf16.mxu0 0
      %2975 = vmatpush2.bf16.msra.mxu0 0
      %2976 = vmatprep.subr.bf16.mxu0 0
      %2977 = vmatpush2.bf16.msra.mxu0 0
      %2978 = vmatprep.subr.bf16.mxu0 0
      %2979 = vmatpush2.bf16.msra.mxu0 0
      %2980 = vmatprep.mubr.bf16.mxu0 0
      %2981 = vmatmul.mubr.bf16.gmra.mxu0 %v2742
      %v2982 = vpop.f32.mrf.mxu0
      %v2983 = vadd.f32 %v2918, %v2982
      %v2984 = vpop.f32.mrf.mxu0
      %v2985 = vpop.f32.mrf.mxu0
      %v2986 = vadd.f32 %v2921, %v2985
      %v2987 = vpop.f32.mrf.mxu0
      %2988 = vmatprep.mubr.bf16.mxu0 0
      %2989 = vmatmul.mubr.bf16.gmra.mxu0 %v2745
      %v2990 = vpop.f32.mrf.mxu0
      %v2991 = vadd.f32 %v2926, %v2990
      %v2992 = vpop.f32.mrf.mxu0
      %v2993 = vpop.f32.mrf.mxu0
      %v2994 = vadd.f32 %v2929, %v2993
      %v2995 = vpop.f32.mrf.mxu0
      %2996 = vmatprep.mubr.bf16.mxu0 0
      %2997 = vmatmul.mubr.bf16.gmra.mxu0 %v2748
      %v2998 = vpop.f32.mrf.mxu0
      %v2999 = vadd.f32 %v2934, %v2998
      %v3000 = vpop.f32.mrf.mxu0
      %v3001 = vpop.f32.mrf.mxu0
      %v3002 = vadd.f32 %v2937, %v3001
      %v3003 = vpop.f32.mrf.mxu0
      %3004 = vmatprep.mubr.bf16.mxu0 0
      %3005 = vmatmul.mubr.bf16.gmra.mxu0 %v2751
      %v3006 = vpop.f32.mrf.mxu0
      %v3007 = vadd.f32 %v2942, %v3006
      %v3008 = vpop.f32.mrf.mxu0
      %v3009 = vpop.f32.mrf.mxu0
      %v3010 = vadd.f32 %v2945, %v3009
      %v3011 = vpop.f32.mrf.mxu0
      %3012 = vdwg.mxu0
      %v3013 = vsel %vm1983, %v2983, -inf
      %v3014 = vsel %vm1983, %v2986, -inf
      %v3015 = vmax.f32 %v3013, %v3014
      %v3016 = vsel %vm1983, %v2991, -inf
      %v3017 = vsel %vm1983, %v2994, -inf
      %v3018 = vmax.f32 %v3016, %v3017
      %v3019 = vsel %vm1983, %v2999, -inf
      %v3020 = vsel %vm1983, %v3002, -inf
      %v3021 = vmax.f32 %v3019, %v3020
      %v3022 = vsel %vm1983, %v3007, -inf
      %v3023 = vsel %vm1983, %v3010, -inf
      %v3024 = vmax.f32 %v3022, %v3023
      %v3029 = vrot.slane %v3015, 1
      %v3030 = vrot.slane %v3018, 1
      %v3031 = vrot.slane %v3021, 1
      %v3032 = vrot.slane %v3024, 1
      %v3037 = vmax.f32 %v3015, %v3029
      %v3038 = vmax.f32 %v3018, %v3030
      %v3039 = vmax.f32 %v3021, %v3031
      %v3040 = vmax.f32 %v3024, %v3032
      %v3041 = vld [vmem:[%s4] sm:$0x1]
      %v3043 = vlaneseq
      %v3044 = vshrl.u32 %v3043, 7
      %v3045 = vsub.s32 0, %v3044
      %v3046 = vrot.slane %v3041, %v3045
      %v3048 = vadd.f32 %v3037, %v3046
      %v3049 = vadd.f32 %v3038, %v3046
      %v3050 = vadd.f32 %v3039, %v3046
      %v3051 = vadd.f32 %v3040, %v3046
      %v3052 = vmax.f32 %v3048, 0.0
      %v3053 = vmax.f32 %v3049, 0.0
      %v3054 = vmax.f32 %v3050, 0.0
      %v3055 = vmax.f32 %v3051, 0.0
      %v3056 = vpack.c.bf16 %v3052, %v3052
      %v3057 = vpack.c.bf16 %v3053, %v3053
      %v3058 = vpack.c.bf16 %v3054, %v3054
      %v3059 = vpack.c.bf16 %v3055, %v3055
      %vm3060 = vcmask 519168
      %vm3061 = vsmask.f32 3328
      %vm3062 = vmand %vm3060, %vm3061
      %v3063 = vld [vmem:[%s224] sm:$0xf]
      %v3064 = vsel %vm3062, %v3056, %v3063
      %3065 = vst [vmem:[%s224] sm:$0xf] %v3064
      %v3066 = vld [vmem:[%s224 + $0x4] sm:$0xf]
      %v3067 = vsel %vm3062, %v3057, %v3066
      %3068 = vst [vmem:[%s224 + $0x4] sm:$0xf] %v3067
      %v3069 = vld [vmem:[%s224 + $0x8] sm:$0xf]
      %v3070 = vsel %vm3062, %v3058, %v3069
      %3071 = vst [vmem:[%s224 + $0x8] sm:$0xf] %v3070
      %v3072 = vld [vmem:[%s224 + $0xc] sm:$0xf]
      %v3073 = vsel %vm3062, %v3059, %v3072
      %3074 = vst [vmem:[%s224 + $0xc] sm:$0xf] %v3073
      %p3075 = scmp.lt.s32.totalorder %s16, 1
      %s3076 = scalar_select %p3075, %s16, 1
      %s3077 = smul.addr %s3076, 4
      %s3078 = smul.addr %s3077, 4
      %s3079 = scalar_lea.vmem %s5, %s3078
      // Predicated region
      $region41: #{net_forward.2} parent=39 // pred_check
        %p3080 = pneg %p144
      $region42: #{net_forward.2} parent=39 // pred_check_branch
        %3082 = sbr.rel (%p3080) target = $region44
      $region43: #{net_forward.2} parent=39 // pred_region
        _
      $region44: #{net_forward.2} parent=39 // pred_fallthru
        _
    $region40: #{net_forward.2} parent=5 // pred_fallthru
      _
    %p3083 = scmp.le.s32.totalorder 2, %s11
    // Predicated region
    $region45: #{net_forward.2} parent=5 // pred_check
      %p3084 = pneg %p3083
    $region46: #{net_forward.2} parent=5 // pred_check_branch
      %3086 = sbr.rel (%p3084) target = $region48
    $region47: #{net_forward.2} parent=5 // pred_region
      %s3087 = ssub.s32 %s11, 2
      // Predicated region
      $region49: #{net_forward.2} parent=47 // pred_check
        %p3088 = pneg %p150
      $region50: #{net_forward.2} parent=47 // pred_check_branch
        %3090 = sbr.rel (%p3088) target = $region52
      $region51: #{net_forward.2} parent=47 // pred_region
        %p3091 = scmp.lt.s32.totalorder %s17, 1
        %s3092 = scalar_select %p3091, %s17, 1
        %s3093 = smul.addr %s3092, 4
        %s3094 = smul.addr %s3093, 4
        %s3095 = scalar_lea.vmem %s5, %s3094
      $region52: #{net_forward.2} parent=47 // pred_fallthru
        _
    $region48: #{net_forward.2} parent=5 // pred_fallthru
      _
  $region6: #{net_forward.2} parent=0 // loop_footer
    %s15 = sadd.s32 1, %s11
  $region7: #{net_forward.2} parent=0 // loop_footer_branch
    %10 = sbr.rel target = $region3
  $region8: #{net_forward.2} parent=0 // loop_exit
    _

// kernel: net_forward.3
$region0: #{net_forward.3}
  #allocation0 [shape = 'u32[]', space=smem, size = 0x4, offset = 0x4, fixed_abs, tag = 'smem constant byte address 0x4 - core index']
  #allocation1 [shape = 'u32[144,128]{1,0:T(1,128)}', space=vmem, size = 0x12000, scoped, tag = 'internal scratch']
  %s0 = inlined_call_operand.vmem [shape: bf16[2,1792], index: 0, kind: input, shape index: {}]
  %s1 = inlined_call_operand.vmem [shape: bf16[1792,512], index: 1, kind: input, shape index: {}]
  %s2 = inlined_call_operand.vmem [shape: f32[1,512], index: 2, kind: input, shape index: {}]
  %s3 = inlined_call_operand.vmem [shape: bf16[512,128], index: 3, kind: input, shape index: {}]
  %s4 = inlined_call_operand.vmem [shape: f32[1,128], index: 4, kind: input, shape index: {}]
  %s5 = inlined_call_operand.hbm [shape: f32[2,128], index: 5, kind: output, shape index: {}]
  %s6 = sld [smem:[#allocation0]]
  $region30: #{net_forward.3} parent=0
    _
  %s8 = ssub.s32 1, %s6
  %s9 = scalar_select 0, %s8, %s6
  $region1: #{net_forward.3} parent=0
    #allocation2 [shape = 'u8[1024]{0}', space=vmem, size = 0x400, scoped, tag = 'output window, operand 0, single buffered']
    #allocation3 [shape = 's32[1]{0}', space=sflag, size = 0x4, scoped, tag = 'scoped memory for net_forward.3']
    %10 = vsyncpa [#allocation3], 0
    // Predicated region
    $region2: #{net_forward.3} parent=1 // pred_check
      _
    $region3: #{net_forward.3} parent=1 // pred_check_branch
      %12 = sbr.rel (0) target = $region5
    $region4: #{net_forward.3} parent=1 // pred_region
      _
    $region5: #{net_forward.3} parent=1 // pred_fallthru
      _
    // Predicated region
    $region6: #{net_forward.3} parent=1 // pred_check
      _
    $region7: #{net_forward.3} parent=1 // pred_check_branch
      %14 = sbr.rel (0) target = $region9
    $region8: #{net_forward.3} parent=1 // pred_region
      _
    $region9: #{net_forward.3} parent=1 // pred_fallthru
      _
    // Predicated region
    $region10: #{net_forward.3} parent=1 // pred_check
      _
    $region11: #{net_forward.3} parent=1 // pred_check_branch
      %16 = sbr.rel (0) target = $region13
    $region12: #{net_forward.3} parent=1 // pred_region
      _
    $region13: #{net_forward.3} parent=1 // pred_fallthru
      _
    // Predicated region
    $region14: #{net_forward.3} parent=1 // pred_check
      _
    $region15: #{net_forward.3} parent=1 // pred_check_branch
      %18 = sbr.rel (0) target = $region17
    $region16: #{net_forward.3} parent=1 // pred_region
      _
    $region17: #{net_forward.3} parent=1 // pred_fallthru
      _
    // Predicated region
    $region18: #{net_forward.3} parent=1 // pred_check
      _
    $region19: #{net_forward.3} parent=1 // pred_check_branch
      %20 = sbr.rel (0) target = $region21
    $region20: #{net_forward.3} parent=1 // pred_region
      _
    $region21: #{net_forward.3} parent=1 // pred_fallthru
      _
    %v22 = vld [vmem:[%s0] sm:$0xff]
    %v23 = vld [vmem:[%s0 + $0x8] sm:$0x3f]
    %v24 = vld [vmem:[%s1] sm:$0xff]
    %v25 = vld [vmem:[%s1 + $0x8] sm:$0xff]
    %v26 = vld [vmem:[%s1 + $0x10] sm:$0xff]
    %v27 = vld [vmem:[%s1 + $0x18] sm:$0xff]
    %v28 = vld [vmem:[%s1 + $0x20] sm:$0xff]
    %v29 = vld [vmem:[%s1 + $0x28] sm:$0xff]
    %v30 = vld [vmem:[%s1 + $0x30] sm:$0xff]
    %v31 = vld [vmem:[%s1 + $0x38] sm:$0xff]
    %v32 = vld [vmem:[%s1 + $0x40] sm:$0xff]
    %v33 = vld [vmem:[%s1 + $0x48] sm:$0xff]
    %v34 = vld [vmem:[%s1 + $0x50] sm:$0xff]
    %v35 = vld [vmem:[%s1 + $0x58] sm:$0xff]
    %v36 = vld [vmem:[%s1 + $0x60] sm:$0xff]
    %v37 = vld [vmem:[%s1 + $0x68] sm:$0xff]
    %v38 = vld [vmem:[%s1 + $0x70] sm:$0xff]
    %v39 = vld [vmem:[%s1 + $0x78] sm:$0xff]
    %v40 = vld [vmem:[%s1 + $0x80] sm:$0xff]
    %v41 = vld [vmem:[%s1 + $0x88] sm:$0xff]
    %v42 = vld [vmem:[%s1 + $0x90] sm:$0xff]
    %v43 = vld [vmem:[%s1 + $0x98] sm:$0xff]
    %v44 = vld [vmem:[%s1 + $0xa0] sm:$0xff]
    %v45 = vld [vmem:[%s1 + $0xa8] sm:$0xff]
    %v46 = vld [vmem:[%s1 + $0xb0] sm:$0xff]
    %v47 = vld [vmem:[%s1 + $0xb8] sm:$0xff]
    %v48 = vld [vmem:[%s1 + $0xc0] sm:$0xff]
    %v49 = vld [vmem:[%s1 + $0xc8] sm:$0xff]
    %v50 = vld [vmem:[%s1 + $0xd0] sm:$0xff]
    %v51 = vld [vmem:[%s1 + $0xd8] sm:$0xff]
    %v52 = vld [vmem:[%s1 + $0xe0] sm:$0xff]
    %v53 = vld [vmem:[%s1 + $0xe8] sm:$0xff]
    %v54 = vld [vmem:[%s1 + $0xf0] sm:$0xff]
    %v55 = vld [vmem:[%s1 + $0xf8] sm:$0xff]
    %v56 = vld [vmem:[%s1 + $0x100] sm:$0xff]
    %v57 = vld [vmem:[%s1 + $0x108] sm:$0xff]
    %v58 = vld [vmem:[%s1 + $0x110] sm:$0xff]
    %v59 = vld [vmem:[%s1 + $0x118] sm:$0xff]
    %v60 = vld [vmem:[%s1 + $0x120] sm:$0xff]
    %v61 = vld [vmem:[%s1 + $0x128] sm:$0xff]
    %v62 = vld [vmem:[%s1 + $0x130] sm:$0xff]
    %v63 = vld [vmem:[%s1 + $0x138] sm:$0xff]
    %v64 = vld [vmem:[%s1 + $0x140] sm:$0xff]
    %v65 = vld [vmem:[%s1 + $0x148] sm:$0xff]
    %v66 = vld [vmem:[%s1 + $0x150] sm:$0xff]
    %v67 = vld [vmem:[%s1 + $0x158] sm:$0xff]
    %v68 = vld [vmem:[%s1 + $0x160] sm:$0xff]
    %v69 = vld [vmem:[%s1 + $0x168] sm:$0xff]
    %v70 = vld [vmem:[%s1 + $0x170] sm:$0xff]
    %v71 = vld [vmem:[%s1 + $0x178] sm:$0xff]
    %v72 = vld [vmem:[%s1 + $0x180] sm:$0xff]
    %v73 = vld [vmem:[%s1 + $0x188] sm:$0xff]
    %v74 = vld [vmem:[%s1 + $0x190] sm:$0xff]
    %v75 = vld [vmem:[%s1 + $0x198] sm:$0xff]
    %v76 = vld [vmem:[%s1 + $0x1a0] sm:$0xff]
    %v77 = vld [vmem:[%s1 + $0x1a8] sm:$0xff]
    %v78 = vld [vmem:[%s1 + $0x1b0] sm:$0xff]
    %v79 = vld [vmem:[%s1 + $0x1b8] sm:$0xff]
    %v80 = vld [vmem:[%s1 + $0x1c0] sm:$0xff]
    %v81 = vld [vmem:[%s1 + $0x1c8] sm:$0xff]
    %v82 = vld [vmem:[%s1 + $0x1d0] sm:$0xff]
    %v83 = vld [vmem:[%s1 + $0x1d8] sm:$0xff]
    %v84 = vld [vmem:[%s1 + $0x1e0] sm:$0xff]
    %v85 = vld [vmem:[%s1 + $0x1e8] sm:$0xff]
    %v86 = vld [vmem:[%s1 + $0x1f0] sm:$0xff]
    %v87 = vld [vmem:[%s1 + $0x1f8] sm:$0xff]
    %v88 = vld [vmem:[%s1 + $0x200] sm:$0xff]
    %v89 = vld [vmem:[%s1 + $0x208] sm:$0xff]
    %v90 = vld [vmem:[%s1 + $0x210] sm:$0xff]
    %v91 = vld [vmem:[%s1 + $0x218] sm:$0xff]
    %v92 = vld [vmem:[%s1 + $0x220] sm:$0xff]
    %v93 = vld [vmem:[%s1 + $0x228] sm:$0xff]
    %v94 = vld [vmem:[%s1 + $0x230] sm:$0xff]
    %v95 = vld [vmem:[%s1 + $0x238] sm:$0xff]
    %v96 = vld [vmem:[%s1 + $0x240] sm:$0xff]
    %v97 = vld [vmem:[%s1 + $0x248] sm:$0xff]
    %v98 = vld [vmem:[%s1 + $0x250] sm:$0xff]
    %v99 = vld [vmem:[%s1 + $0x258] sm:$0xff]
    %v100 = vld [vmem:[%s1 + $0x260] sm:$0xff]
    %v101 = vld [vmem:[%s1 + $0x268] sm:$0xff]
    %v102 = vld [vmem:[%s1 + $0x270] sm:$0xff]
    %v103 = vld [vmem:[%s1 + $0x278] sm:$0xff]
    %v104 = vld [vmem:[%s1 + $0x280] sm:$0xff]
    %v105 = vld [vmem:[%s1 + $0x288] sm:$0xff]
    %v106 = vld [vmem:[%s1 + $0x290] sm:$0xff]
    %v107 = vld [vmem:[%s1 + $0x298] sm:$0xff]
    %v108 = vld [vmem:[%s1 + $0x2a0] sm:$0xff]
    %v109 = vld [vmem:[%s1 + $0x2a8] sm:$0xff]
    %v110 = vld [vmem:[%s1 + $0x2b0] sm:$0xff]
    %v111 = vld [vmem:[%s1 + $0x2b8] sm:$0xff]
    %v112 = vld [vmem:[%s1 + $0x2c0] sm:$0xff]
    %v113 = vld [vmem:[%s1 + $0x2c8] sm:$0xff]
    %v114 = vld [vmem:[%s1 + $0x2d0] sm:$0xff]
    %v115 = vld [vmem:[%s1 + $0x2d8] sm:$0xff]
    %v116 = vld [vmem:[%s1 + $0x2e0] sm:$0xff]
    %v117 = vld [vmem:[%s1 + $0x2e8] sm:$0xff]
    %v118 = vld [vmem:[%s1 + $0x2f0] sm:$0xff]
    %v119 = vld [vmem:[%s1 + $0x2f8] sm:$0xff]
    %v120 = vld [vmem:[%s1 + $0x300] sm:$0xff]
    %v121 = vld [vmem:[%s1 + $0x308] sm:$0xff]
    %v122 = vld [vmem:[%s1 + $0x310] sm:$0xff]
    %v123 = vld [vmem:[%s1 + $0x318] sm:$0xff]
    %v124 = vld [vmem:[%s1 + $0x320] sm:$0xff]
    %v125 = vld [vmem:[%s1 + $0x328] sm:$0xff]
    %v126 = vld [vmem:[%s1 + $0x330] sm:$0xff]
    %v127 = vld [vmem:[%s1 + $0x338] sm:$0xff]
    %v128 = vld [vmem:[%s1 + $0x340] sm:$0xff]
    %v129 = vld [vmem:[%s1 + $0x348] sm:$0xff]
    %v130 = vld [vmem:[%s1 + $0x350] sm:$0xff]
    %v131 = vld [vmem:[%s1 + $0x358] sm:$0xff]
    %v132 = vld [vmem:[%s1 + $0x360] sm:$0xff]
    %v133 = vld [vmem:[%s1 + $0x368] sm:$0xff]
    %v134 = vld [vmem:[%s1 + $0x370] sm:$0xff]
    %v135 = vld [vmem:[%s1 + $0x378] sm:$0xff]
    %v136 = vld [vmem:[%s1 + $0x380] sm:$0xff]
    %v137 = vld [vmem:[%s1 + $0x388] sm:$0xff]
    %v138 = vld [vmem:[%s1 + $0x390] sm:$0xff]
    %v139 = vld [vmem:[%s1 + $0x398] sm:$0xff]
    %v140 = vld [vmem:[%s1 + $0x3a0] sm:$0xff]
    %v141 = vld [vmem:[%s1 + $0x3a8] sm:$0xff]
    %v142 = vld [vmem:[%s1 + $0x3b0] sm:$0xff]
    %v143 = vld [vmem:[%s1 + $0x3b8] sm:$0xff]
    %v144 = vld [vmem:[%s1 + $0x3c0] sm:$0xff]
    %v145 = vld [vmem:[%s1 + $0x3c8] sm:$0xff]
    %v146 = vld [vmem:[%s1 + $0x3d0] sm:$0xff]
    %v147 = vld [vmem:[%s1 + $0x3d8] sm:$0xff]
    %v148 = vld [vmem:[%s1 + $0x3e0] sm:$0xff]
    %v149 = vld [vmem:[%s1 + $0x3e8] sm:$0xff]
    %v150 = vld [vmem:[%s1 + $0x3f0] sm:$0xff]
    %v151 = vld [vmem:[%s1 + $0x3f8] sm:$0xff]
    %v152 = vld [vmem:[%s1 + $0x400] sm:$0xff]
    %v153 = vld [vmem:[%s1 + $0x408] sm:$0xff]
    %v154 = vld [vmem:[%s1 + $0x410] sm:$0xff]
    %v155 = vld [vmem:[%s1 + $0x418] sm:$0xff]
    %v156 = vld [vmem:[%s1 + $0x420] sm:$0xff]
    %v157 = vld [vmem:[%s1 + $0x428] sm:$0xff]
    %v158 = vld [vmem:[%s1 + $0x430] sm:$0xff]
    %v159 = vld [vmem:[%s1 + $0x438] sm:$0xff]
    %v160 = vld [vmem:[%s1 + $0x440] sm:$0xff]
    %v161 = vld [vmem:[%s1 + $0x448] sm:$0xff]
    %v162 = vld [vmem:[%s1 + $0x450] sm:$0xff]
    %v163 = vld [vmem:[%s1 + $0x458] sm:$0xff]
    %v164 = vld [vmem:[%s1 + $0x460] sm:$0xff]
    %v165 = vld [vmem:[%s1 + $0x468] sm:$0xff]
    %v166 = vld [vmem:[%s1 + $0x470] sm:$0xff]
    %v167 = vld [vmem:[%s1 + $0x478] sm:$0xff]
    %v168 = vld [vmem:[%s1 + $0x480] sm:$0xff]
    %v169 = vld [vmem:[%s1 + $0x488] sm:$0xff]
    %v170 = vld [vmem:[%s1 + $0x490] sm:$0xff]
    %v171 = vld [vmem:[%s1 + $0x498] sm:$0xff]
    %v172 = vld [vmem:[%s1 + $0x4a0] sm:$0xff]
    %v173 = vld [vmem:[%s1 + $0x4a8] sm:$0xff]
    %v174 = vld [vmem:[%s1 + $0x4b0] sm:$0xff]
    %v175 = vld [vmem:[%s1 + $0x4b8] sm:$0xff]
    %v176 = vld [vmem:[%s1 + $0x4c0] sm:$0xff]
    %v177 = vld [vmem:[%s1 + $0x4c8] sm:$0xff]
    %v178 = vld [vmem:[%s1 + $0x4d0] sm:$0xff]
    %v179 = vld [vmem:[%s1 + $0x4d8] sm:$0xff]
    %v180 = vld [vmem:[%s1 + $0x4e0] sm:$0xff]
    %v181 = vld [vmem:[%s1 + $0x4e8] sm:$0xff]
    %v182 = vld [vmem:[%s1 + $0x4f0] sm:$0xff]
    %v183 = vld [vmem:[%s1 + $0x4f8] sm:$0xff]
    %v184 = vld [vmem:[%s1 + $0x500] sm:$0xff]
    %v185 = vld [vmem:[%s1 + $0x508] sm:$0xff]
    %v186 = vld [vmem:[%s1 + $0x510] sm:$0xff]
    %v187 = vld [vmem:[%s1 + $0x518] sm:$0xff]
    %v188 = vld [vmem:[%s1 + $0x520] sm:$0xff]
    %v189 = vld [vmem:[%s1 + $0x528] sm:$0xff]
    %v190 = vld [vmem:[%s1 + $0x530] sm:$0xff]
    %v191 = vld [vmem:[%s1 + $0x538] sm:$0xff]
    %v192 = vld [vmem:[%s1 + $0x540] sm:$0xff]
    %v193 = vld [vmem:[%s1 + $0x548] sm:$0xff]
    %v194 = vld [vmem:[%s1 + $0x550] sm:$0xff]
    %v195 = vld [vmem:[%s1 + $0x558] sm:$0xff]
    %v196 = vld [vmem:[%s1 + $0x560] sm:$0xff]
    %v197 = vld [vmem:[%s1 + $0x568] sm:$0xff]
    %v198 = vld [vmem:[%s1 + $0x570] sm:$0xff]
    %v199 = vld [vmem:[%s1 + $0x578] sm:$0xff]
    %v200 = vld [vmem:[%s1 + $0x580] sm:$0xff]
    %v201 = vld [vmem:[%s1 + $0x588] sm:$0xff]
    %v202 = vld [vmem:[%s1 + $0x590] sm:$0xff]
    %v203 = vld [vmem:[%s1 + $0x598] sm:$0xff]
    %v204 = vld [vmem:[%s1 + $0x5a0] sm:$0xff]
    %v205 = vld [vmem:[%s1 + $0x5a8] sm:$0xff]
    %v206 = vld [vmem:[%s1 + $0x5b0] sm:$0xff]
    %v207 = vld [vmem:[%s1 + $0x5b8] sm:$0xff]
    %v208 = vld [vmem:[%s1 + $0x5c0] sm:$0xff]
    %v209 = vld [vmem:[%s1 + $0x5c8] sm:$0xff]
    %v210 = vld [vmem:[%s1 + $0x5d0] sm:$0xff]
    %v211 = vld [vmem:[%s1 + $0x5d8] sm:$0xff]
    %v212 = vld [vmem:[%s1 + $0x5e0] sm:$0xff]
    %v213 = vld [vmem:[%s1 + $0x5e8] sm:$0xff]
    %v214 = vld [vmem:[%s1 + $0x5f0] sm:$0xff]
    %v215 = vld [vmem:[%s1 + $0x5f8] sm:$0xff]
    %v216 = vld [vmem:[%s1 + $0x600] sm:$0xff]
    %v217 = vld [vmem:[%s1 + $0x608] sm:$0xff]
    %v218 = vld [vmem:[%s1 + $0x610] sm:$0xff]
    %v219 = vld [vmem:[%s1 + $0x618] sm:$0xff]
    %v220 = vld [vmem:[%s1 + $0x620] sm:$0xff]
    %v221 = vld [vmem:[%s1 + $0x628] sm:$0xff]
    %v222 = vld [vmem:[%s1 + $0x630] sm:$0xff]
    %v223 = vld [vmem:[%s1 + $0x638] sm:$0xff]
    %v224 = vld [vmem:[%s1 + $0x640] sm:$0xff]
    %v225 = vld [vmem:[%s1 + $0x648] sm:$0xff]
    %v226 = vld [vmem:[%s1 + $0x650] sm:$0xff]
    %v227 = vld [vmem:[%s1 + $0x658] sm:$0xff]
    %v228 = vld [vmem:[%s1 + $0x660] sm:$0xff]
    %v229 = vld [vmem:[%s1 + $0x668] sm:$0xff]
    %v230 = vld [vmem:[%s1 + $0x670] sm:$0xff]
    %v231 = vld [vmem:[%s1 + $0x678] sm:$0xff]
    %v232 = vld [vmem:[%s1 + $0x680] sm:$0xff]
    %v233 = vld [vmem:[%s1 + $0x688] sm:$0xff]
    %v234 = vld [vmem:[%s1 + $0x690] sm:$0xff]
    %v235 = vld [vmem:[%s1 + $0x698] sm:$0xff]
    %v236 = vld [vmem:[%s1 + $0x6a0] sm:$0xff]
    %v237 = vld [vmem:[%s1 + $0x6a8] sm:$0xff]
    %v238 = vld [vmem:[%s1 + $0x6b0] sm:$0xff]
    %v239 = vld [vmem:[%s1 + $0x6b8] sm:$0xff]
    %v240 = vld [vmem:[%s1 + $0x6c0] sm:$0xff]
    %v241 = vld [vmem:[%s1 + $0x6c8] sm:$0xff]
    %v242 = vld [vmem:[%s1 + $0x6d0] sm:$0xff]
    %v243 = vld [vmem:[%s1 + $0x6d8] sm:$0xff]
    %v244 = vld [vmem:[%s1 + $0x6e0] sm:$0xff]
    %v245 = vld [vmem:[%s1 + $0x6e8] sm:$0xff]
    %v246 = vld [vmem:[%s1 + $0x6f0] sm:$0xff]
    %v247 = vld [vmem:[%s1 + $0x6f8] sm:$0xff]
    %v248 = vld [vmem:[%s1 + $0x700] sm:$0xff]
    %v249 = vld [vmem:[%s1 + $0x708] sm:$0xff]
    %v250 = vld [vmem:[%s1 + $0x710] sm:$0xff]
    %v251 = vld [vmem:[%s1 + $0x718] sm:$0xff]
    %v252 = vld [vmem:[%s1 + $0x720] sm:$0xff]
    %v253 = vld [vmem:[%s1 + $0x728] sm:$0xff]
    %v254 = vld [vmem:[%s1 + $0x730] sm:$0xff]
    %v255 = vld [vmem:[%s1 + $0x738] sm:$0xff]
    %v256 = vld [vmem:[%s1 + $0x740] sm:$0xff]
    %v257 = vld [vmem:[%s1 + $0x748] sm:$0xff]
    %v258 = vld [vmem:[%s1 + $0x750] sm:$0xff]
    %v259 = vld [vmem:[%s1 + $0x758] sm:$0xff]
    %v260 = vld [vmem:[%s1 + $0x760] sm:$0xff]
    %v261 = vld [vmem:[%s1 + $0x768] sm:$0xff]
    %v262 = vld [vmem:[%s1 + $0x770] sm:$0xff]
    %v263 = vld [vmem:[%s1 + $0x778] sm:$0xff]
    %v264 = vld [vmem:[%s1 + $0x780] sm:$0xff]
    %v265 = vld [vmem:[%s1 + $0x788] sm:$0xff]
    %v266 = vld [vmem:[%s1 + $0x790] sm:$0xff]
    %v267 = vld [vmem:[%s1 + $0x798] sm:$0xff]
    %v268 = vld [vmem:[%s1 + $0x7a0] sm:$0xff]
    %v269 = vld [vmem:[%s1 + $0x7a8] sm:$0xff]
    %v270 = vld [vmem:[%s1 + $0x7b0] sm:$0xff]
    %v271 = vld [vmem:[%s1 + $0x7b8] sm:$0xff]
    %v272 = vld [vmem:[%s1 + $0x7c0] sm:$0xff]
    %v273 = vld [vmem:[%s1 + $0x7c8] sm:$0xff]
    %v274 = vld [vmem:[%s1 + $0x7d0] sm:$0xff]
    %v275 = vld [vmem:[%s1 + $0x7d8] sm:$0xff]
    %v276 = vld [vmem:[%s1 + $0x7e0] sm:$0xff]
    %v277 = vld [vmem:[%s1 + $0x7e8] sm:$0xff]
    %v278 = vld [vmem:[%s1 + $0x7f0] sm:$0xff]
    %v279 = vld [vmem:[%s1 + $0x7f8] sm:$0xff]
    %v280 = vld [vmem:[%s1 + $0x800] sm:$0xff]
    %v281 = vld [vmem:[%s1 + $0x808] sm:$0xff]
    %v282 = vld [vmem:[%s1 + $0x810] sm:$0xff]
    %v283 = vld [vmem:[%s1 + $0x818] sm:$0xff]
    %v284 = vld [vmem:[%s1 + $0x820] sm:$0xff]
    %v285 = vld [vmem:[%s1 + $0x828] sm:$0xff]
    %v286 = vld [vmem:[%s1 + $0x830] sm:$0xff]
    %v287 = vld [vmem:[%s1 + $0x838] sm:$0xff]
    %v288 = vld [vmem:[%s1 + $0x840] sm:$0xff]
    %v289 = vld [vmem:[%s1 + $0x848] sm:$0xff]
    %v290 = vld [vmem:[%s1 + $0x850] sm:$0xff]
    %v291 = vld [vmem:[%s1 + $0x858] sm:$0xff]
    %v292 = vld [vmem:[%s1 + $0x860] sm:$0xff]
    %v293 = vld [vmem:[%s1 + $0x868] sm:$0xff]
    %v294 = vld [vmem:[%s1 + $0x870] sm:$0xff]
    %v295 = vld [vmem:[%s1 + $0x878] sm:$0xff]
    %v296 = vld [vmem:[%s1 + $0x880] sm:$0xff]
    %v297 = vld [vmem:[%s1 + $0x888] sm:$0xff]
    %v298 = vld [vmem:[%s1 + $0x890] sm:$0xff]
    %v299 = vld [vmem:[%s1 + $0x898] sm:$0xff]
    %v300 = vld [vmem:[%s1 + $0x8a0] sm:$0xff]
    %v301 = vld [vmem:[%s1 + $0x8a8] sm:$0xff]
    %v302 = vld [vmem:[%s1 + $0x8b0] sm:$0xff]
    %v303 = vld [vmem:[%s1 + $0x8b8] sm:$0xff]
    %v304 = vld [vmem:[%s1 + $0x8c0] sm:$0xff]
    %v305 = vld [vmem:[%s1 + $0x8c8] sm:$0xff]
    %v306 = vld [vmem:[%s1 + $0x8d0] sm:$0xff]
    %v307 = vld [vmem:[%s1 + $0x8d8] sm:$0xff]
    %v308 = vld [vmem:[%s1 + $0x8e0] sm:$0xff]
    %v309 = vld [vmem:[%s1 + $0x8e8] sm:$0xff]
    %v310 = vld [vmem:[%s1 + $0x8f0] sm:$0xff]
    %v311 = vld [vmem:[%s1 + $0x8f8] sm:$0xff]
    %v312 = vld [vmem:[%s1 + $0x900] sm:$0xff]
    %v313 = vld [vmem:[%s1 + $0x908] sm:$0xff]
    %v314 = vld [vmem:[%s1 + $0x910] sm:$0xff]
    %v315 = vld [vmem:[%s1 + $0x918] sm:$0xff]
    %v316 = vld [vmem:[%s1 + $0x920] sm:$0xff]
    %v317 = vld [vmem:[%s1 + $0x928] sm:$0xff]
    %v318 = vld [vmem:[%s1 + $0x930] sm:$0xff]
    %v319 = vld [vmem:[%s1 + $0x938] sm:$0xff]
    %v320 = vld [vmem:[%s1 + $0x940] sm:$0xff]
    %v321 = vld [vmem:[%s1 + $0x948] sm:$0xff]
    %v322 = vld [vmem:[%s1 + $0x950] sm:$0xff]
    %v323 = vld [vmem:[%s1 + $0x958] sm:$0xff]
    %v324 = vld [vmem:[%s1 + $0x960] sm:$0xff]
    %v325 = vld [vmem:[%s1 + $0x968] sm:$0xff]
    %v326 = vld [vmem:[%s1 + $0x970] sm:$0xff]
    %v327 = vld [vmem:[%s1 + $0x978] sm:$0xff]
    %v328 = vld [vmem:[%s1 + $0x980] sm:$0xff]
    %v329 = vld [vmem:[%s1 + $0x988] sm:$0xff]
    %v330 = vld [vmem:[%s1 + $0x990] sm:$0xff]
    %v331 = vld [vmem:[%s1 + $0x998] sm:$0xff]
    %v332 = vld [vmem:[%s1 + $0x9a0] sm:$0xff]
    %v333 = vld [vmem:[%s1 + $0x9a8] sm:$0xff]
    %v334 = vld [vmem:[%s1 + $0x9b0] sm:$0xff]
    %v335 = vld [vmem:[%s1 + $0x9b8] sm:$0xff]
    %v336 = vld [vmem:[%s1 + $0x9c0] sm:$0xff]
    %v337 = vld [vmem:[%s1 + $0x9c8] sm:$0xff]
    %v338 = vld [vmem:[%s1 + $0x9d0] sm:$0xff]
    %v339 = vld [vmem:[%s1 + $0x9d8] sm:$0xff]
    %v340 = vld [vmem:[%s1 + $0x9e0] sm:$0xff]
    %v341 = vld [vmem:[%s1 + $0x9e8] sm:$0xff]
    %v342 = vld [vmem:[%s1 + $0x9f0] sm:$0xff]
    %v343 = vld [vmem:[%s1 + $0x9f8] sm:$0xff]
    %v344 = vld [vmem:[%s1 + $0xa00] sm:$0xff]
    %v345 = vld [vmem:[%s1 + $0xa08] sm:$0xff]
    %v346 = vld [vmem:[%s1 + $0xa10] sm:$0xff]
    %v347 = vld [vmem:[%s1 + $0xa18] sm:$0xff]
    %v348 = vld [vmem:[%s1 + $0xa20] sm:$0xff]
    %v349 = vld [vmem:[%s1 + $0xa28] sm:$0xff]
    %v350 = vld [vmem:[%s1 + $0xa30] sm:$0xff]
    %v351 = vld [vmem:[%s1 + $0xa38] sm:$0xff]
    %v352 = vld [vmem:[%s1 + $0xa40] sm:$0xff]
    %v353 = vld [vmem:[%s1 + $0xa48] sm:$0xff]
    %v354 = vld [vmem:[%s1 + $0xa50] sm:$0xff]
    %v355 = vld [vmem:[%s1 + $0xa58] sm:$0xff]
    %v356 = vld [vmem:[%s1 + $0xa60] sm:$0xff]
    %v357 = vld [vmem:[%s1 + $0xa68] sm:$0xff]
    %v358 = vld [vmem:[%s1 + $0xa70] sm:$0xff]
    %v359 = vld [vmem:[%s1 + $0xa78] sm:$0xff]
    %v360 = vld [vmem:[%s1 + $0xa80] sm:$0xff]
    %v361 = vld [vmem:[%s1 + $0xa88] sm:$0xff]
    %v362 = vld [vmem:[%s1 + $0xa90] sm:$0xff]
    %v363 = vld [vmem:[%s1 + $0xa98] sm:$0xff]
    %v364 = vld [vmem:[%s1 + $0xaa0] sm:$0xff]
    %v365 = vld [vmem:[%s1 + $0xaa8] sm:$0xff]
    %v366 = vld [vmem:[%s1 + $0xab0] sm:$0xff]
    %v367 = vld [vmem:[%s1 + $0xab8] sm:$0xff]
    %v368 = vld [vmem:[%s1 + $0xac0] sm:$0xff]
    %v369 = vld [vmem:[%s1 + $0xac8] sm:$0xff]
    %v370 = vld [vmem:[%s1 + $0xad0] sm:$0xff]
    %v371 = vld [vmem:[%s1 + $0xad8] sm:$0xff]
    %v372 = vld [vmem:[%s1 + $0xae0] sm:$0xff]
    %v373 = vld [vmem:[%s1 + $0xae8] sm:$0xff]
    %v374 = vld [vmem:[%s1 + $0xaf0] sm:$0xff]
    %v375 = vld [vmem:[%s1 + $0xaf8] sm:$0xff]
    %v376 = vld [vmem:[%s1 + $0xb00] sm:$0xff]
    %v377 = vld [vmem:[%s1 + $0xb08] sm:$0xff]
    %v378 = vld [vmem:[%s1 + $0xb10] sm:$0xff]
    %v379 = vld [vmem:[%s1 + $0xb18] sm:$0xff]
    %v380 = vld [vmem:[%s1 + $0xb20] sm:$0xff]
    %v381 = vld [vmem:[%s1 + $0xb28] sm:$0xff]
    %v382 = vld [vmem:[%s1 + $0xb30] sm:$0xff]
    %v383 = vld [vmem:[%s1 + $0xb38] sm:$0xff]
    %v384 = vld [vmem:[%s1 + $0xb40] sm:$0xff]
    %v385 = vld [vmem:[%s1 + $0xb48] sm:$0xff]
    %v386 = vld [vmem:[%s1 + $0xb50] sm:$0xff]
    %v387 = vld [vmem:[%s1 + $0xb58] sm:$0xff]
    %v388 = vld [vmem:[%s1 + $0xb60] sm:$0xff]
    %v389 = vld [vmem:[%s1 + $0xb68] sm:$0xff]
    %v390 = vld [vmem:[%s1 + $0xb70] sm:$0xff]
    %v391 = vld [vmem:[%s1 + $0xb78] sm:$0xff]
    %v392 = vld [vmem:[%s1 + $0xb80] sm:$0xff]
    %v393 = vld [vmem:[%s1 + $0xb88] sm:$0xff]
    %v394 = vld [vmem:[%s1 + $0xb90] sm:$0xff]
    %v395 = vld [vmem:[%s1 + $0xb98] sm:$0xff]
    %v396 = vld [vmem:[%s1 + $0xba0] sm:$0xff]
    %v397 = vld [vmem:[%s1 + $0xba8] sm:$0xff]
    %v398 = vld [vmem:[%s1 + $0xbb0] sm:$0xff]
    %v399 = vld [vmem:[%s1 + $0xbb8] sm:$0xff]
    %v400 = vld [vmem:[%s1 + $0xbc0] sm:$0xff]
    %v401 = vld [vmem:[%s1 + $0xbc8] sm:$0xff]
    %v402 = vld [vmem:[%s1 + $0xbd0] sm:$0xff]
    %v403 = vld [vmem:[%s1 + $0xbd8] sm:$0xff]
    %v404 = vld [vmem:[%s1 + $0xbe0] sm:$0xff]
    %v405 = vld [vmem:[%s1 + $0xbe8] sm:$0xff]
    %v406 = vld [vmem:[%s1 + $0xbf0] sm:$0xff]
    %v407 = vld [vmem:[%s1 + $0xbf8] sm:$0xff]
    %v408 = vld [vmem:[%s1 + $0xc00] sm:$0xff]
    %v409 = vld [vmem:[%s1 + $0xc08] sm:$0xff]
    %v410 = vld [vmem:[%s1 + $0xc10] sm:$0xff]
    %v411 = vld [vmem:[%s1 + $0xc18] sm:$0xff]
    %v412 = vld [vmem:[%s1 + $0xc20] sm:$0xff]
    %v413 = vld [vmem:[%s1 + $0xc28] sm:$0xff]
    %v414 = vld [vmem:[%s1 + $0xc30] sm:$0xff]
    %v415 = vld [vmem:[%s1 + $0xc38] sm:$0xff]
    %v416 = vld [vmem:[%s1 + $0xc40] sm:$0xff]
    %v417 = vld [vmem:[%s1 + $0xc48] sm:$0xff]
    %v418 = vld [vmem:[%s1 + $0xc50] sm:$0xff]
    %v419 = vld [vmem:[%s1 + $0xc58] sm:$0xff]
    %v420 = vld [vmem:[%s1 + $0xc60] sm:$0xff]
    %v421 = vld [vmem:[%s1 + $0xc68] sm:$0xff]
    %v422 = vld [vmem:[%s1 + $0xc70] sm:$0xff]
    %v423 = vld [vmem:[%s1 + $0xc78] sm:$0xff]
    %v424 = vld [vmem:[%s1 + $0xc80] sm:$0xff]
    %v425 = vld [vmem:[%s1 + $0xc88] sm:$0xff]
    %v426 = vld [vmem:[%s1 + $0xc90] sm:$0xff]
    %v427 = vld [vmem:[%s1 + $0xc98] sm:$0xff]
    %v428 = vld [vmem:[%s1 + $0xca0] sm:$0xff]
    %v429 = vld [vmem:[%s1 + $0xca8] sm:$0xff]
    %v430 = vld [vmem:[%s1 + $0xcb0] sm:$0xff]
    %v431 = vld [vmem:[%s1 + $0xcb8] sm:$0xff]
    %v432 = vld [vmem:[%s1 + $0xcc0] sm:$0xff]
    %v433 = vld [vmem:[%s1 + $0xcc8] sm:$0xff]
    %v434 = vld [vmem:[%s1 + $0xcd0] sm:$0xff]
    %v435 = vld [vmem:[%s1 + $0xcd8] sm:$0xff]
    %v436 = vld [vmem:[%s1 + $0xce0] sm:$0xff]
    %v437 = vld [vmem:[%s1 + $0xce8] sm:$0xff]
    %v438 = vld [vmem:[%s1 + $0xcf0] sm:$0xff]
    %v439 = vld [vmem:[%s1 + $0xcf8] sm:$0xff]
    %v440 = vld [vmem:[%s1 + $0xd00] sm:$0xff]
    %v441 = vld [vmem:[%s1 + $0xd08] sm:$0xff]
    %v442 = vld [vmem:[%s1 + $0xd10] sm:$0xff]
    %v443 = vld [vmem:[%s1 + $0xd18] sm:$0xff]
    %v444 = vld [vmem:[%s1 + $0xd20] sm:$0xff]
    %v445 = vld [vmem:[%s1 + $0xd28] sm:$0xff]
    %v446 = vld [vmem:[%s1 + $0xd30] sm:$0xff]
    %v447 = vld [vmem:[%s1 + $0xd38] sm:$0xff]
    %v448 = vld [vmem:[%s1 + $0xd40] sm:$0xff]
    %v449 = vld [vmem:[%s1 + $0xd48] sm:$0xff]
    %v450 = vld [vmem:[%s1 + $0xd50] sm:$0xff]
    %v451 = vld [vmem:[%s1 + $0xd58] sm:$0xff]
    %v452 = vld [vmem:[%s1 + $0xd60] sm:$0xff]
    %v453 = vld [vmem:[%s1 + $0xd68] sm:$0xff]
    %v454 = vld [vmem:[%s1 + $0xd70] sm:$0xff]
    %v455 = vld [vmem:[%s1 + $0xd78] sm:$0xff]
    %v456 = vld [vmem:[%s1 + $0xd80] sm:$0xff]
    %v457 = vld [vmem:[%s1 + $0xd88] sm:$0xff]
    %v458 = vld [vmem:[%s1 + $0xd90] sm:$0xff]
    %v459 = vld [vmem:[%s1 + $0xd98] sm:$0xff]
    %v460 = vld [vmem:[%s1 + $0xda0] sm:$0xff]
    %v461 = vld [vmem:[%s1 + $0xda8] sm:$0xff]
    %v462 = vld [vmem:[%s1 + $0xdb0] sm:$0xff]
    %v463 = vld [vmem:[%s1 + $0xdb8] sm:$0xff]
    %v464 = vld [vmem:[%s1 + $0xdc0] sm:$0xff]
    %v465 = vld [vmem:[%s1 + $0xdc8] sm:$0xff]
    %v466 = vld [vmem:[%s1 + $0xdd0] sm:$0xff]
    %v467 = vld [vmem:[%s1 + $0xdd8] sm:$0xff]
    %v468 = vld [vmem:[%s1 + $0xde0] sm:$0xff]
    %v469 = vld [vmem:[%s1 + $0xde8] sm:$0xff]
    %v470 = vld [vmem:[%s1 + $0xdf0] sm:$0xff]
    %v471 = vld [vmem:[%s1 + $0xdf8] sm:$0xff]
    %v472 = vld [vmem:[%s2] sm:$0xf]
    %v474 = vlaneseq
    %v475 = vshrl.u32 %v474, 7
    %v476 = vsub.s32 0, %v475
    %v477 = vrot.slane %v472, %v476
    %v478 = vlaneseq
    %v479 = vshrl.u32 %v478, 7
    %v480 = vsub.s32 1, %v479
    %v481 = vrot.slane %v472, %v480
    %v482 = vlaneseq
    %v483 = vshrl.u32 %v482, 7
    %v484 = vsub.s32 2, %v483
    %v485 = vrot.slane %v472, %v484
    %v486 = vlaneseq
    %v487 = vshrl.u32 %v486, 7
    %v488 = vsub.s32 3, %v487
    %v489 = vrot.slane %v472, %v488
    %v496 = vcombine.high %v22, %v22
    %v498 = vunpack.c.l.s4 1966171168
    %v499 = vunpack.c.0.s8 %v498
    %v500 = vlaneseq
    %v501 = vshrl.u32 %v500, 7
    %v502 = vsub.s32 %v499, %v501
    %v503 = vrot.slane %v22, %v502
    %v505 = vunpack.c.l.s4 1966171168
    %v506 = vunpack.c.0.s8 %v505
    %v507 = vlaneseq
    %v508 = vshrl.u32 %v507, 7
    %v509 = vsub.s32 %v506, %v508
    %v510 = vrot.slane %v496, %v509
    %v511 = vcombine.high %v503, %v503
    %v512 = vcombine.high %v510, %v510
    %v514 = vunpack.c.l.s4 1966171168
    %v515 = vunpack.c.0.s8 %v514
    %v516 = vlaneseq
    %v517 = vshrl.u32 %v516, 7
    %v518 = vsub.s32 %v515, %v517
    %v519 = vrot.slane %v503, %v518
    %v521 = vunpack.c.l.s4 1966171168
    %v522 = vunpack.c.0.s8 %v521
    %v523 = vlaneseq
    %v524 = vshrl.u32 %v523, 7
    %v525 = vsub.s32 %v522, %v524
    %v526 = vrot.slane %v510, %v525
    %v528 = vunpack.c.l.s4 1966171168
    %v529 = vunpack.c.0.s8 %v528
    %v530 = vlaneseq
    %v531 = vshrl.u32 %v530, 7
    %v532 = vsub.s32 %v529, %v531
    %v533 = vrot.slane %v511, %v532
    %v535 = vunpack.c.l.s4 1966171168
    %v536 = vunpack.c.0.s8 %v535
    %v537 = vlaneseq
    %v538 = vshrl.u32 %v537, 7
    %v539 = vsub.s32 %v536, %v538
    %v540 = vrot.slane %v512, %v539
    %v541 = vcombine.high %v519, %v519
    %v542 = vcombine.high %v526, %v526
    %v543 = vcombine.high %v533, %v533
    %v544 = vcombine.high %v540, %v540
    %v545 = vcombine.high %v23, %v23
    %v547 = vunpack.c.l.s4 1966171168
    %v548 = vunpack.c.0.s8 %v547
    %v549 = vlaneseq
    %v550 = vshrl.u32 %v549, 7
    %v551 = vsub.s32 %v548, %v550
    %v552 = vrot.slane %v23, %v551
    %v554 = vunpack.c.l.s4 1966171168
    %v555 = vunpack.c.0.s8 %v554
    %v556 = vlaneseq
    %v557 = vshrl.u32 %v556, 7
    %v558 = vsub.s32 %v555, %v557
    %v559 = vrot.slane %v545, %v558
    %v560 = vcombine.high %v552, %v552
    %v561 = vcombine.high %v559, %v559
    %v563 = vunpack.c.l.s4 1966171168
    %v564 = vunpack.c.0.s8 %v563
    %v565 = vlaneseq
    %v566 = vshrl.u32 %v565, 7
    %v567 = vsub.s32 %v564, %v566
    %v568 = vrot.slane %v552, %v567
    %v570 = vunpack.c.l.s4 1966171168
    %v571 = vunpack.c.0.s8 %v570
    %v572 = vlaneseq
    %v573 = vshrl.u32 %v572, 7
    %v574 = vsub.s32 %v571, %v573
    %v575 = vrot.slane %v559, %v574
    %v577 = vunpack.c.l.s4 1966171168
    %v578 = vunpack.c.0.s8 %v577
    %v579 = vlaneseq
    %v580 = vshrl.u32 %v579, 7
    %v581 = vsub.s32 %v578, %v580
    %v582 = vrot.slane %v560, %v581
    %v584 = vunpack.c.l.s4 1966171168
    %v585 = vunpack.c.0.s8 %v584
    %v586 = vlaneseq
    %v587 = vshrl.u32 %v586, 7
    %v588 = vsub.s32 %v585, %v587
    %v589 = vrot.slane %v561, %v588
    %v590 = vcombine.high %v568, %v568
    %v591 = vcombine.high %v582, %v582
    %v1054 = vunpack.c.l.b16 %v24
    %v1055 = vunpack.c.h.b16 %v24
    %v1056 = vunpack.c.l.b16 %v25
    %v1057 = vunpack.c.h.b16 %v25
    %v1058 = vunpack.c.l.b16 %v26
    %v1059 = vunpack.c.h.b16 %v26
    %v1060 = vunpack.c.l.b16 %v27
    %v1061 = vunpack.c.h.b16 %v27
    %v1062 = vunpack.c.l.b16 %v28
    %v1063 = vunpack.c.h.b16 %v28
    %v1064 = vunpack.c.l.b16 %v29
    %v1065 = vunpack.c.h.b16 %v29
    %v1066 = vunpack.c.l.b16 %v30
    %v1067 = vunpack.c.h.b16 %v30
    %v1068 = vunpack.c.l.b16 %v31
    %v1069 = vunpack.c.h.b16 %v31
    %v1070 = vunpack.c.l.b16 %v32
    %v1071 = vunpack.c.h.b16 %v32
    %v1072 = vunpack.c.l.b16 %v33
    %v1073 = vunpack.c.h.b16 %v33
    %v1074 = vunpack.c.l.b16 %v34
    %v1075 = vunpack.c.h.b16 %v34
    %v1076 = vunpack.c.l.b16 %v35
    %v1077 = vunpack.c.h.b16 %v35
    %v1078 = vunpack.c.l.b16 %v36
    %v1079 = vunpack.c.h.b16 %v36
    %v1080 = vunpack.c.l.b16 %v37
    %v1081 = vunpack.c.h.b16 %v37
    %v1082 = vunpack.c.l.b16 %v38
    %v1083 = vunpack.c.h.b16 %v38
    %v1084 = vunpack.c.l.b16 %v39
    %v1085 = vunpack.c.h.b16 %v39
    %v1086 = vunpack.c.l.b16 %v40
    %v1087 = vunpack.c.h.b16 %v40
    %v1088 = vunpack.c.l.b16 %v41
    %v1089 = vunpack.c.h.b16 %v41
    %v1090 = vunpack.c.l.b16 %v42
    %v1091 = vunpack.c.h.b16 %v42
    %v1092 = vunpack.c.l.b16 %v43
    %v1093 = vunpack.c.h.b16 %v43
    %v1094 = vunpack.c.l.b16 %v44
    %v1095 = vunpack.c.h.b16 %v44
    %v1096 = vunpack.c.l.b16 %v45
    %v1097 = vunpack.c.h.b16 %v45
    %v1098 = vunpack.c.l.b16 %v46
    %v1099 = vunpack.c.h.b16 %v46
    %v1100 = vunpack.c.l.b16 %v47
    %v1101 = vunpack.c.h.b16 %v47
    %v1102 = vunpack.c.l.b16 %v48
    %v1103 = vunpack.c.h.b16 %v48
    %v1104 = vunpack.c.l.b16 %v49
    %v1105 = vunpack.c.h.b16 %v49
    %v1106 = vunpack.c.l.b16 %v50
    %v1107 = vunpack.c.h.b16 %v50
    %v1108 = vunpack.c.l.b16 %v51
    %v1109 = vunpack.c.h.b16 %v51
    %v1110 = vunpack.c.l.b16 %v52
    %v1111 = vunpack.c.h.b16 %v52
    %v1112 = vunpack.c.l.b16 %v53
    %v1113 = vunpack.c.h.b16 %v53
    %v1114 = vunpack.c.l.b16 %v54
    %v1115 = vunpack.c.h.b16 %v54
    %v1116 = vunpack.c.l.b16 %v55
    %v1117 = vunpack.c.h.b16 %v55
    %v1118 = vunpack.c.l.b16 %v56
    %v1119 = vunpack.c.h.b16 %v56
    %v1120 = vunpack.c.l.b16 %v57
    %v1121 = vunpack.c.h.b16 %v57
    %v1122 = vunpack.c.l.b16 %v58
    %v1123 = vunpack.c.h.b16 %v58
    %v1124 = vunpack.c.l.b16 %v59
    %v1125 = vunpack.c.h.b16 %v59
    %v1126 = vunpack.c.l.b16 %v60
    %v1127 = vunpack.c.h.b16 %v60
    %v1128 = vunpack.c.l.b16 %v61
    %v1129 = vunpack.c.h.b16 %v61
    %v1130 = vunpack.c.l.b16 %v62
    %v1131 = vunpack.c.h.b16 %v62
    %v1132 = vunpack.c.l.b16 %v63
    %v1133 = vunpack.c.h.b16 %v63
    %v1134 = vunpack.c.l.b16 %v64
    %v1135 = vunpack.c.h.b16 %v64
    %v1136 = vunpack.c.l.b16 %v65
    %v1137 = vunpack.c.h.b16 %v65
    %v1138 = vunpack.c.l.b16 %v66
    %v1139 = vunpack.c.h.b16 %v66
    %v1140 = vunpack.c.l.b16 %v67
    %v1141 = vunpack.c.h.b16 %v67
    %v1142 = vunpack.c.l.b16 %v68
    %v1143 = vunpack.c.h.b16 %v68
    %v1144 = vunpack.c.l.b16 %v69
    %v1145 = vunpack.c.h.b16 %v69
    %v1146 = vunpack.c.l.b16 %v70
    %v1147 = vunpack.c.h.b16 %v70
    %v1148 = vunpack.c.l.b16 %v71
    %v1149 = vunpack.c.h.b16 %v71
    %v1150 = vunpack.c.l.b16 %v72
    %v1151 = vunpack.c.h.b16 %v72
    %v1152 = vunpack.c.l.b16 %v73
    %v1153 = vunpack.c.h.b16 %v73
    %v1154 = vunpack.c.l.b16 %v74
    %v1155 = vunpack.c.h.b16 %v74
    %v1156 = vunpack.c.l.b16 %v75
    %v1157 = vunpack.c.h.b16 %v75
    %v1158 = vunpack.c.l.b16 %v76
    %v1159 = vunpack.c.h.b16 %v76
    %v1160 = vunpack.c.l.b16 %v77
    %v1161 = vunpack.c.h.b16 %v77
    %v1162 = vunpack.c.l.b16 %v78
    %v1163 = vunpack.c.h.b16 %v78
    %v1164 = vunpack.c.l.b16 %v79
    %v1165 = vunpack.c.h.b16 %v79
    %v1166 = vunpack.c.l.b16 %v80
    %v1167 = vunpack.c.h.b16 %v80
    %v1168 = vunpack.c.l.b16 %v81
    %v1169 = vunpack.c.h.b16 %v81
    %v1170 = vunpack.c.l.b16 %v82
    %v1171 = vunpack.c.h.b16 %v82
    %v1172 = vunpack.c.l.b16 %v83
    %v1173 = vunpack.c.h.b16 %v83
    %v1174 = vunpack.c.l.b16 %v84
    %v1175 = vunpack.c.h.b16 %v84
    %v1176 = vunpack.c.l.b16 %v85
    %v1177 = vunpack.c.h.b16 %v85
    %v1178 = vunpack.c.l.b16 %v86
    %v1179 = vunpack.c.h.b16 %v86
    %v1180 = vunpack.c.l.b16 %v87
    %v1181 = vunpack.c.h.b16 %v87
    %v1182 = vunpack.c.l.b16 %v88
    %v1183 = vunpack.c.h.b16 %v88
    %v1184 = vunpack.c.l.b16 %v89
    %v1185 = vunpack.c.h.b16 %v89
    %v1186 = vunpack.c.l.b16 %v90
    %v1187 = vunpack.c.h.b16 %v90
    %v1188 = vunpack.c.l.b16 %v91
    %v1189 = vunpack.c.h.b16 %v91
    %v1190 = vunpack.c.l.b16 %v92
    %v1191 = vunpack.c.h.b16 %v92
    %v1192 = vunpack.c.l.b16 %v93
    %v1193 = vunpack.c.h.b16 %v93
    %v1194 = vunpack.c.l.b16 %v94
    %v1195 = vunpack.c.h.b16 %v94
    %v1196 = vunpack.c.l.b16 %v95
    %v1197 = vunpack.c.h.b16 %v95
    %v1198 = vunpack.c.l.b16 %v96
    %v1199 = vunpack.c.h.b16 %v96
    %v1200 = vunpack.c.l.b16 %v97
    %v1201 = vunpack.c.h.b16 %v97
    %v1202 = vunpack.c.l.b16 %v98
    %v1203 = vunpack.c.h.b16 %v98
    %v1204 = vunpack.c.l.b16 %v99
    %v1205 = vunpack.c.h.b16 %v99
    %v1206 = vunpack.c.l.b16 %v100
    %v1207 = vunpack.c.h.b16 %v100
    %v1208 = vunpack.c.l.b16 %v101
    %v1209 = vunpack.c.h.b16 %v101
    %v1210 = vunpack.c.l.b16 %v102
    %v1211 = vunpack.c.h.b16 %v102
    %v1212 = vunpack.c.l.b16 %v103
    %v1213 = vunpack.c.h.b16 %v103
    %v1214 = vunpack.c.l.b16 %v104
    %v1215 = vunpack.c.h.b16 %v104
    %v1216 = vunpack.c.l.b16 %v105
    %v1217 = vunpack.c.h.b16 %v105
    %v1218 = vunpack.c.l.b16 %v106
    %v1219 = vunpack.c.h.b16 %v106
    %v1220 = vunpack.c.l.b16 %v107
    %v1221 = vunpack.c.h.b16 %v107
    %v1222 = vunpack.c.l.b16 %v108
    %v1223 = vunpack.c.h.b16 %v108
    %v1224 = vunpack.c.l.b16 %v109
    %v1225 = vunpack.c.h.b16 %v109
    %v1226 = vunpack.c.l.b16 %v110
    %v1227 = vunpack.c.h.b16 %v110
    %v1228 = vunpack.c.l.b16 %v111
    %v1229 = vunpack.c.h.b16 %v111
    %v1230 = vunpack.c.l.b16 %v112
    %v1231 = vunpack.c.h.b16 %v112
    %v1232 = vunpack.c.l.b16 %v113
    %v1233 = vunpack.c.h.b16 %v113
    %v1234 = vunpack.c.l.b16 %v114
    %v1235 = vunpack.c.h.b16 %v114
    %v1236 = vunpack.c.l.b16 %v115
    %v1237 = vunpack.c.h.b16 %v115
    %v1238 = vunpack.c.l.b16 %v116
    %v1239 = vunpack.c.h.b16 %v116
    %v1240 = vunpack.c.l.b16 %v117
    %v1241 = vunpack.c.h.b16 %v117
    %v1242 = vunpack.c.l.b16 %v118
    %v1243 = vunpack.c.h.b16 %v118
    %v1244 = vunpack.c.l.b16 %v119
    %v1245 = vunpack.c.h.b16 %v119
    %v1246 = vunpack.c.l.b16 %v120
    %v1247 = vunpack.c.h.b16 %v120
    %v1248 = vunpack.c.l.b16 %v121
    %v1249 = vunpack.c.h.b16 %v121
    %v1250 = vunpack.c.l.b16 %v122
    %v1251 = vunpack.c.h.b16 %v122
    %v1252 = vunpack.c.l.b16 %v123
    %v1253 = vunpack.c.h.b16 %v123
    %v1254 = vunpack.c.l.b16 %v124
    %v1255 = vunpack.c.h.b16 %v124
    %v1256 = vunpack.c.l.b16 %v125
    %v1257 = vunpack.c.h.b16 %v125
    %v1258 = vunpack.c.l.b16 %v126
    %v1259 = vunpack.c.h.b16 %v126
    %v1260 = vunpack.c.l.b16 %v127
    %v1261 = vunpack.c.h.b16 %v127
    %v1262 = vunpack.c.l.b16 %v128
    %v1263 = vunpack.c.h.b16 %v128
    %v1264 = vunpack.c.l.b16 %v129
    %v1265 = vunpack.c.h.b16 %v129
    %v1266 = vunpack.c.l.b16 %v130
    %v1267 = vunpack.c.h.b16 %v130
    %v1268 = vunpack.c.l.b16 %v131
    %v1269 = vunpack.c.h.b16 %v131
    %v1270 = vunpack.c.l.b16 %v132
    %v1271 = vunpack.c.h.b16 %v132
    %v1272 = vunpack.c.l.b16 %v133
    %v1273 = vunpack.c.h.b16 %v133
    %v1274 = vunpack.c.l.b16 %v134
    %v1275 = vunpack.c.h.b16 %v134
    %v1276 = vunpack.c.l.b16 %v135
    %v1277 = vunpack.c.h.b16 %v135
    %v1278 = vunpack.c.l.b16 %v136
    %v1279 = vunpack.c.h.b16 %v136
    %v1280 = vunpack.c.l.b16 %v137
    %v1281 = vunpack.c.h.b16 %v137
    %v1282 = vunpack.c.l.b16 %v138
    %v1283 = vunpack.c.h.b16 %v138
    %v1284 = vunpack.c.l.b16 %v139
    %v1285 = vunpack.c.h.b16 %v139
    %v1286 = vunpack.c.l.b16 %v140
    %v1287 = vunpack.c.h.b16 %v140
    %v1288 = vunpack.c.l.b16 %v141
    %v1289 = vunpack.c.h.b16 %v141
    %v1290 = vunpack.c.l.b16 %v142
    %v1291 = vunpack.c.h.b16 %v142
    %v1292 = vunpack.c.l.b16 %v143
    %v1293 = vunpack.c.h.b16 %v143
    %v1294 = vunpack.c.l.b16 %v144
    %v1295 = vunpack.c.h.b16 %v144
    %v1296 = vunpack.c.l.b16 %v145
    %v1297 = vunpack.c.h.b16 %v145
    %v1298 = vunpack.c.l.b16 %v146
    %v1299 = vunpack.c.h.b16 %v146
    %v1300 = vunpack.c.l.b16 %v147
    %v1301 = vunpack.c.h.b16 %v147
    %v1302 = vunpack.c.l.b16 %v148
    %v1303 = vunpack.c.h.b16 %v148
    %v1304 = vunpack.c.l.b16 %v149
    %v1305 = vunpack.c.h.b16 %v149
    %v1306 = vunpack.c.l.b16 %v150
    %v1307 = vunpack.c.h.b16 %v150
    %v1308 = vunpack.c.l.b16 %v151
    %v1309 = vunpack.c.h.b16 %v151
    %v1310 = vunpack.c.l.b16 %v152
    %v1311 = vunpack.c.h.b16 %v152
    %v1312 = vunpack.c.l.b16 %v153
    %v1313 = vunpack.c.h.b16 %v153
    %v1314 = vunpack.c.l.b16 %v154
    %v1315 = vunpack.c.h.b16 %v154
    %v1316 = vunpack.c.l.b16 %v155
    %v1317 = vunpack.c.h.b16 %v155
    %v1318 = vunpack.c.l.b16 %v156
    %v1319 = vunpack.c.h.b16 %v156
    %v1320 = vunpack.c.l.b16 %v157
    %v1321 = vunpack.c.h.b16 %v157
    %v1322 = vunpack.c.l.b16 %v158
    %v1323 = vunpack.c.h.b16 %v158
    %v1324 = vunpack.c.l.b16 %v159
    %v1325 = vunpack.c.h.b16 %v159
    %v1326 = vunpack.c.l.b16 %v160
    %v1327 = vunpack.c.h.b16 %v160
    %v1328 = vunpack.c.l.b16 %v161
    %v1329 = vunpack.c.h.b16 %v161
    %v1330 = vunpack.c.l.b16 %v162
    %v1331 = vunpack.c.h.b16 %v162
    %v1332 = vunpack.c.l.b16 %v163
    %v1333 = vunpack.c.h.b16 %v163
    %v1334 = vunpack.c.l.b16 %v164
    %v1335 = vunpack.c.h.b16 %v164
    %v1336 = vunpack.c.l.b16 %v165
    %v1337 = vunpack.c.h.b16 %v165
    %v1338 = vunpack.c.l.b16 %v166
    %v1339 = vunpack.c.h.b16 %v166
    %v1340 = vunpack.c.l.b16 %v167
    %v1341 = vunpack.c.h.b16 %v167
    %v1342 = vunpack.c.l.b16 %v168
    %v1343 = vunpack.c.h.b16 %v168
    %v1344 = vunpack.c.l.b16 %v169
    %v1345 = vunpack.c.h.b16 %v169
    %v1346 = vunpack.c.l.b16 %v170
    %v1347 = vunpack.c.h.b16 %v170
    %v1348 = vunpack.c.l.b16 %v171
    %v1349 = vunpack.c.h.b16 %v171
    %v1350 = vunpack.c.l.b16 %v172
    %v1351 = vunpack.c.h.b16 %v172
    %v1352 = vunpack.c.l.b16 %v173
    %v1353 = vunpack.c.h.b16 %v173
    %v1354 = vunpack.c.l.b16 %v174
    %v1355 = vunpack.c.h.b16 %v174
    %v1356 = vunpack.c.l.b16 %v175
    %v1357 = vunpack.c.h.b16 %v175
    %v1358 = vunpack.c.l.b16 %v176
    %v1359 = vunpack.c.h.b16 %v176
    %v1360 = vunpack.c.l.b16 %v177
    %v1361 = vunpack.c.h.b16 %v177
    %v1362 = vunpack.c.l.b16 %v178
    %v1363 = vunpack.c.h.b16 %v178
    %v1364 = vunpack.c.l.b16 %v179
    %v1365 = vunpack.c.h.b16 %v179
    %v1366 = vunpack.c.l.b16 %v180
    %v1367 = vunpack.c.h.b16 %v180
    %v1368 = vunpack.c.l.b16 %v181
    %v1369 = vunpack.c.h.b16 %v181
    %v1370 = vunpack.c.l.b16 %v182
    %v1371 = vunpack.c.h.b16 %v182
    %v1372 = vunpack.c.l.b16 %v183
    %v1373 = vunpack.c.h.b16 %v183
    %v1374 = vunpack.c.l.b16 %v184
    %v1375 = vunpack.c.h.b16 %v184
    %v1376 = vunpack.c.l.b16 %v185
    %v1377 = vunpack.c.h.b16 %v185
    %v1378 = vunpack.c.l.b16 %v186
    %v1379 = vunpack.c.h.b16 %v186
    %v1380 = vunpack.c.l.b16 %v187
    %v1381 = vunpack.c.h.b16 %v187
    %v1382 = vunpack.c.l.b16 %v188
    %v1383 = vunpack.c.h.b16 %v188
    %v1384 = vunpack.c.l.b16 %v189
    %v1385 = vunpack.c.h.b16 %v189
    %v1386 = vunpack.c.l.b16 %v190
    %v1387 = vunpack.c.h.b16 %v190
    %v1388 = vunpack.c.l.b16 %v191
    %v1389 = vunpack.c.h.b16 %v191
    %v1390 = vunpack.c.l.b16 %v192
    %v1391 = vunpack.c.h.b16 %v192
    %v1392 = vunpack.c.l.b16 %v193
    %v1393 = vunpack.c.h.b16 %v193
    %v1394 = vunpack.c.l.b16 %v194
    %v1395 = vunpack.c.h.b16 %v194
    %v1396 = vunpack.c.l.b16 %v195
    %v1397 = vunpack.c.h.b16 %v195
    %v1398 = vunpack.c.l.b16 %v196
    %v1399 = vunpack.c.h.b16 %v196
    %v1400 = vunpack.c.l.b16 %v197
    %v1401 = vunpack.c.h.b16 %v197
    %v1402 = vunpack.c.l.b16 %v198
    %v1403 = vunpack.c.h.b16 %v198
    %v1404 = vunpack.c.l.b16 %v199
    %v1405 = vunpack.c.h.b16 %v199
    %v1406 = vunpack.c.l.b16 %v200
    %v1407 = vunpack.c.h.b16 %v200
    %v1408 = vunpack.c.l.b16 %v201
    %v1409 = vunpack.c.h.b16 %v201
    %v1410 = vunpack.c.l.b16 %v202
    %v1411 = vunpack.c.h.b16 %v202
    %v1412 = vunpack.c.l.b16 %v203
    %v1413 = vunpack.c.h.b16 %v203
    %v1414 = vunpack.c.l.b16 %v204
    %v1415 = vunpack.c.h.b16 %v204
    %v1416 = vunpack.c.l.b16 %v205
    %v1417 = vunpack.c.h.b16 %v205
    %v1418 = vunpack.c.l.b16 %v206
    %v1419 = vunpack.c.h.b16 %v206
    %v1420 = vunpack.c.l.b16 %v207
    %v1421 = vunpack.c.h.b16 %v207
    %v1422 = vunpack.c.l.b16 %v208
    %v1423 = vunpack.c.h.b16 %v208
    %v1424 = vunpack.c.l.b16 %v209
    %v1425 = vunpack.c.h.b16 %v209
    %v1426 = vunpack.c.l.b16 %v210
    %v1427 = vunpack.c.h.b16 %v210
    %v1428 = vunpack.c.l.b16 %v211
    %v1429 = vunpack.c.h.b16 %v211
    %v1430 = vunpack.c.l.b16 %v212
    %v1431 = vunpack.c.h.b16 %v212
    %v1432 = vunpack.c.l.b16 %v213
    %v1433 = vunpack.c.h.b16 %v213
    %v1434 = vunpack.c.l.b16 %v214
    %v1435 = vunpack.c.h.b16 %v214
    %v1436 = vunpack.c.l.b16 %v215
    %v1437 = vunpack.c.h.b16 %v215
    %v1438 = vunpack.c.l.b16 %v216
    %v1439 = vunpack.c.h.b16 %v216
    %v1440 = vunpack.c.l.b16 %v217
    %v1441 = vunpack.c.h.b16 %v217
    %v1442 = vunpack.c.l.b16 %v218
    %v1443 = vunpack.c.h.b16 %v218
    %v1444 = vunpack.c.l.b16 %v219
    %v1445 = vunpack.c.h.b16 %v219
    %v1446 = vunpack.c.l.b16 %v220
    %v1447 = vunpack.c.h.b16 %v220
    %v1448 = vunpack.c.l.b16 %v221
    %v1449 = vunpack.c.h.b16 %v221
    %v1450 = vunpack.c.l.b16 %v222
    %v1451 = vunpack.c.h.b16 %v222
    %v1452 = vunpack.c.l.b16 %v223
    %v1453 = vunpack.c.h.b16 %v223
    %v1454 = vunpack.c.l.b16 %v224
    %v1455 = vunpack.c.h.b16 %v224
    %v1456 = vunpack.c.l.b16 %v225
    %v1457 = vunpack.c.h.b16 %v225
    %v1458 = vunpack.c.l.b16 %v226
    %v1459 = vunpack.c.h.b16 %v226
    %v1460 = vunpack.c.l.b16 %v227
    %v1461 = vunpack.c.h.b16 %v227
    %v1462 = vunpack.c.l.b16 %v228
    %v1463 = vunpack.c.h.b16 %v228
    %v1464 = vunpack.c.l.b16 %v229
    %v1465 = vunpack.c.h.b16 %v229
    %v1466 = vunpack.c.l.b16 %v230
    %v1467 = vunpack.c.h.b16 %v230
    %v1468 = vunpack.c.l.b16 %v231
    %v1469 = vunpack.c.h.b16 %v231
    %v1470 = vunpack.c.l.b16 %v232
    %v1471 = vunpack.c.h.b16 %v232
    %v1472 = vunpack.c.l.b16 %v233
    %v1473 = vunpack.c.h.b16 %v233
    %v1474 = vunpack.c.l.b16 %v234
    %v1475 = vunpack.c.h.b16 %v234
    %v1476 = vunpack.c.l.b16 %v235
    %v1477 = vunpack.c.h.b16 %v235
    %v1478 = vunpack.c.l.b16 %v236
    %v1479 = vunpack.c.h.b16 %v236
    %v1480 = vunpack.c.l.b16 %v237
    %v1481 = vunpack.c.h.b16 %v237
    %v1482 = vunpack.c.l.b16 %v238
    %v1483 = vunpack.c.h.b16 %v238
    %v1484 = vunpack.c.l.b16 %v239
    %v1485 = vunpack.c.h.b16 %v239
    %v1486 = vunpack.c.l.b16 %v240
    %v1487 = vunpack.c.h.b16 %v240
    %v1488 = vunpack.c.l.b16 %v241
    %v1489 = vunpack.c.h.b16 %v241
    %v1490 = vunpack.c.l.b16 %v242
    %v1491 = vunpack.c.h.b16 %v242
    %v1492 = vunpack.c.l.b16 %v243
    %v1493 = vunpack.c.h.b16 %v243
    %v1494 = vunpack.c.l.b16 %v244
    %v1495 = vunpack.c.h.b16 %v244
    %v1496 = vunpack.c.l.b16 %v245
    %v1497 = vunpack.c.h.b16 %v245
    %v1498 = vunpack.c.l.b16 %v246
    %v1499 = vunpack.c.h.b16 %v246
    %v1500 = vunpack.c.l.b16 %v247
    %v1501 = vunpack.c.h.b16 %v247
    %v1502 = vunpack.c.l.b16 %v248
    %v1503 = vunpack.c.h.b16 %v248
    %v1504 = vunpack.c.l.b16 %v249
    %v1505 = vunpack.c.h.b16 %v249
    %v1506 = vunpack.c.l.b16 %v250
    %v1507 = vunpack.c.h.b16 %v250
    %v1508 = vunpack.c.l.b16 %v251
    %v1509 = vunpack.c.h.b16 %v251
    %v1510 = vunpack.c.l.b16 %v252
    %v1511 = vunpack.c.h.b16 %v252
    %v1512 = vunpack.c.l.b16 %v253
    %v1513 = vunpack.c.h.b16 %v253
    %v1514 = vunpack.c.l.b16 %v254
    %v1515 = vunpack.c.h.b16 %v254
    %v1516 = vunpack.c.l.b16 %v255
    %v1517 = vunpack.c.h.b16 %v255
    %v1518 = vunpack.c.l.b16 %v256
    %v1519 = vunpack.c.h.b16 %v256
    %v1520 = vunpack.c.l.b16 %v257
    %v1521 = vunpack.c.h.b16 %v257
    %v1522 = vunpack.c.l.b16 %v258
    %v1523 = vunpack.c.h.b16 %v258
    %v1524 = vunpack.c.l.b16 %v259
    %v1525 = vunpack.c.h.b16 %v259
    %v1526 = vunpack.c.l.b16 %v260
    %v1527 = vunpack.c.h.b16 %v260
    %v1528 = vunpack.c.l.b16 %v261
    %v1529 = vunpack.c.h.b16 %v261
    %v1530 = vunpack.c.l.b16 %v262
    %v1531 = vunpack.c.h.b16 %v262
    %v1532 = vunpack.c.l.b16 %v263
    %v1533 = vunpack.c.h.b16 %v263
    %v1534 = vunpack.c.l.b16 %v264
    %v1535 = vunpack.c.h.b16 %v264
    %v1536 = vunpack.c.l.b16 %v265
    %v1537 = vunpack.c.h.b16 %v265
    %v1538 = vunpack.c.l.b16 %v266
    %v1539 = vunpack.c.h.b16 %v266
    %v1540 = vunpack.c.l.b16 %v267
    %v1541 = vunpack.c.h.b16 %v267
    %v1542 = vunpack.c.l.b16 %v268
    %v1543 = vunpack.c.h.b16 %v268
    %v1544 = vunpack.c.l.b16 %v269
    %v1545 = vunpack.c.h.b16 %v269
    %v1546 = vunpack.c.l.b16 %v270
    %v1547 = vunpack.c.h.b16 %v270
    %v1548 = vunpack.c.l.b16 %v271
    %v1549 = vunpack.c.h.b16 %v271
    %v1550 = vunpack.c.l.b16 %v272
    %v1551 = vunpack.c.h.b16 %v272
    %v1552 = vunpack.c.l.b16 %v273
    %v1553 = vunpack.c.h.b16 %v273
    %v1554 = vunpack.c.l.b16 %v274
    %v1555 = vunpack.c.h.b16 %v274
    %v1556 = vunpack.c.l.b16 %v275
    %v1557 = vunpack.c.h.b16 %v275
    %v1558 = vunpack.c.l.b16 %v276
    %v1559 = vunpack.c.h.b16 %v276
    %v1560 = vunpack.c.l.b16 %v277
    %v1561 = vunpack.c.h.b16 %v277
    %v1562 = vunpack.c.l.b16 %v278
    %v1563 = vunpack.c.h.b16 %v278
    %v1564 = vunpack.c.l.b16 %v279
    %v1565 = vunpack.c.h.b16 %v279
    %v1566 = vunpack.c.l.b16 %v280
    %v1567 = vunpack.c.h.b16 %v280
    %v1568 = vunpack.c.l.b16 %v281
    %v1569 = vunpack.c.h.b16 %v281
    %v1570 = vunpack.c.l.b16 %v282
    %v1571 = vunpack.c.h.b16 %v282
    %v1572 = vunpack.c.l.b16 %v283
    %v1573 = vunpack.c.h.b16 %v283
    %v1574 = vunpack.c.l.b16 %v284
    %v1575 = vunpack.c.h.b16 %v284
    %v1576 = vunpack.c.l.b16 %v285
    %v1577 = vunpack.c.h.b16 %v285
    %v1578 = vunpack.c.l.b16 %v286
    %v1579 = vunpack.c.h.b16 %v286
    %v1580 = vunpack.c.l.b16 %v287
    %v1581 = vunpack.c.h.b16 %v287
    %v1582 = vunpack.c.l.b16 %v288
    %v1583 = vunpack.c.h.b16 %v288
    %v1584 = vunpack.c.l.b16 %v289
    %v1585 = vunpack.c.h.b16 %v289
    %v1586 = vunpack.c.l.b16 %v290
    %v1587 = vunpack.c.h.b16 %v290
    %v1588 = vunpack.c.l.b16 %v291
    %v1589 = vunpack.c.h.b16 %v291
    %v1590 = vunpack.c.l.b16 %v292
    %v1591 = vunpack.c.h.b16 %v292
    %v1592 = vunpack.c.l.b16 %v293
    %v1593 = vunpack.c.h.b16 %v293
    %v1594 = vunpack.c.l.b16 %v294
    %v1595 = vunpack.c.h.b16 %v294
    %v1596 = vunpack.c.l.b16 %v295
    %v1597 = vunpack.c.h.b16 %v295
    %v1598 = vunpack.c.l.b16 %v296
    %v1599 = vunpack.c.h.b16 %v296
    %v1600 = vunpack.c.l.b16 %v297
    %v1601 = vunpack.c.h.b16 %v297
    %v1602 = vunpack.c.l.b16 %v298
    %v1603 = vunpack.c.h.b16 %v298
    %v1604 = vunpack.c.l.b16 %v299
    %v1605 = vunpack.c.h.b16 %v299
    %v1606 = vunpack.c.l.b16 %v300
    %v1607 = vunpack.c.h.b16 %v300
    %v1608 = vunpack.c.l.b16 %v301
    %v1609 = vunpack.c.h.b16 %v301
    %v1610 = vunpack.c.l.b16 %v302
    %v1611 = vunpack.c.h.b16 %v302
    %v1612 = vunpack.c.l.b16 %v303
    %v1613 = vunpack.c.h.b16 %v303
    %v1614 = vunpack.c.l.b16 %v304
    %v1615 = vunpack.c.h.b16 %v304
    %v1616 = vunpack.c.l.b16 %v305
    %v1617 = vunpack.c.h.b16 %v305
    %v1618 = vunpack.c.l.b16 %v306
    %v1619 = vunpack.c.h.b16 %v306
    %v1620 = vunpack.c.l.b16 %v307
    %v1621 = vunpack.c.h.b16 %v307
    %v1622 = vunpack.c.l.b16 %v308
    %v1623 = vunpack.c.h.b16 %v308
    %v1624 = vunpack.c.l.b16 %v309
    %v1625 = vunpack.c.h.b16 %v309
    %v1626 = vunpack.c.l.b16 %v310
    %v1627 = vunpack.c.h.b16 %v310
    %v1628 = vunpack.c.l.b16 %v311
    %v1629 = vunpack.c.h.b16 %v311
    %v1630 = vunpack.c.l.b16 %v312
    %v1631 = vunpack.c.h.b16 %v312
    %v1632 = vunpack.c.l.b16 %v313
    %v1633 = vunpack.c.h.b16 %v313
    %v1634 = vunpack.c.l.b16 %v314
    %v1635 = vunpack.c.h.b16 %v314
    %v1636 = vunpack.c.l.b16 %v315
    %v1637 = vunpack.c.h.b16 %v315
    %v1638 = vunpack.c.l.b16 %v316
    %v1639 = vunpack.c.h.b16 %v316
    %v1640 = vunpack.c.l.b16 %v317
    %v1641 = vunpack.c.h.b16 %v317
    %v1642 = vunpack.c.l.b16 %v318
    %v1643 = vunpack.c.h.b16 %v318
    %v1644 = vunpack.c.l.b16 %v319
    %v1645 = vunpack.c.h.b16 %v319
    %v1646 = vunpack.c.l.b16 %v320
    %v1647 = vunpack.c.h.b16 %v320
    %v1648 = vunpack.c.l.b16 %v321
    %v1649 = vunpack.c.h.b16 %v321
    %v1650 = vunpack.c.l.b16 %v322
    %v1651 = vunpack.c.h.b16 %v322
    %v1652 = vunpack.c.l.b16 %v323
    %v1653 = vunpack.c.h.b16 %v323
    %v1654 = vunpack.c.l.b16 %v324
    %v1655 = vunpack.c.h.b16 %v324
    %v1656 = vunpack.c.l.b16 %v325
    %v1657 = vunpack.c.h.b16 %v325
    %v1658 = vunpack.c.l.b16 %v326
    %v1659 = vunpack.c.h.b16 %v326
    %v1660 = vunpack.c.l.b16 %v327
    %v1661 = vunpack.c.h.b16 %v327
    %v1662 = vunpack.c.l.b16 %v328
    %v1663 = vunpack.c.h.b16 %v328
    %v1664 = vunpack.c.l.b16 %v329
    %v1665 = vunpack.c.h.b16 %v329
    %v1666 = vunpack.c.l.b16 %v330
    %v1667 = vunpack.c.h.b16 %v330
    %v1668 = vunpack.c.l.b16 %v331
    %v1669 = vunpack.c.h.b16 %v331
    %v1670 = vunpack.c.l.b16 %v332
    %v1671 = vunpack.c.h.b16 %v332
    %v1672 = vunpack.c.l.b16 %v333
    %v1673 = vunpack.c.h.b16 %v333
    %v1674 = vunpack.c.l.b16 %v334
    %v1675 = vunpack.c.h.b16 %v334
    %v1676 = vunpack.c.l.b16 %v335
    %v1677 = vunpack.c.h.b16 %v335
    %v1678 = vunpack.c.l.b16 %v336
    %v1679 = vunpack.c.h.b16 %v336
    %v1680 = vunpack.c.l.b16 %v337
    %v1681 = vunpack.c.h.b16 %v337
    %v1682 = vunpack.c.l.b16 %v338
    %v1683 = vunpack.c.h.b16 %v338
    %v1684 = vunpack.c.l.b16 %v339
    %v1685 = vunpack.c.h.b16 %v339
    %v1686 = vunpack.c.l.b16 %v340
    %v1687 = vunpack.c.h.b16 %v340
    %v1688 = vunpack.c.l.b16 %v341
    %v1689 = vunpack.c.h.b16 %v341
    %v1690 = vunpack.c.l.b16 %v342
    %v1691 = vunpack.c.h.b16 %v342
    %v1692 = vunpack.c.l.b16 %v343
    %v1693 = vunpack.c.h.b16 %v343
    %v1694 = vunpack.c.l.b16 %v344
    %v1695 = vunpack.c.h.b16 %v344
    %v1696 = vunpack.c.l.b16 %v345
    %v1697 = vunpack.c.h.b16 %v345
    %v1698 = vunpack.c.l.b16 %v346
    %v1699 = vunpack.c.h.b16 %v346
    %v1700 = vunpack.c.l.b16 %v347
    %v1701 = vunpack.c.h.b16 %v347
    %v1702 = vunpack.c.l.b16 %v348
    %v1703 = vunpack.c.h.b16 %v348
    %v1704 = vunpack.c.l.b16 %v349
    %v1705 = vunpack.c.h.b16 %v349
    %v1706 = vunpack.c.l.b16 %v350
    %v1707 = vunpack.c.h.b16 %v350
    %v1708 = vunpack.c.l.b16 %v351
    %v1709 = vunpack.c.h.b16 %v351
    %v1710 = vunpack.c.l.b16 %v352
    %v1711 = vunpack.c.h.b16 %v352
    %v1712 = vunpack.c.l.b16 %v353
    %v1713 = vunpack.c.h.b16 %v353
    %v1714 = vunpack.c.l.b16 %v354
    %v1715 = vunpack.c.h.b16 %v354
    %v1716 = vunpack.c.l.b16 %v355
    %v1717 = vunpack.c.h.b16 %v355
    %v1718 = vunpack.c.l.b16 %v356
    %v1719 = vunpack.c.h.b16 %v356
    %v1720 = vunpack.c.l.b16 %v357
    %v1721 = vunpack.c.h.b16 %v357
    %v1722 = vunpack.c.l.b16 %v358
    %v1723 = vunpack.c.h.b16 %v358
    %v1724 = vunpack.c.l.b16 %v359
    %v1725 = vunpack.c.h.b16 %v359
    %v1726 = vunpack.c.l.b16 %v360
    %v1727 = vunpack.c.h.b16 %v360
    %v1728 = vunpack.c.l.b16 %v361
    %v1729 = vunpack.c.h.b16 %v361
    %v1730 = vunpack.c.l.b16 %v362
    %v1731 = vunpack.c.h.b16 %v362
    %v1732 = vunpack.c.l.b16 %v363
    %v1733 = vunpack.c.h.b16 %v363
    %v1734 = vunpack.c.l.b16 %v364
    %v1735 = vunpack.c.h.b16 %v364
    %v1736 = vunpack.c.l.b16 %v365
    %v1737 = vunpack.c.h.b16 %v365
    %v1738 = vunpack.c.l.b16 %v366
    %v1739 = vunpack.c.h.b16 %v366
    %v1740 = vunpack.c.l.b16 %v367
    %v1741 = vunpack.c.h.b16 %v367
    %v1742 = vunpack.c.l.b16 %v368
    %v1743 = vunpack.c.h.b16 %v368
    %v1744 = vunpack.c.l.b16 %v369
    %v1745 = vunpack.c.h.b16 %v369
    %v1746 = vunpack.c.l.b16 %v370
    %v1747 = vunpack.c.h.b16 %v370
    %v1748 = vunpack.c.l.b16 %v371
    %v1749 = vunpack.c.h.b16 %v371
    %v1750 = vunpack.c.l.b16 %v372
    %v1751 = vunpack.c.h.b16 %v372
    %v1752 = vunpack.c.l.b16 %v373
    %v1753 = vunpack.c.h.b16 %v373
    %v1754 = vunpack.c.l.b16 %v374
    %v1755 = vunpack.c.h.b16 %v374
    %v1756 = vunpack.c.l.b16 %v375
    %v1757 = vunpack.c.h.b16 %v375
    %v1758 = vunpack.c.l.b16 %v376
    %v1759 = vunpack.c.h.b16 %v376
    %v1760 = vunpack.c.l.b16 %v377
    %v1761 = vunpack.c.h.b16 %v377
    %v1762 = vunpack.c.l.b16 %v378
    %v1763 = vunpack.c.h.b16 %v378
    %v1764 = vunpack.c.l.b16 %v379
    %v1765 = vunpack.c.h.b16 %v379
    %v1766 = vunpack.c.l.b16 %v380
    %v1767 = vunpack.c.h.b16 %v380
    %v1768 = vunpack.c.l.b16 %v381
    %v1769 = vunpack.c.h.b16 %v381
    %v1770 = vunpack.c.l.b16 %v382
    %v1771 = vunpack.c.h.b16 %v382
    %v1772 = vunpack.c.l.b16 %v383
    %v1773 = vunpack.c.h.b16 %v383
    %v1774 = vunpack.c.l.b16 %v384
    %v1775 = vunpack.c.h.b16 %v384
    %v1776 = vunpack.c.l.b16 %v385
    %v1777 = vunpack.c.h.b16 %v385
    %v1778 = vunpack.c.l.b16 %v386
    %v1779 = vunpack.c.h.b16 %v386
    %v1780 = vunpack.c.l.b16 %v387
    %v1781 = vunpack.c.h.b16 %v387
    %v1782 = vunpack.c.l.b16 %v388
    %v1783 = vunpack.c.h.b16 %v388
    %v1784 = vunpack.c.l.b16 %v389
    %v1785 = vunpack.c.h.b16 %v389
    %v1786 = vunpack.c.l.b16 %v390
    %v1787 = vunpack.c.h.b16 %v390
    %v1788 = vunpack.c.l.b16 %v391
    %v1789 = vunpack.c.h.b16 %v391
    %v1790 = vunpack.c.l.b16 %v392
    %v1791 = vunpack.c.h.b16 %v392
    %v1792 = vunpack.c.l.b16 %v393
    %v1793 = vunpack.c.h.b16 %v393
    %v1794 = vunpack.c.l.b16 %v394
    %v1795 = vunpack.c.h.b16 %v394
    %v1796 = vunpack.c.l.b16 %v395
    %v1797 = vunpack.c.h.b16 %v395
    %v1798 = vunpack.c.l.b16 %v396
    %v1799 = vunpack.c.h.b16 %v396
    %v1800 = vunpack.c.l.b16 %v397
    %v1801 = vunpack.c.h.b16 %v397
    %v1802 = vunpack.c.l.b16 %v398
    %v1803 = vunpack.c.h.b16 %v398
    %v1804 = vunpack.c.l.b16 %v399
    %v1805 = vunpack.c.h.b16 %v399
    %v1806 = vunpack.c.l.b16 %v400
    %v1807 = vunpack.c.h.b16 %v400
    %v1808 = vunpack.c.l.b16 %v401
    %v1809 = vunpack.c.h.b16 %v401
    %v1810 = vunpack.c.l.b16 %v402
    %v1811 = vunpack.c.h.b16 %v402
    %v1812 = vunpack.c.l.b16 %v403
    %v1813 = vunpack.c.h.b16 %v403
    %v1814 = vunpack.c.l.b16 %v404
    %v1815 = vunpack.c.h.b16 %v404
    %v1816 = vunpack.c.l.b16 %v405
    %v1817 = vunpack.c.h.b16 %v405
    %v1818 = vunpack.c.l.b16 %v406
    %v1819 = vunpack.c.h.b16 %v406
    %v1820 = vunpack.c.l.b16 %v407
    %v1821 = vunpack.c.h.b16 %v407
    %v1822 = vunpack.c.l.b16 %v408
    %v1823 = vunpack.c.h.b16 %v408
    %v1824 = vunpack.c.l.b16 %v409
    %v1825 = vunpack.c.h.b16 %v409
    %v1826 = vunpack.c.l.b16 %v410
    %v1827 = vunpack.c.h.b16 %v410
    %v1828 = vunpack.c.l.b16 %v411
    %v1829 = vunpack.c.h.b16 %v411
    %v1830 = vunpack.c.l.b16 %v412
    %v1831 = vunpack.c.h.b16 %v412
    %v1832 = vunpack.c.l.b16 %v413
    %v1833 = vunpack.c.h.b16 %v413
    %v1834 = vunpack.c.l.b16 %v414
    %v1835 = vunpack.c.h.b16 %v414
    %v1836 = vunpack.c.l.b16 %v415
    %v1837 = vunpack.c.h.b16 %v415
    %v1838 = vunpack.c.l.b16 %v416
    %v1839 = vunpack.c.h.b16 %v416
    %v1840 = vunpack.c.l.b16 %v417
    %v1841 = vunpack.c.h.b16 %v417
    %v1842 = vunpack.c.l.b16 %v418
    %v1843 = vunpack.c.h.b16 %v418
    %v1844 = vunpack.c.l.b16 %v419
    %v1845 = vunpack.c.h.b16 %v419
    %v1846 = vunpack.c.l.b16 %v420
    %v1847 = vunpack.c.h.b16 %v420
    %v1848 = vunpack.c.l.b16 %v421
    %v1849 = vunpack.c.h.b16 %v421
    %v1850 = vunpack.c.l.b16 %v422
    %v1851 = vunpack.c.h.b16 %v422
    %v1852 = vunpack.c.l.b16 %v423
    %v1853 = vunpack.c.h.b16 %v423
    %v1854 = vunpack.c.l.b16 %v424
    %v1855 = vunpack.c.h.b16 %v424
    %v1856 = vunpack.c.l.b16 %v425
    %v1857 = vunpack.c.h.b16 %v425
    %v1858 = vunpack.c.l.b16 %v426
    %v1859 = vunpack.c.h.b16 %v426
    %v1860 = vunpack.c.l.b16 %v427
    %v1861 = vunpack.c.h.b16 %v427
    %v1862 = vunpack.c.l.b16 %v428
    %v1863 = vunpack.c.h.b16 %v428
    %v1864 = vunpack.c.l.b16 %v429
    %v1865 = vunpack.c.h.b16 %v429
    %v1866 = vunpack.c.l.b16 %v430
    %v1867 = vunpack.c.h.b16 %v430
    %v1868 = vunpack.c.l.b16 %v431
    %v1869 = vunpack.c.h.b16 %v431
    %v1870 = vunpack.c.l.b16 %v432
    %v1871 = vunpack.c.h.b16 %v432
    %v1872 = vunpack.c.l.b16 %v433
    %v1873 = vunpack.c.h.b16 %v433
    %v1874 = vunpack.c.l.b16 %v434
    %v1875 = vunpack.c.h.b16 %v434
    %v1876 = vunpack.c.l.b16 %v435
    %v1877 = vunpack.c.h.b16 %v435
    %v1878 = vunpack.c.l.b16 %v436
    %v1879 = vunpack.c.h.b16 %v436
    %v1880 = vunpack.c.l.b16 %v437
    %v1881 = vunpack.c.h.b16 %v437
    %v1882 = vunpack.c.l.b16 %v438
    %v1883 = vunpack.c.h.b16 %v438
    %v1884 = vunpack.c.l.b16 %v439
    %v1885 = vunpack.c.h.b16 %v439
    %v1886 = vunpack.c.l.b16 %v440
    %v1887 = vunpack.c.h.b16 %v440
    %v1888 = vunpack.c.l.b16 %v441
    %v1889 = vunpack.c.h.b16 %v441
    %v1890 = vunpack.c.l.b16 %v442
    %v1891 = vunpack.c.h.b16 %v442
    %v1892 = vunpack.c.l.b16 %v443
    %v1893 = vunpack.c.h.b16 %v443
    %v1894 = vunpack.c.l.b16 %v444
    %v1895 = vunpack.c.h.b16 %v444
    %v1896 = vunpack.c.l.b16 %v445
    %v1897 = vunpack.c.h.b16 %v445
    %v1898 = vunpack.c.l.b16 %v446
    %v1899 = vunpack.c.h.b16 %v446
    %v1900 = vunpack.c.l.b16 %v447
    %v1901 = vunpack.c.h.b16 %v447
    %v1902 = vunpack.c.l.b16 %v448
    %v1903 = vunpack.c.h.b16 %v448
    %v1904 = vunpack.c.l.b16 %v449
    %v1905 = vunpack.c.h.b16 %v449
    %v1906 = vunpack.c.l.b16 %v450
    %v1907 = vunpack.c.h.b16 %v450
    %v1908 = vunpack.c.l.b16 %v451
    %v1909 = vunpack.c.h.b16 %v451
    %v1910 = vunpack.c.l.b16 %v452
    %v1911 = vunpack.c.h.b16 %v452
    %v1912 = vunpack.c.l.b16 %v453
    %v1913 = vunpack.c.h.b16 %v453
    %v1914 = vunpack.c.l.b16 %v454
    %v1915 = vunpack.c.h.b16 %v454
    %v1916 = vunpack.c.l.b16 %v455
    %v1917 = vunpack.c.h.b16 %v455
    %v1918 = vunpack.c.l.b16 %v456
    %v1919 = vunpack.c.h.b16 %v456
    %v1920 = vunpack.c.l.b16 %v457
    %v1921 = vunpack.c.h.b16 %v457
    %v1922 = vunpack.c.l.b16 %v458
    %v1923 = vunpack.c.h.b16 %v458
    %v1924 = vunpack.c.l.b16 %v459
    %v1925 = vunpack.c.h.b16 %v459
    %v1926 = vunpack.c.l.b16 %v460
    %v1927 = vunpack.c.h.b16 %v460
    %v1928 = vunpack.c.l.b16 %v461
    %v1929 = vunpack.c.h.b16 %v461
    %v1930 = vunpack.c.l.b16 %v462
    %v1931 = vunpack.c.h.b16 %v462
    %v1932 = vunpack.c.l.b16 %v463
    %v1933 = vunpack.c.h.b16 %v463
    %v1934 = vunpack.c.l.b16 %v464
    %v1935 = vunpack.c.h.b16 %v464
    %v1936 = vunpack.c.l.b16 %v465
    %v1937 = vunpack.c.h.b16 %v465
    %v1938 = vunpack.c.l.b16 %v466
    %v1939 = vunpack.c.h.b16 %v466
    %v1940 = vunpack.c.l.b16 %v467
    %v1941 = vunpack.c.h.b16 %v467
    %v1942 = vunpack.c.l.b16 %v468
    %v1943 = vunpack.c.h.b16 %v468
    %v1944 = vunpack.c.l.b16 %v469
    %v1945 = vunpack.c.h.b16 %v469
    %v1946 = vunpack.c.l.b16 %v470
    %v1947 = vunpack.c.h.b16 %v470
    %v1948 = vunpack.c.l.b16 %v471
    %v1949 = vunpack.c.h.b16 %v471
    %v1950 = vpack.c.b16 %v1058, %v1054
    %v1951 = vpack.c.b16 %v1059, %v1055
    %v1952 = vpack.c.b16 %v1060, %v1056
    %v1953 = vpack.c.b16 %v1061, %v1057
    %v1954 = vpack.c.b16 %v1066, %v1062
    %v1955 = vpack.c.b16 %v1067, %v1063
    %v1956 = vpack.c.b16 %v1068, %v1064
    %v1957 = vpack.c.b16 %v1069, %v1065
    %v1958 = vpack.c.b16 %v1074, %v1070
    %v1959 = vpack.c.b16 %v1075, %v1071
    %v1960 = vpack.c.b16 %v1076, %v1072
    %v1961 = vpack.c.b16 %v1077, %v1073
    %v1962 = vpack.c.b16 %v1082, %v1078
    %v1963 = vpack.c.b16 %v1083, %v1079
    %v1964 = vpack.c.b16 %v1084, %v1080
    %v1965 = vpack.c.b16 %v1085, %v1081
    %v1966 = vpack.c.b16 %v1090, %v1086
    %v1967 = vpack.c.b16 %v1091, %v1087
    %v1968 = vpack.c.b16 %v1092, %v1088
    %v1969 = vpack.c.b16 %v1093, %v1089
    %v1970 = vpack.c.b16 %v1098, %v1094
    %v1971 = vpack.c.b16 %v1099, %v1095
    %v1972 = vpack.c.b16 %v1100, %v1096
    %v1973 = vpack.c.b16 %v1101, %v1097
    %v1974 = vpack.c.b16 %v1106, %v1102
    %v1975 = vpack.c.b16 %v1107, %v1103
    %v1976 = vpack.c.b16 %v1108, %v1104
    %v1977 = vpack.c.b16 %v1109, %v1105
    %v1978 = vpack.c.b16 %v1114, %v1110
    %v1979 = vpack.c.b16 %v1115, %v1111
    %v1980 = vpack.c.b16 %v1116, %v1112
    %v1981 = vpack.c.b16 %v1117, %v1113
    %v1982 = vpack.c.b16 %v1122, %v1118
    %v1983 = vpack.c.b16 %v1123, %v1119
    %v1984 = vpack.c.b16 %v1124, %v1120
    %v1985 = vpack.c.b16 %v1125, %v1121
    %v1986 = vpack.c.b16 %v1130, %v1126
    %v1987 = vpack.c.b16 %v1131, %v1127
    %v1988 = vpack.c.b16 %v1132, %v1128
    %v1989 = vpack.c.b16 %v1133, %v1129
    %v1990 = vpack.c.b16 %v1138, %v1134
    %v1991 = vpack.c.b16 %v1139, %v1135
    %v1992 = vpack.c.b16 %v1140, %v1136
    %v1993 = vpack.c.b16 %v1141, %v1137
    %v1994 = vpack.c.b16 %v1146, %v1142
    %v1995 = vpack.c.b16 %v1147, %v1143
    %v1996 = vpack.c.b16 %v1148, %v1144
    %v1997 = vpack.c.b16 %v1149, %v1145
    %v1998 = vpack.c.b16 %v1154, %v1150
    %v1999 = vpack.c.b16 %v1155, %v1151
    %v2000 = vpack.c.b16 %v1156, %v1152
    %v2001 = vpack.c.b16 %v1157, %v1153
    %v2002 = vpack.c.b16 %v1162, %v1158
    %v2003 = vpack.c.b16 %v1163, %v1159
    %v2004 = vpack.c.b16 %v1164, %v1160
    %v2005 = vpack.c.b16 %v1165, %v1161
    %v2006 = vpack.c.b16 %v1170, %v1166
    %v2007 = vpack.c.b16 %v1171, %v1167
    %v2008 = vpack.c.b16 %v1172, %v1168
    %v2009 = vpack.c.b16 %v1173, %v1169
    %v2010 = vpack.c.b16 %v1178, %v1174
    %v2011 = vpack.c.b16 %v1179, %v1175
    %v2012 = vpack.c.b16 %v1180, %v1176
    %v2013 = vpack.c.b16 %v1181, %v1177
    %v2014 = vpack.c.b16 %v1186, %v1182
    %v2015 = vpack.c.b16 %v1187, %v1183
    %v2016 = vpack.c.b16 %v1188, %v1184
    %v2017 = vpack.c.b16 %v1189, %v1185
    %v2018 = vpack.c.b16 %v1194, %v1190
    %v2019 = vpack.c.b16 %v1195, %v1191
    %v2020 = vpack.c.b16 %v1196, %v1192
    %v2021 = vpack.c.b16 %v1197, %v1193
    %v2022 = vpack.c.b16 %v1202, %v1198
    %v2023 = vpack.c.b16 %v1203, %v1199
    %v2024 = vpack.c.b16 %v1204, %v1200
    %v2025 = vpack.c.b16 %v1205, %v1201
    %v2026 = vpack.c.b16 %v1210, %v1206
    %v2027 = vpack.c.b16 %v1211, %v1207
    %v2028 = vpack.c.b16 %v1212, %v1208
    %v2029 = vpack.c.b16 %v1213, %v1209
    %v2030 = vpack.c.b16 %v1218, %v1214
    %v2031 = vpack.c.b16 %v1219, %v1215
    %v2032 = vpack.c.b16 %v1220, %v1216
    %v2033 = vpack.c.b16 %v1221, %v1217
    %v2034 = vpack.c.b16 %v1226, %v1222
    %v2035 = vpack.c.b16 %v1227, %v1223
    %v2036 = vpack.c.b16 %v1228, %v1224
    %v2037 = vpack.c.b16 %v1229, %v1225
    %v2038 = vpack.c.b16 %v1234, %v1230
    %v2039 = vpack.c.b16 %v1235, %v1231
    %v2040 = vpack.c.b16 %v1236, %v1232
    %v2041 = vpack.c.b16 %v1237, %v1233
    %v2042 = vpack.c.b16 %v1242, %v1238
    %v2043 = vpack.c.b16 %v1243, %v1239
    %v2044 = vpack.c.b16 %v1244, %v1240
    %v2045 = vpack.c.b16 %v1245, %v1241
    %v2046 = vpack.c.b16 %v1250, %v1246
    %v2047 = vpack.c.b16 %v1251, %v1247
    %v2048 = vpack.c.b16 %v1252, %v1248
    %v2049 = vpack.c.b16 %v1253, %v1249
    %v2050 = vpack.c.b16 %v1258, %v1254
    %v2051 = vpack.c.b16 %v1259, %v1255
    %v2052 = vpack.c.b16 %v1260, %v1256
    %v2053 = vpack.c.b16 %v1261, %v1257
    %v2054 = vpack.c.b16 %v1266, %v1262
    %v2055 = vpack.c.b16 %v1267, %v1263
    %v2056 = vpack.c.b16 %v1268, %v1264
    %v2057 = vpack.c.b16 %v1269, %v1265
    %v2058 = vpack.c.b16 %v1274, %v1270
    %v2059 = vpack.c.b16 %v1275, %v1271
    %v2060 = vpack.c.b16 %v1276, %v1272
    %v2061 = vpack.c.b16 %v1277, %v1273
    %v2062 = vpack.c.b16 %v1282, %v1278
    %v2063 = vpack.c.b16 %v1283, %v1279
    %v2064 = vpack.c.b16 %v1284, %v1280
    %v2065 = vpack.c.b16 %v1285, %v1281
    %v2066 = vpack.c.b16 %v1290, %v1286
    %v2067 = vpack.c.b16 %v1291, %v1287
    %v2068 = vpack.c.b16 %v1292, %v1288
    %v2069 = vpack.c.b16 %v1293, %v1289
    %v2070 = vpack.c.b16 %v1298, %v1294
    %v2071 = vpack.c.b16 %v1299, %v1295
    %v2072 = vpack.c.b16 %v1300, %v1296
    %v2073 = vpack.c.b16 %v1301, %v1297
    %v2074 = vpack.c.b16 %v1306, %v1302
    %v2075 = vpack.c.b16 %v1307, %v1303
    %v2076 = vpack.c.b16 %v1308, %v1304
    %v2077 = vpack.c.b16 %v1309, %v1305
    %v2078 = vpack.c.b16 %v1314, %v1310
    %v2079 = vpack.c.b16 %v1315, %v1311
    %v2080 = vpack.c.b16 %v1316, %v1312
    %v2081 = vpack.c.b16 %v1317, %v1313
    %v2082 = vpack.c.b16 %v1322, %v1318
    %v2083 = vpack.c.b16 %v1323, %v1319
    %v2084 = vpack.c.b16 %v1324, %v1320
    %v2085 = vpack.c.b16 %v1325, %v1321
    %v2086 = vpack.c.b16 %v1330, %v1326
    %v2087 = vpack.c.b16 %v1331, %v1327
    %v2088 = vpack.c.b16 %v1332, %v1328
    %v2089 = vpack.c.b16 %v1333, %v1329
    %v2090 = vpack.c.b16 %v1338, %v1334
    %v2091 = vpack.c.b16 %v1339, %v1335
    %v2092 = vpack.c.b16 %v1340, %v1336
    %v2093 = vpack.c.b16 %v1341, %v1337
    %v2094 = vpack.c.b16 %v1346, %v1342
    %v2095 = vpack.c.b16 %v1347, %v1343
    %v2096 = vpack.c.b16 %v1348, %v1344
    %v2097 = vpack.c.b16 %v1349, %v1345
    %v2098 = vpack.c.b16 %v1354, %v1350
    %v2099 = vpack.c.b16 %v1355, %v1351
    %v2100 = vpack.c.b16 %v1356, %v1352
    %v2101 = vpack.c.b16 %v1357, %v1353
    %v2102 = vpack.c.b16 %v1362, %v1358
    %v2103 = vpack.c.b16 %v1363, %v1359
    %v2104 = vpack.c.b16 %v1364, %v1360
    %v2105 = vpack.c.b16 %v1365, %v1361
    %v2106 = vpack.c.b16 %v1370, %v1366
    %v2107 = vpack.c.b16 %v1371, %v1367
    %v2108 = vpack.c.b16 %v1372, %v1368
    %v2109 = vpack.c.b16 %v1373, %v1369
    %v2110 = vpack.c.b16 %v1378, %v1374
    %v2111 = vpack.c.b16 %v1379, %v1375
    %v2112 = vpack.c.b16 %v1380, %v1376
    %v2113 = vpack.c.b16 %v1381, %v1377
    %v2114 = vpack.c.b16 %v1386, %v1382
    %v2115 = vpack.c.b16 %v1387, %v1383
    %v2116 = vpack.c.b16 %v1388, %v1384
    %v2117 = vpack.c.b16 %v1389, %v1385
    %v2118 = vpack.c.b16 %v1394, %v1390
    %v2119 = vpack.c.b16 %v1395, %v1391
    %v2120 = vpack.c.b16 %v1396, %v1392
    %v2121 = vpack.c.b16 %v1397, %v1393
    %v2122 = vpack.c.b16 %v1402, %v1398
    %v2123 = vpack.c.b16 %v1403, %v1399
    %v2124 = vpack.c.b16 %v1404, %v1400
    %v2125 = vpack.c.b16 %v1405, %v1401
    %v2126 = vpack.c.b16 %v1410, %v1406
    %v2127 = vpack.c.b16 %v1411, %v1407
    %v2128 = vpack.c.b16 %v1412, %v1408
    %v2129 = vpack.c.b16 %v1413, %v1409
    %v2130 = vpack.c.b16 %v1418, %v1414
    %v2131 = vpack.c.b16 %v1419, %v1415
    %v2132 = vpack.c.b16 %v1420, %v1416
    %v2133 = vpack.c.b16 %v1421, %v1417
    %v2134 = vpack.c.b16 %v1426, %v1422
    %v2135 = vpack.c.b16 %v1427, %v1423
    %v2136 = vpack.c.b16 %v1428, %v1424
    %v2137 = vpack.c.b16 %v1429, %v1425
    %v2138 = vpack.c.b16 %v1434, %v1430
    %v2139 = vpack.c.b16 %v1435, %v1431
    %v2140 = vpack.c.b16 %v1436, %v1432
    %v2141 = vpack.c.b16 %v1437, %v1433
    %v2142 = vpack.c.b16 %v1442, %v1438
    %v2143 = vpack.c.b16 %v1443, %v1439
    %v2144 = vpack.c.b16 %v1444, %v1440
    %v2145 = vpack.c.b16 %v1445, %v1441
    %v2146 = vpack.c.b16 %v1450, %v1446
    %v2147 = vpack.c.b16 %v1451, %v1447
    %v2148 = vpack.c.b16 %v1452, %v1448
    %v2149 = vpack.c.b16 %v1453, %v1449
    %v2150 = vpack.c.b16 %v1458, %v1454
    %v2151 = vpack.c.b16 %v1459, %v1455
    %v2152 = vpack.c.b16 %v1460, %v1456
    %v2153 = vpack.c.b16 %v1461, %v1457
    %v2154 = vpack.c.b16 %v1466, %v1462
    %v2155 = vpack.c.b16 %v1467, %v1463
    %v2156 = vpack.c.b16 %v1468, %v1464
    %v2157 = vpack.c.b16 %v1469, %v1465
    %v2158 = vpack.c.b16 %v1474, %v1470
    %v2159 = vpack.c.b16 %v1475, %v1471
    %v2160 = vpack.c.b16 %v1476, %v1472
    %v2161 = vpack.c.b16 %v1477, %v1473
    %v2162 = vpack.c.b16 %v1482, %v1478
    %v2163 = vpack.c.b16 %v1483, %v1479
    %v2164 = vpack.c.b16 %v1484, %v1480
    %v2165 = vpack.c.b16 %v1485, %v1481
    %v2166 = vpack.c.b16 %v1490, %v1486
    %v2167 = vpack.c.b16 %v1491, %v1487
    %v2168 = vpack.c.b16 %v1492, %v1488
    %v2169 = vpack.c.b16 %v1493, %v1489
    %v2170 = vpack.c.b16 %v1498, %v1494
    %v2171 = vpack.c.b16 %v1499, %v1495
    %v2172 = vpack.c.b16 %v1500, %v1496
    %v2173 = vpack.c.b16 %v1501, %v1497
    %v2174 = vpack.c.b16 %v1506, %v1502
    %v2175 = vpack.c.b16 %v1507, %v1503
    %v2176 = vpack.c.b16 %v1508, %v1504
    %v2177 = vpack.c.b16 %v1509, %v1505
    %v2178 = vpack.c.b16 %v1514, %v1510
    %v2179 = vpack.c.b16 %v1515, %v1511
    %v2180 = vpack.c.b16 %v1516, %v1512
    %v2181 = vpack.c.b16 %v1517, %v1513
    %v2182 = vpack.c.b16 %v1522, %v1518
    %v2183 = vpack.c.b16 %v1523, %v1519
    %v2184 = vpack.c.b16 %v1524, %v1520
    %v2185 = vpack.c.b16 %v1525, %v1521
    %v2186 = vpack.c.b16 %v1530, %v1526
    %v2187 = vpack.c.b16 %v1531, %v1527
    %v2188 = vpack.c.b16 %v1532, %v1528
    %v2189 = vpack.c.b16 %v1533, %v1529
    %v2190 = vpack.c.b16 %v1538, %v1534
    %v2191 = vpack.c.b16 %v1539, %v1535
    %v2192 = vpack.c.b16 %v1540, %v1536
    %v2193 = vpack.c.b16 %v1541, %v1537
    %v2194 = vpack.c.b16 %v1546, %v1542
    %v2195 = vpack.c.b16 %v1547, %v1543
    %v2196 = vpack.c.b16 %v1548, %v1544
    %v2197 = vpack.c.b16 %v1549, %v1545
    %v2198 = vpack.c.b16 %v1554, %v1550
    %v2199 = vpack.c.b16 %v1555, %v1551
    %v2200 = vpack.c.b16 %v1556, %v1552
    %v2201 = vpack.c.b16 %v1557, %v1553
    %v2202 = vpack.c.b16 %v1562, %v1558
    %v2203 = vpack.c.b16 %v1563, %v1559
    %v2204 = vpack.c.b16 %v1564, %v1560
    %v2205 = vpack.c.b16 %v1565, %v1561
    %v2206 = vpack.c.b16 %v1570, %v1566
    %v2207 = vpack.c.b16 %v1571, %v1567
    %v2208 = vpack.c.b16 %v1572, %v1568
    %v2209 = vpack.c.b16 %v1573, %v1569
    %v2210 = vpack.c.b16 %v1578, %v1574
    %v2211 = vpack.c.b16 %v1579, %v1575
    %v2212 = vpack.c.b16 %v1580, %v1576
    %v2213 = vpack.c.b16 %v1581, %v1577
    %v2214 = vpack.c.b16 %v1586, %v1582
    %v2215 = vpack.c.b16 %v1587, %v1583
    %v2216 = vpack.c.b16 %v1588, %v1584
    %v2217 = vpack.c.b16 %v1589, %v1585
    %v2218 = vpack.c.b16 %v1594, %v1590
    %v2219 = vpack.c.b16 %v1595, %v1591
    %v2220 = vpack.c.b16 %v1596, %v1592
    %v2221 = vpack.c.b16 %v1597, %v1593
    %v2222 = vpack.c.b16 %v1602, %v1598
    %v2223 = vpack.c.b16 %v1603, %v1599
    %v2224 = vpack.c.b16 %v1604, %v1600
    %v2225 = vpack.c.b16 %v1605, %v1601
    %v2226 = vpack.c.b16 %v1610, %v1606
    %v2227 = vpack.c.b16 %v1611, %v1607
    %v2228 = vpack.c.b16 %v1612, %v1608
    %v2229 = vpack.c.b16 %v1613, %v1609
    %v2230 = vpack.c.b16 %v1618, %v1614
    %v2231 = vpack.c.b16 %v1619, %v1615
    %v2232 = vpack.c.b16 %v1620, %v1616
    %v2233 = vpack.c.b16 %v1621, %v1617
    %v2234 = vpack.c.b16 %v1626, %v1622
    %v2235 = vpack.c.b16 %v1627, %v1623
    %v2236 = vpack.c.b16 %v1628, %v1624
    %v2237 = vpack.c.b16 %v1629, %v1625
    %v2238 = vpack.c.b16 %v1634, %v1630
    %v2239 = vpack.c.b16 %v1635, %v1631
    %v2240 = vpack.c.b16 %v1636, %v1632
    %v2241 = vpack.c.b16 %v1637, %v1633
    %v2242 = vpack.c.b16 %v1642, %v1638
    %v2243 = vpack.c.b16 %v1643, %v1639
    %v2244 = vpack.c.b16 %v1644, %v1640
    %v2245 = vpack.c.b16 %v1645, %v1641
    %v2246 = vpack.c.b16 %v1650, %v1646
    %v2247 = vpack.c.b16 %v1651, %v1647
    %v2248 = vpack.c.b16 %v1652, %v1648
    %v2249 = vpack.c.b16 %v1653, %v1649
    %v2250 = vpack.c.b16 %v1658, %v1654
    %v2251 = vpack.c.b16 %v1659, %v1655
    %v2252 = vpack.c.b16 %v1660, %v1656
    %v2253 = vpack.c.b16 %v1661, %v1657
    %v2254 = vpack.c.b16 %v1666, %v1662
    %v2255 = vpack.c.b16 %v1667, %v1663
    %v2256 = vpack.c.b16 %v1668, %v1664
    %v2257 = vpack.c.b16 %v1669, %v1665
    %v2258 = vpack.c.b16 %v1674, %v1670
    %v2259 = vpack.c.b16 %v1675, %v1671
    %v2260 = vpack.c.b16 %v1676, %v1672
    %v2261 = vpack.c.b16 %v1677, %v1673
    %v2262 = vpack.c.b16 %v1682, %v1678
    %v2263 = vpack.c.b16 %v1683, %v1679
    %v2264 = vpack.c.b16 %v1684, %v1680
    %v2265 = vpack.c.b16 %v1685, %v1681
    %v2266 = vpack.c.b16 %v1690, %v1686
    %v2267 = vpack.c.b16 %v1691, %v1687
    %v2268 = vpack.c.b16 %v1692, %v1688
    %v2269 = vpack.c.b16 %v1693, %v1689
    %v2270 = vpack.c.b16 %v1698, %v1694
    %v2271 = vpack.c.b16 %v1699, %v1695
    %v2272 = vpack.c.b16 %v1700, %v1696
    %v2273 = vpack.c.b16 %v1701, %v1697
    %v2274 = vpack.c.b16 %v1706, %v1702
    %v2275 = vpack.c.b16 %v1707, %v1703
    %v2276 = vpack.c.b16 %v1708, %v1704
    %v2277 = vpack.c.b16 %v1709, %v1705
    %v2278 = vpack.c.b16 %v1714, %v1710
    %v2279 = vpack.c.b16 %v1715, %v1711
    %v2280 = vpack.c.b16 %v1716, %v1712
    %v2281 = vpack.c.b16 %v1717, %v1713
    %v2282 = vpack.c.b16 %v1722, %v1718
    %v2283 = vpack.c.b16 %v1723, %v1719
    %v2284 = vpack.c.b16 %v1724, %v1720
    %v2285 = vpack.c.b16 %v1725, %v1721
    %v2286 = vpack.c.b16 %v1730, %v1726
    %v2287 = vpack.c.b16 %v1731, %v1727
    %v2288 = vpack.c.b16 %v1732, %v1728
    %v2289 = vpack.c.b16 %v1733, %v1729
    %v2290 = vpack.c.b16 %v1738, %v1734
    %v2291 = vpack.c.b16 %v1739, %v1735
    %v2292 = vpack.c.b16 %v1740, %v1736
    %v2293 = vpack.c.b16 %v1741, %v1737
    %v2294 = vpack.c.b16 %v1746, %v1742
    %v2295 = vpack.c.b16 %v1747, %v1743
    %v2296 = vpack.c.b16 %v1748, %v1744
    %v2297 = vpack.c.b16 %v1749, %v1745
    %v2298 = vpack.c.b16 %v1754, %v1750
    %v2299 = vpack.c.b16 %v1755, %v1751
    %v2300 = vpack.c.b16 %v1756, %v1752
    %v2301 = vpack.c.b16 %v1757, %v1753
    %v2302 = vpack.c.b16 %v1762, %v1758
    %v2303 = vpack.c.b16 %v1763, %v1759
    %v2304 = vpack.c.b16 %v1764, %v1760
    %v2305 = vpack.c.b16 %v1765, %v1761
    %v2306 = vpack.c.b16 %v1770, %v1766
    %v2307 = vpack.c.b16 %v1771, %v1767
    %v2308 = vpack.c.b16 %v1772, %v1768
    %v2309 = vpack.c.b16 %v1773, %v1769
    %v2310 = vpack.c.b16 %v1778, %v1774
    %v2311 = vpack.c.b16 %v1779, %v1775
    %v2312 = vpack.c.b16 %v1780, %v1776
    %v2313 = vpack.c.b16 %v1781, %v1777
    %v2314 = vpack.c.b16 %v1786, %v1782
    %v2315 = vpack.c.b16 %v1787, %v1783
    %v2316 = vpack.c.b16 %v1788, %v1784
    %v2317 = vpack.c.b16 %v1789, %v1785
    %v2318 = vpack.c.b16 %v1794, %v1790
    %v2319 = vpack.c.b16 %v1795, %v1791
    %v2320 = vpack.c.b16 %v1796, %v1792
    %v2321 = vpack.c.b16 %v1797, %v1793
    %v2322 = vpack.c.b16 %v1802, %v1798
    %v2323 = vpack.c.b16 %v1803, %v1799
    %v2324 = vpack.c.b16 %v1804, %v1800
    %v2325 = vpack.c.b16 %v1805, %v1801
    %v2326 = vpack.c.b16 %v1810, %v1806
    %v2327 = vpack.c.b16 %v1811, %v1807
    %v2328 = vpack.c.b16 %v1812, %v1808
    %v2329 = vpack.c.b16 %v1813, %v1809
    %v2330 = vpack.c.b16 %v1818, %v1814
    %v2331 = vpack.c.b16 %v1819, %v1815
    %v2332 = vpack.c.b16 %v1820, %v1816
    %v2333 = vpack.c.b16 %v1821, %v1817
    %v2334 = vpack.c.b16 %v1826, %v1822
    %v2335 = vpack.c.b16 %v1827, %v1823
    %v2336 = vpack.c.b16 %v1828, %v1824
    %v2337 = vpack.c.b16 %v1829, %v1825
    %v2338 = vpack.c.b16 %v1834, %v1830
    %v2339 = vpack.c.b16 %v1835, %v1831
    %v2340 = vpack.c.b16 %v1836, %v1832
    %v2341 = vpack.c.b16 %v1837, %v1833
    %v2342 = vpack.c.b16 %v1842, %v1838
    %v2343 = vpack.c.b16 %v1843, %v1839
    %v2344 = vpack.c.b16 %v1844, %v1840
    %v2345 = vpack.c.b16 %v1845, %v1841
    %v2346 = vpack.c.b16 %v1850, %v1846
    %v2347 = vpack.c.b16 %v1851, %v1847
    %v2348 = vpack.c.b16 %v1852, %v1848
    %v2349 = vpack.c.b16 %v1853, %v1849
    %v2350 = vpack.c.b16 %v1858, %v1854
    %v2351 = vpack.c.b16 %v1859, %v1855
    %v2352 = vpack.c.b16 %v1860, %v1856
    %v2353 = vpack.c.b16 %v1861, %v1857
    %v2354 = vpack.c.b16 %v1866, %v1862
    %v2355 = vpack.c.b16 %v1867, %v1863
    %v2356 = vpack.c.b16 %v1868, %v1864
    %v2357 = vpack.c.b16 %v1869, %v1865
    %v2358 = vpack.c.b16 %v1874, %v1870
    %v2359 = vpack.c.b16 %v1875, %v1871
    %v2360 = vpack.c.b16 %v1876, %v1872
    %v2361 = vpack.c.b16 %v1877, %v1873
    %v2362 = vpack.c.b16 %v1882, %v1878
    %v2363 = vpack.c.b16 %v1883, %v1879
    %v2364 = vpack.c.b16 %v1884, %v1880
    %v2365 = vpack.c.b16 %v1885, %v1881
    %v2366 = vpack.c.b16 %v1890, %v1886
    %v2367 = vpack.c.b16 %v1891, %v1887
    %v2368 = vpack.c.b16 %v1892, %v1888
    %v2369 = vpack.c.b16 %v1893, %v1889
    %v2370 = vpack.c.b16 %v1898, %v1894
    %v2371 = vpack.c.b16 %v1899, %v1895
    %v2372 = vpack.c.b16 %v1900, %v1896
    %v2373 = vpack.c.b16 %v1901, %v1897
    %v2374 = vpack.c.b16 %v1906, %v1902
    %v2375 = vpack.c.b16 %v1907, %v1903
    %v2376 = vpack.c.b16 %v1908, %v1904
    %v2377 = vpack.c.b16 %v1909, %v1905
    %v2378 = vpack.c.b16 %v1914, %v1910
    %v2379 = vpack.c.b16 %v1915, %v1911
    %v2380 = vpack.c.b16 %v1916, %v1912
    %v2381 = vpack.c.b16 %v1917, %v1913
    %v2382 = vpack.c.b16 %v1922, %v1918
    %v2383 = vpack.c.b16 %v1923, %v1919
    %v2384 = vpack.c.b16 %v1924, %v1920
    %v2385 = vpack.c.b16 %v1925, %v1921
    %v2386 = vpack.c.b16 %v1930, %v1926
    %v2387 = vpack.c.b16 %v1931, %v1927
    %v2388 = vpack.c.b16 %v1932, %v1928
    %v2389 = vpack.c.b16 %v1933, %v1929
    %v2390 = vpack.c.b16 %v1938, %v1934
    %v2391 = vpack.c.b16 %v1939, %v1935
    %v2392 = vpack.c.b16 %v1940, %v1936
    %v2393 = vpack.c.b16 %v1941, %v1937
    %v2394 = vpack.c.b16 %v1946, %v1942
    %v2395 = vpack.c.b16 %v1947, %v1943
    %v2396 = vpack.c.b16 %v1948, %v1944
    %v2397 = vpack.c.b16 %v1949, %v1945
    %2846 = vmatprep.subr.bf16.mxu0 %v1979
    %2847 = vmatpush1.bf16.msra.mxu0 %v1978
    %2848 = vmatprep.subr.bf16.mxu0 %v1975
    %2849 = vmatpush1.bf16.msra.mxu0 %v1974
    %2850 = vmatprep.subr.bf16.mxu0 %v1971
    %2851 = vmatpush1.bf16.msra.mxu0 %v1970
    %2852 = vmatprep.subr.bf16.mxu0 %v1967
    %2853 = vmatpush1.bf16.msra.mxu0 %v1966
    %2854 = vmatprep.subr.bf16.mxu0 %v1963
    %2855 = vmatpush1.bf16.msra.mxu0 %v1962
    %2856 = vmatprep.subr.bf16.mxu0 %v1959
    %2857 = vmatpush1.bf16.msra.mxu0 %v1958
    %2858 = vmatprep.subr.bf16.mxu0 %v1955
    %2859 = vmatpush1.bf16.msra.mxu0 %v1954
    %2860 = vmatprep.subr.bf16.mxu0 %v1951
    %2861 = vmatpush1.bf16.msra.mxu0 %v1950
    %2862 = vmatprep.subr.bf16.mxu0 %v2011
    %2863 = vmatpush2.bf16.msra.mxu0 %v2010
    %2864 = vmatprep.subr.bf16.mxu0 %v2007
    %2865 = vmatpush2.bf16.msra.mxu0 %v2006
    %2866 = vmatprep.subr.bf16.mxu0 %v2003
    %2867 = vmatpush2.bf16.msra.mxu0 %v2002
    %2868 = vmatprep.subr.bf16.mxu0 %v1999
    %2869 = vmatpush2.bf16.msra.mxu0 %v1998
    %2870 = vmatprep.subr.bf16.mxu0 %v1995
    %2871 = vmatpush2.bf16.msra.mxu0 %v1994
    %2872 = vmatprep.subr.bf16.mxu0 %v1991
    %2873 = vmatpush2.bf16.msra.mxu0 %v1990
    %2874 = vmatprep.subr.bf16.mxu0 %v1987
    %2875 = vmatpush2.bf16.msra.mxu0 %v1986
    %2876 = vmatprep.subr.bf16.mxu0 %v1983
    %2877 = vmatpush2.bf16.msra.mxu0 %v1982
    %2878 = vmatprep.mubr.bf16.mxu0 %v533
    %2879 = vmatmul.mubr.bf16.gmra.mxu0 %v519
    %v2880 = vpop.f32.mrf.mxu0
    %v2881 = vadd.f32 %v477, %v2880
    %v2882 = vpop.f32.mrf.mxu0
    %v2883 = vadd.f32 %v481, %v2882
    %v2884 = vpop.f32.mrf.mxu0
    %v2885 = vpop.f32.mrf.mxu0
    %2886 = vdwg.mxu0
    %2887 = vmatprep.subr.bf16.mxu0 %v2043
    %2888 = vmatpush1.bf16.msra.mxu0 %v2042
    %2889 = vmatprep.subr.bf16.mxu0 %v2039
    %2890 = vmatpush1.bf16.msra.mxu0 %v2038
    %2891 = vmatprep.subr.bf16.mxu0 %v2035
    %2892 = vmatpush1.bf16.msra.mxu0 %v2034
    %2893 = vmatprep.subr.bf16.mxu0 %v2031
    %2894 = vmatpush1.bf16.msra.mxu0 %v2030
    %2895 = vmatprep.subr.bf16.mxu0 %v2027
    %2896 = vmatpush1.bf16.msra.mxu0 %v2026
    %2897 = vmatprep.subr.bf16.mxu0 %v2023
    %2898 = vmatpush1.bf16.msra.mxu0 %v2022
    %2899 = vmatprep.subr.bf16.mxu0 %v2019
    %2900 = vmatpush1.bf16.msra.mxu0 %v2018
    %2901 = vmatprep.subr.bf16.mxu0 %v2015
    %2902 = vmatpush1.bf16.msra.mxu0 %v2014
    %2903 = vmatprep.subr.bf16.mxu0 %v2075
    %2904 = vmatpush2.bf16.msra.mxu0 %v2074
    %2905 = vmatprep.subr.bf16.mxu0 %v2071
    %2906 = vmatpush2.bf16.msra.mxu0 %v2070
    %2907 = vmatprep.subr.bf16.mxu0 %v2067
    %2908 = vmatpush2.bf16.msra.mxu0 %v2066
    %2909 = vmatprep.subr.bf16.mxu0 %v2063
    %2910 = vmatpush2.bf16.msra.mxu0 %v2062
    %2911 = vmatprep.subr.bf16.mxu0 %v2059
    %2912 = vmatpush2.bf16.msra.mxu0 %v2058
    %2913 = vmatprep.subr.bf16.mxu0 %v2055
    %2914 = vmatpush2.bf16.msra.mxu0 %v2054
    %2915 = vmatprep.subr.bf16.mxu0 %v2051
    %2916 = vmatpush2.bf16.msra.mxu0 %v2050
    %2917 = vmatprep.subr.bf16.mxu0 %v2047
    %2918 = vmatpush2.bf16.msra.mxu0 %v2046
    %2919 = vmatprep.mubr.bf16.mxu0 %v543
    %2920 = vmatmul.mubr.bf16.gmra.mxu0 %v541
    %v2921 = vpop.f32.mrf.mxu0
    %v2922 = vadd.f32 %v2881, %v2921
    %v2923 = vpop.f32.mrf.mxu0
    %v2924 = vadd.f32 %v2883, %v2923
    %v2925 = vpop.f32.mrf.mxu0
    %v2926 = vpop.f32.mrf.mxu0
    %2927 = vdwg.mxu0
    %2928 = vmatprep.subr.bf16.mxu0 %v2107
    %2929 = vmatpush1.bf16.msra.mxu0 %v2106
    %2930 = vmatprep.subr.bf16.mxu0 %v2103
    %2931 = vmatpush1.bf16.msra.mxu0 %v2102
    %2932 = vmatprep.subr.bf16.mxu0 %v2099
    %2933 = vmatpush1.bf16.msra.mxu0 %v2098
    %2934 = vmatprep.subr.bf16.mxu0 %v2095
    %2935 = vmatpush1.bf16.msra.mxu0 %v2094
    %2936 = vmatprep.subr.bf16.mxu0 %v2091
    %2937 = vmatpush1.bf16.msra.mxu0 %v2090
    %2938 = vmatprep.subr.bf16.mxu0 %v2087
    %2939 = vmatpush1.bf16.msra.mxu0 %v2086
    %2940 = vmatprep.subr.bf16.mxu0 %v2083
    %2941 = vmatpush1.bf16.msra.mxu0 %v2082
    %2942 = vmatprep.subr.bf16.mxu0 %v2079
    %2943 = vmatpush1.bf16.msra.mxu0 %v2078
    %2944 = vmatprep.subr.bf16.mxu0 %v2139
    %2945 = vmatpush2.bf16.msra.mxu0 %v2138
    %2946 = vmatprep.subr.bf16.mxu0 %v2135
    %2947 = vmatpush2.bf16.msra.mxu0 %v2134
    %2948 = vmatprep.subr.bf16.mxu0 %v2131
    %2949 = vmatpush2.bf16.msra.mxu0 %v2130
    %2950 = vmatprep.subr.bf16.mxu0 %v2127
    %2951 = vmatpush2.bf16.msra.mxu0 %v2126
    %2952 = vmatprep.subr.bf16.mxu0 %v2123
    %2953 = vmatpush2.bf16.msra.mxu0 %v2122
    %2954 = vmatprep.subr.bf16.mxu0 %v2119
    %2955 = vmatpush2.bf16.msra.mxu0 %v2118
    %2956 = vmatprep.subr.bf16.mxu0 %v2115
    %2957 = vmatpush2.bf16.msra.mxu0 %v2114
    %2958 = vmatprep.subr.bf16.mxu0 %v2111
    %2959 = vmatpush2.bf16.msra.mxu0 %v2110
    %2960 = vmatprep.mubr.bf16.mxu0 %v540
    %2961 = vmatmul.mubr.bf16.gmra.mxu0 %v526
    %v2962 = vpop.f32.mrf.mxu0
    %v2963 = vadd.f32 %v2922, %v2962
    %v2964 = vpop.f32.mrf.mxu0
    %v2965 = vadd.f32 %v2924, %v2964
    %v2966 = vpop.f32.mrf.mxu0
    %v2967 = vpop.f32.mrf.mxu0
    %2968 = vdwg.mxu0
    %2969 = vmatprep.subr.bf16.mxu0 %v2171
    %2970 = vmatpush1.bf16.msra.mxu0 %v2170
    %2971 = vmatprep.subr.bf16.mxu0 %v2167
    %2972 = vmatpush1.bf16.msra.mxu0 %v2166
    %2973 = vmatprep.subr.bf16.mxu0 %v2163
    %2974 = vmatpush1.bf16.msra.mxu0 %v2162
    %2975 = vmatprep.subr.bf16.mxu0 %v2159
    %2976 = vmatpush1.bf16.msra.mxu0 %v2158
    %2977 = vmatprep.subr.bf16.mxu0 %v2155
    %2978 = vmatpush1.bf16.msra.mxu0 %v2154
    %2979 = vmatprep.subr.bf16.mxu0 %v2151
    %2980 = vmatpush1.bf16.msra.mxu0 %v2150
    %2981 = vmatprep.subr.bf16.mxu0 %v2147
    %2982 = vmatpush1.bf16.msra.mxu0 %v2146
    %2983 = vmatprep.subr.bf16.mxu0 %v2143
    %2984 = vmatpush1.bf16.msra.mxu0 %v2142
    %2985 = vmatprep.subr.bf16.mxu0 %v2203
    %2986 = vmatpush2.bf16.msra.mxu0 %v2202
    %2987 = vmatprep.subr.bf16.mxu0 %v2199
    %2988 = vmatpush2.bf16.msra.mxu0 %v2198
    %2989 = vmatprep.subr.bf16.mxu0 %v2195
    %2990 = vmatpush2.bf16.msra.mxu0 %v2194
    %2991 = vmatprep.subr.bf16.mxu0 %v2191
    %2992 = vmatpush2.bf16.msra.mxu0 %v2190
    %2993 = vmatprep.subr.bf16.mxu0 %v2187
    %2994 = vmatpush2.bf16.msra.mxu0 %v2186
    %2995 = vmatprep.subr.bf16.mxu0 %v2183
    %2996 = vmatpush2.bf16.msra.mxu0 %v2182
    %2997 = vmatprep.subr.bf16.mxu0 %v2179
    %2998 = vmatpush2.bf16.msra.mxu0 %v2178
    %2999 = vmatprep.subr.bf16.mxu0 %v2175
    %3000 = vmatpush2.bf16.msra.mxu0 %v2174
    %3001 = vmatprep.mubr.bf16.mxu0 %v544
    %3002 = vmatmul.mubr.bf16.gmra.mxu0 %v542
    %v3003 = vpop.f32.mrf.mxu0
    %v3004 = vadd.f32 %v2963, %v3003
    %v3005 = vpop.f32.mrf.mxu0
    %v3006 = vadd.f32 %v2965, %v3005
    %v3007 = vpop.f32.mrf.mxu0
    %v3008 = vpop.f32.mrf.mxu0
    %3009 = vdwg.mxu0
    %3010 = vmatprep.subr.bf16.mxu0 %v2235
    %3011 = vmatpush1.bf16.msra.mxu0 %v2234
    %3012 = vmatprep.subr.bf16.mxu0 %v2231
    %3013 = vmatpush1.bf16.msra.mxu0 %v2230
    %3014 = vmatprep.subr.bf16.mxu0 %v2227
    %3015 = vmatpush1.bf16.msra.mxu0 %v2226
    %3016 = vmatprep.subr.bf16.mxu0 %v2223
    %3017 = vmatpush1.bf16.msra.mxu0 %v2222
    %3018 = vmatprep.subr.bf16.mxu0 %v2219
    %3019 = vmatpush1.bf16.msra.mxu0 %v2218
    %3020 = vmatprep.subr.bf16.mxu0 %v2215
    %3021 = vmatpush1.bf16.msra.mxu0 %v2214
    %3022 = vmatprep.subr.bf16.mxu0 %v2211
    %3023 = vmatpush1.bf16.msra.mxu0 %v2210
    %3024 = vmatprep.subr.bf16.mxu0 %v2207
    %3025 = vmatpush1.bf16.msra.mxu0 %v2206
    %3026 = vmatprep.subr.bf16.mxu0 %v2267
    %3027 = vmatpush2.bf16.msra.mxu0 %v2266
    %3028 = vmatprep.subr.bf16.mxu0 %v2263
    %3029 = vmatpush2.bf16.msra.mxu0 %v2262
    %3030 = vmatprep.subr.bf16.mxu0 %v2259
    %3031 = vmatpush2.bf16.msra.mxu0 %v2258
    %3032 = vmatprep.subr.bf16.mxu0 %v2255
    %3033 = vmatpush2.bf16.msra.mxu0 %v2254
    %3034 = vmatprep.subr.bf16.mxu0 %v2251
    %3035 = vmatpush2.bf16.msra.mxu0 %v2250
    %3036 = vmatprep.subr.bf16.mxu0 %v2247
    %3037 = vmatpush2.bf16.msra.mxu0 %v2246
    %3038 = vmatprep.subr.bf16.mxu0 %v2243
    %3039 = vmatpush2.bf16.msra.mxu0 %v2242
    %3040 = vmatprep.subr.bf16.mxu0 %v2239
    %3041 = vmatpush2.bf16.msra.mxu0 %v2238
    %3042 = vmatprep.mubr.bf16.mxu0 %v582
    %3043 = vmatmul.mubr.bf16.gmra.mxu0 %v568
    %v3044 = vpop.f32.mrf.mxu0
    %v3045 = vadd.f32 %v3004, %v3044
    %v3046 = vpop.f32.mrf.mxu0
    %v3047 = vadd.f32 %v3006, %v3046
    %v3048 = vpop.f32.mrf.mxu0
    %v3049 = vpop.f32.mrf.mxu0
    %3050 = vdwg.mxu0
    %3051 = vmatprep.subr.bf16.mxu0 %v2299
    %3052 = vmatpush1.bf16.msra.mxu0 %v2298
    %3053 = vmatprep.subr.bf16.mxu0 %v2295
    %3054 = vmatpush1.bf16.msra.mxu0 %v2294
    %3055 = vmatprep.subr.bf16.mxu0 %v2291
    %3056 = vmatpush1.bf16.msra.mxu0 %v2290
    %3057 = vmatprep.subr.bf16.mxu0 %v2287
    %3058 = vmatpush1.bf16.msra.mxu0 %v2286
    %3059 = vmatprep.subr.bf16.mxu0 %v2283
    %3060 = vmatpush1.bf16.msra.mxu0 %v2282
    %3061 = vmatprep.subr.bf16.mxu0 %v2279
    %3062 = vmatpush1.bf16.msra.mxu0 %v2278
    %3063 = vmatprep.subr.bf16.mxu0 %v2275
    %3064 = vmatpush1.bf16.msra.mxu0 %v2274
    %3065 = vmatprep.subr.bf16.mxu0 %v2271
    %3066 = vmatpush1.bf16.msra.mxu0 %v2270
    %3067 = vmatprep.subr.bf16.mxu0 %v2331
    %3068 = vmatpush2.bf16.msra.mxu0 %v2330
    %3069 = vmatprep.subr.bf16.mxu0 %v2327
    %3070 = vmatpush2.bf16.msra.mxu0 %v2326
    %3071 = vmatprep.subr.bf16.mxu0 %v2323
    %3072 = vmatpush2.bf16.msra.mxu0 %v2322
    %3073 = vmatprep.subr.bf16.mxu0 %v2319
    %3074 = vmatpush2.bf16.msra.mxu0 %v2318
    %3075 = vmatprep.subr.bf16.mxu0 %v2315
    %3076 = vmatpush2.bf16.msra.mxu0 %v2314
    %3077 = vmatprep.subr.bf16.mxu0 %v2311
    %3078 = vmatpush2.bf16.msra.mxu0 %v2310
    %3079 = vmatprep.subr.bf16.mxu0 %v2307
    %3080 = vmatpush2.bf16.msra.mxu0 %v2306
    %3081 = vmatprep.subr.bf16.mxu0 %v2303
    %3082 = vmatpush2.bf16.msra.mxu0 %v2302
    %3083 = vmatprep.mubr.bf16.mxu0 %v591
    %3084 = vmatmul.mubr.bf16.gmra.mxu0 %v590
    %v3085 = vpop.f32.mrf.mxu0
    %v3086 = vadd.f32 %v3045, %v3085
    %v3087 = vpop.f32.mrf.mxu0
    %v3088 = vadd.f32 %v3047, %v3087
    %v3089 = vpop.f32.mrf.mxu0
    %v3090 = vpop.f32.mrf.mxu0
    %3091 = vdwg.mxu0
    %3092 = vmatprep.subr.bf16.mxu0 %v2363
    %3093 = vmatpush1.bf16.msra.mxu0 %v2362
    %3094 = vmatprep.subr.bf16.mxu0 %v2359
    %3095 = vmatpush1.bf16.msra.mxu0 %v2358
    %3096 = vmatprep.subr.bf16.mxu0 %v2355
    %3097 = vmatpush1.bf16.msra.mxu0 %v2354
    %3098 = vmatprep.subr.bf16.mxu0 %v2351
    %3099 = vmatpush1.bf16.msra.mxu0 %v2350
    %3100 = vmatprep.subr.bf16.mxu0 %v2347
    %3101 = vmatpush1.bf16.msra.mxu0 %v2346
    %3102 = vmatprep.subr.bf16.mxu0 %v2343
    %3103 = vmatpush1.bf16.msra.mxu0 %v2342
    %3104 = vmatprep.subr.bf16.mxu0 %v2339
    %3105 = vmatpush1.bf16.msra.mxu0 %v2338
    %3106 = vmatprep.subr.bf16.mxu0 %v2335
    %3107 = vmatpush1.bf16.msra.mxu0 %v2334
    %3108 = vmatprep.subr.bf16.mxu0 %v2395
    %3109 = vmatpush2.bf16.msra.mxu0 %v2394
    %3110 = vmatprep.subr.bf16.mxu0 %v2391
    %3111 = vmatpush2.bf16.msra.mxu0 %v2390
    %3112 = vmatprep.subr.bf16.mxu0 %v2387
    %3113 = vmatpush2.bf16.msra.mxu0 %v2386
    %3114 = vmatprep.subr.bf16.mxu0 %v2383
    %3115 = vmatpush2.bf16.msra.mxu0 %v2382
    %3116 = vmatprep.subr.bf16.mxu0 %v2379
    %3117 = vmatpush2.bf16.msra.mxu0 %v2378
    %3118 = vmatprep.subr.bf16.mxu0 %v2375
    %3119 = vmatpush2.bf16.msra.mxu0 %v2374
    %3120 = vmatprep.subr.bf16.mxu0 %v2371
    %3121 = vmatpush2.bf16.msra.mxu0 %v2370
    %3122 = vmatprep.subr.bf16.mxu0 %v2367
    %3123 = vmatpush2.bf16.msra.mxu0 %v2366
    %3124 = vmatprep.mubr.bf16.mxu0 %v589
    %3125 = vmatmul.mubr.bf16.gmra.mxu0 %v575
    %v3126 = vpop.f32.mrf.mxu0
    %v3127 = vadd.f32 %v3086, %v3126
    %v3128 = vpop.f32.mrf.mxu0
    %v3129 = vadd.f32 %v3088, %v3128
    %v3130 = vpop.f32.mrf.mxu0
    %v3131 = vpop.f32.mrf.mxu0
    %3132 = vdwg.mxu0
    %3133 = vmatprep.subr.bf16.mxu0 %v1981
    %3134 = vmatpush1.bf16.msra.mxu0 %v1980
    %3135 = vmatprep.subr.bf16.mxu0 %v1977
    %3136 = vmatpush1.bf16.msra.mxu0 %v1976
    %3137 = vmatprep.subr.bf16.mxu0 %v1973
    %3138 = vmatpush1.bf16.msra.mxu0 %v1972
    %3139 = vmatprep.subr.bf16.mxu0 %v1969
    %3140 = vmatpush1.bf16.msra.mxu0 %v1968
    %3141 = vmatprep.subr.bf16.mxu0 %v1965
    %3142 = vmatpush1.bf16.msra.mxu0 %v1964
    %3143 = vmatprep.subr.bf16.mxu0 %v1961
    %3144 = vmatpush1.bf16.msra.mxu0 %v1960
    %3145 = vmatprep.subr.bf16.mxu0 %v1957
    %3146 = vmatpush1.bf16.msra.mxu0 %v1956
    %3147 = vmatprep.subr.bf16.mxu0 %v1953
    %3148 = vmatpush1.bf16.msra.mxu0 %v1952
    %3149 = vmatprep.subr.bf16.mxu0 %v2013
    %3150 = vmatpush2.bf16.msra.mxu0 %v2012
    %3151 = vmatprep.subr.bf16.mxu0 %v2009
    %3152 = vmatpush2.bf16.msra.mxu0 %v2008
    %3153 = vmatprep.subr.bf16.mxu0 %v2005
    %3154 = vmatpush2.bf16.msra.mxu0 %v2004
    %3155 = vmatprep.subr.bf16.mxu0 %v2001
    %3156 = vmatpush2.bf16.msra.mxu0 %v2000
    %3157 = vmatprep.subr.bf16.mxu0 %v1997
    %3158 = vmatpush2.bf16.msra.mxu0 %v1996
    %3159 = vmatprep.subr.bf16.mxu0 %v1993
    %3160 = vmatpush2.bf16.msra.mxu0 %v1992
    %3161 = vmatprep.subr.bf16.mxu0 %v1989
    %3162 = vmatpush2.bf16.msra.mxu0 %v1988
    %3163 = vmatprep.subr.bf16.mxu0 %v1985
    %3164 = vmatpush2.bf16.msra.mxu0 %v1984
    %3165 = vmatprep.mubr.bf16.mxu0 %v533
    %3166 = vmatmul.mubr.bf16.gmra.mxu0 %v519
    %v3167 = vpop.f32.mrf.mxu0
    %v3168 = vadd.f32 %v485, %v3167
    %v3169 = vpop.f32.mrf.mxu0
    %v3170 = vadd.f32 %v489, %v3169
    %v3171 = vpop.f32.mrf.mxu0
    %v3172 = vpop.f32.mrf.mxu0
    %3173 = vdwg.mxu0
    %3174 = vmatprep.subr.bf16.mxu0 %v2045
    %3175 = vmatpush1.bf16.msra.mxu0 %v2044
    %3176 = vmatprep.subr.bf16.mxu0 %v2041
    %3177 = vmatpush1.bf16.msra.mxu0 %v2040
    %3178 = vmatprep.subr.bf16.mxu0 %v2037
    %3179 = vmatpush1.bf16.msra.mxu0 %v2036
    %3180 = vmatprep.subr.bf16.mxu0 %v2033
    %3181 = vmatpush1.bf16.msra.mxu0 %v2032
    %3182 = vmatprep.subr.bf16.mxu0 %v2029
    %3183 = vmatpush1.bf16.msra.mxu0 %v2028
    %3184 = vmatprep.subr.bf16.mxu0 %v2025
    %3185 = vmatpush1.bf16.msra.mxu0 %v2024
    %3186 = vmatprep.subr.bf16.mxu0 %v2021
    %3187 = vmatpush1.bf16.msra.mxu0 %v2020
    %3188 = vmatprep.subr.bf16.mxu0 %v2017
    %3189 = vmatpush1.bf16.msra.mxu0 %v2016
    %3190 = vmatprep.subr.bf16.mxu0 %v2077
    %3191 = vmatpush2.bf16.msra.mxu0 %v2076
    %3192 = vmatprep.subr.bf16.mxu0 %v2073
    %3193 = vmatpush2.bf16.msra.mxu0 %v2072
    %3194 = vmatprep.subr.bf16.mxu0 %v2069
    %3195 = vmatpush2.bf16.msra.mxu0 %v2068
    %3196 = vmatprep.subr.bf16.mxu0 %v2065
    %3197 = vmatpush2.bf16.msra.mxu0 %v2064
    %3198 = vmatprep.subr.bf16.mxu0 %v2061
    %3199 = vmatpush2.bf16.msra.mxu0 %v2060
    %3200 = vmatprep.subr.bf16.mxu0 %v2057
    %3201 = vmatpush2.bf16.msra.mxu0 %v2056
    %3202 = vmatprep.subr.bf16.mxu0 %v2053
    %3203 = vmatpush2.bf16.msra.mxu0 %v2052
    %3204 = vmatprep.subr.bf16.mxu0 %v2049
    %3205 = vmatpush2.bf16.msra.mxu0 %v2048
    %3206 = vmatprep.mubr.bf16.mxu0 %v543
    %3207 = vmatmul.mubr.bf16.gmra.mxu0 %v541
    %v3208 = vpop.f32.mrf.mxu0
    %v3209 = vadd.f32 %v3168, %v3208
    %v3210 = vpop.f32.mrf.mxu0
    %v3211 = vadd.f32 %v3170, %v3210
    %v3212 = vpop.f32.mrf.mxu0
    %v3213 = vpop.f32.mrf.mxu0
    %3214 = vdwg.mxu0
    %3215 = vmatprep.subr.bf16.mxu0 %v2109
    %3216 = vmatpush1.bf16.msra.mxu0 %v2108
    %3217 = vmatprep.subr.bf16.mxu0 %v2105
    %3218 = vmatpush1.bf16.msra.mxu0 %v2104
    %3219 = vmatprep.subr.bf16.mxu0 %v2101
    %3220 = vmatpush1.bf16.msra.mxu0 %v2100
    %3221 = vmatprep.subr.bf16.mxu0 %v2097
    %3222 = vmatpush1.bf16.msra.mxu0 %v2096
    %3223 = vmatprep.subr.bf16.mxu0 %v2093
    %3224 = vmatpush1.bf16.msra.mxu0 %v2092
    %3225 = vmatprep.subr.bf16.mxu0 %v2089
    %3226 = vmatpush1.bf16.msra.mxu0 %v2088
    %3227 = vmatprep.subr.bf16.mxu0 %v2085
    %3228 = vmatpush1.bf16.msra.mxu0 %v2084
    %3229 = vmatprep.subr.bf16.mxu0 %v2081
    %3230 = vmatpush1.bf16.msra.mxu0 %v2080
    %3231 = vmatprep.subr.bf16.mxu0 %v2141
    %3232 = vmatpush2.bf16.msra.mxu0 %v2140
    %3233 = vmatprep.subr.bf16.mxu0 %v2137
    %3234 = vmatpush2.bf16.msra.mxu0 %v2136
    %3235 = vmatprep.subr.bf16.mxu0 %v2133
    %3236 = vmatpush2.bf16.msra.mxu0 %v2132
    %3237 = vmatprep.subr.bf16.mxu0 %v2129
    %3238 = vmatpush2.bf16.msra.mxu0 %v2128
    %3239 = vmatprep.subr.bf16.mxu0 %v2125
    %3240 = vmatpush2.bf16.msra.mxu0 %v2124
    %3241 = vmatprep.subr.bf16.mxu0 %v2121
    %3242 = vmatpush2.bf16.msra.mxu0 %v2120
    %3243 = vmatprep.subr.bf16.mxu0 %v2117
    %3244 = vmatpush2.bf16.msra.mxu0 %v2116
    %3245 = vmatprep.subr.bf16.mxu0 %v2113
    %3246 = vmatpush2.bf16.msra.mxu0 %v2112
    %3247 = vmatprep.mubr.bf16.mxu0 %v540
    %3248 = vmatmul.mubr.bf16.gmra.mxu0 %v526
    %v3249 = vpop.f32.mrf.mxu0
    %v3250 = vadd.f32 %v3209, %v3249
    %v3251 = vpop.f32.mrf.mxu0
    %v3252 = vadd.f32 %v3211, %v3251
    %v3253 = vpop.f32.mrf.mxu0
    %v3254 = vpop.f32.mrf.mxu0
    %3255 = vdwg.mxu0
    %3256 = vmatprep.subr.bf16.mxu0 %v2173
    %3257 = vmatpush1.bf16.msra.mxu0 %v2172
    %3258 = vmatprep.subr.bf16.mxu0 %v2169
    %3259 = vmatpush1.bf16.msra.mxu0 %v2168
    %3260 = vmatprep.subr.bf16.mxu0 %v2165
    %3261 = vmatpush1.bf16.msra.mxu0 %v2164
    %3262 = vmatprep.subr.bf16.mxu0 %v2161
    %3263 = vmatpush1.bf16.msra.mxu0 %v2160
    %3264 = vmatprep.subr.bf16.mxu0 %v2157
    %3265 = vmatpush1.bf16.msra.mxu0 %v2156
    %3266 = vmatprep.subr.bf16.mxu0 %v2153
    %3267 = vmatpush1.bf16.msra.mxu0 %v2152
    %3268 = vmatprep.subr.bf16.mxu0 %v2149
    %3269 = vmatpush1.bf16.msra.mxu0 %v2148
    %3270 = vmatprep.subr.bf16.mxu0 %v2145
    %3271 = vmatpush1.bf16.msra.mxu0 %v2144
    %3272 = vmatprep.subr.bf16.mxu0 %v2205
    %3273 = vmatpush2.bf16.msra.mxu0 %v2204
    %3274 = vmatprep.subr.bf16.mxu0 %v2201
    %3275 = vmatpush2.bf16.msra.mxu0 %v2200
    %3276 = vmatprep.subr.bf16.mxu0 %v2197
    %3277 = vmatpush2.bf16.msra.mxu0 %v2196
    %3278 = vmatprep.subr.bf16.mxu0 %v2193
    %3279 = vmatpush2.bf16.msra.mxu0 %v2192
    %3280 = vmatprep.subr.bf16.mxu0 %v2189
    %3281 = vmatpush2.bf16.msra.mxu0 %v2188
    %3282 = vmatprep.subr.bf16.mxu0 %v2185
    %3283 = vmatpush2.bf16.msra.mxu0 %v2184
    %3284 = vmatprep.subr.bf16.mxu0 %v2181
    %3285 = vmatpush2.bf16.msra.mxu0 %v2180
    %3286 = vmatprep.subr.bf16.mxu0 %v2177
    %3287 = vmatpush2.bf16.msra.mxu0 %v2176
    %3288 = vmatprep.mubr.bf16.mxu0 %v544
    %3289 = vmatmul.mubr.bf16.gmra.mxu0 %v542
    %v3290 = vpop.f32.mrf.mxu0
    %v3291 = vadd.f32 %v3250, %v3290
    %v3292 = vpop.f32.mrf.mxu0
    %v3293 = vadd.f32 %v3252, %v3292
    %v3294 = vpop.f32.mrf.mxu0
    %v3295 = vpop.f32.mrf.mxu0
    %3296 = vdwg.mxu0
    %3297 = vmatprep.subr.bf16.mxu0 %v2237
    %3298 = vmatpush1.bf16.msra.mxu0 %v2236
    %3299 = vmatprep.subr.bf16.mxu0 %v2233
    %3300 = vmatpush1.bf16.msra.mxu0 %v2232
    %3301 = vmatprep.subr.bf16.mxu0 %v2229
    %3302 = vmatpush1.bf16.msra.mxu0 %v2228
    %3303 = vmatprep.subr.bf16.mxu0 %v2225
    %3304 = vmatpush1.bf16.msra.mxu0 %v2224
    %3305 = vmatprep.subr.bf16.mxu0 %v2221
    %3306 = vmatpush1.bf16.msra.mxu0 %v2220
    %3307 = vmatprep.subr.bf16.mxu0 %v2217
    %3308 = vmatpush1.bf16.msra.mxu0 %v2216
    %3309 = vmatprep.subr.bf16.mxu0 %v2213
    %3310 = vmatpush1.bf16.msra.mxu0 %v2212
    %3311 = vmatprep.subr.bf16.mxu0 %v2209
    %3312 = vmatpush1.bf16.msra.mxu0 %v2208
    %3313 = vmatprep.subr.bf16.mxu0 %v2269
    %3314 = vmatpush2.bf16.msra.mxu0 %v2268
    %3315 = vmatprep.subr.bf16.mxu0 %v2265
    %3316 = vmatpush2.bf16.msra.mxu0 %v2264
    %3317 = vmatprep.subr.bf16.mxu0 %v2261
    %3318 = vmatpush2.bf16.msra.mxu0 %v2260
    %3319 = vmatprep.subr.bf16.mxu0 %v2257
    %3320 = vmatpush2.bf16.msra.mxu0 %v2256
    %3321 = vmatprep.subr.bf16.mxu0 %v2253
    %3322 = vmatpush2.bf16.msra.mxu0 %v2252
    %3323 = vmatprep.subr.bf16.mxu0 %v2249
    %3324 = vmatpush2.bf16.msra.mxu0 %v2248
    %3325 = vmatprep.subr.bf16.mxu0 %v2245
    %3326 = vmatpush2.bf16.msra.mxu0 %v2244
    %3327 = vmatprep.subr.bf16.mxu0 %v2241
    %3328 = vmatpush2.bf16.msra.mxu0 %v2240
    %3329 = vmatprep.mubr.bf16.mxu0 %v582
    %3330 = vmatmul.mubr.bf16.gmra.mxu0 %v568
    %v3331 = vpop.f32.mrf.mxu0
    %v3332 = vadd.f32 %v3291, %v3331
    %v3333 = vpop.f32.mrf.mxu0
    %v3334 = vadd.f32 %v3293, %v3333
    %v3335 = vpop.f32.mrf.mxu0
    %v3336 = vpop.f32.mrf.mxu0
    %3337 = vdwg.mxu0
    %3338 = vmatprep.subr.bf16.mxu0 %v2301
    %3339 = vmatpush1.bf16.msra.mxu0 %v2300
    %3340 = vmatprep.subr.bf16.mxu0 %v2297
    %3341 = vmatpush1.bf16.msra.mxu0 %v2296
    %3342 = vmatprep.subr.bf16.mxu0 %v2293
    %3343 = vmatpush1.bf16.msra.mxu0 %v2292
    %3344 = vmatprep.subr.bf16.mxu0 %v2289
    %3345 = vmatpush1.bf16.msra.mxu0 %v2288
    %3346 = vmatprep.subr.bf16.mxu0 %v2285
    %3347 = vmatpush1.bf16.msra.mxu0 %v2284
    %3348 = vmatprep.subr.bf16.mxu0 %v2281
    %3349 = vmatpush1.bf16.msra.mxu0 %v2280
    %3350 = vmatprep.subr.bf16.mxu0 %v2277
    %3351 = vmatpush1.bf16.msra.mxu0 %v2276
    %3352 = vmatprep.subr.bf16.mxu0 %v2273
    %3353 = vmatpush1.bf16.msra.mxu0 %v2272
    %3354 = vmatprep.subr.bf16.mxu0 %v2333
    %3355 = vmatpush2.bf16.msra.mxu0 %v2332
    %3356 = vmatprep.subr.bf16.mxu0 %v2329
    %3357 = vmatpush2.bf16.msra.mxu0 %v2328
    %3358 = vmatprep.subr.bf16.mxu0 %v2325
    %3359 = vmatpush2.bf16.msra.mxu0 %v2324
    %3360 = vmatprep.subr.bf16.mxu0 %v2321
    %3361 = vmatpush2.bf16.msra.mxu0 %v2320
    %3362 = vmatprep.subr.bf16.mxu0 %v2317
    %3363 = vmatpush2.bf16.msra.mxu0 %v2316
    %3364 = vmatprep.subr.bf16.mxu0 %v2313
    %3365 = vmatpush2.bf16.msra.mxu0 %v2312
    %3366 = vmatprep.subr.bf16.mxu0 %v2309
    %3367 = vmatpush2.bf16.msra.mxu0 %v2308
    %3368 = vmatprep.subr.bf16.mxu0 %v2305
    %3369 = vmatpush2.bf16.msra.mxu0 %v2304
    %3370 = vmatprep.mubr.bf16.mxu0 %v591
    %3371 = vmatmul.mubr.bf16.gmra.mxu0 %v590
    %v3372 = vpop.f32.mrf.mxu0
    %v3373 = vadd.f32 %v3332, %v3372
    %v3374 = vpop.f32.mrf.mxu0
    %v3375 = vadd.f32 %v3334, %v3374
    %v3376 = vpop.f32.mrf.mxu0
    %v3377 = vpop.f32.mrf.mxu0
    %3378 = vdwg.mxu0
    %3379 = vmatprep.subr.bf16.mxu0 %v2365
    %3380 = vmatpush1.bf16.msra.mxu0 %v2364
    %3381 = vmatprep.subr.bf16.mxu0 %v2361
    %3382 = vmatpush1.bf16.msra.mxu0 %v2360
    %3383 = vmatprep.subr.bf16.mxu0 %v2357
    %3384 = vmatpush1.bf16.msra.mxu0 %v2356
    %3385 = vmatprep.subr.bf16.mxu0 %v2353
    %3386 = vmatpush1.bf16.msra.mxu0 %v2352
    %3387 = vmatprep.subr.bf16.mxu0 %v2349
    %3388 = vmatpush1.bf16.msra.mxu0 %v2348
    %3389 = vmatprep.subr.bf16.mxu0 %v2345
    %3390 = vmatpush1.bf16.msra.mxu0 %v2344
    %3391 = vmatprep.subr.bf16.mxu0 %v2341
    %3392 = vmatpush1.bf16.msra.mxu0 %v2340
    %3393 = vmatprep.subr.bf16.mxu0 %v2337
    %3394 = vmatpush1.bf16.msra.mxu0 %v2336
    %3395 = vmatprep.subr.bf16.mxu0 %v2397
    %3396 = vmatpush2.bf16.msra.mxu0 %v2396
    %3397 = vmatprep.subr.bf16.mxu0 %v2393
    %3398 = vmatpush2.bf16.msra.mxu0 %v2392
    %3399 = vmatprep.subr.bf16.mxu0 %v2389
    %3400 = vmatpush2.bf16.msra.mxu0 %v2388
    %3401 = vmatprep.subr.bf16.mxu0 %v2385
    %3402 = vmatpush2.bf16.msra.mxu0 %v2384
    %3403 = vmatprep.subr.bf16.mxu0 %v2381
    %3404 = vmatpush2.bf16.msra.mxu0 %v2380
    %3405 = vmatprep.subr.bf16.mxu0 %v2377
    %3406 = vmatpush2.bf16.msra.mxu0 %v2376
    %3407 = vmatprep.subr.bf16.mxu0 %v2373
    %3408 = vmatpush2.bf16.msra.mxu0 %v2372
    %3409 = vmatprep.subr.bf16.mxu0 %v2369
    %3410 = vmatpush2.bf16.msra.mxu0 %v2368
    %3411 = vmatprep.mubr.bf16.mxu0 %v589
    %3412 = vmatmul.mubr.bf16.gmra.mxu0 %v575
    %v3413 = vpop.f32.mrf.mxu0
    %v3414 = vadd.f32 %v3373, %v3413
    %v3415 = vpop.f32.mrf.mxu0
    %v3416 = vadd.f32 %v3375, %v3415
    %v3417 = vpop.f32.mrf.mxu0
    %v3418 = vpop.f32.mrf.mxu0
    %3419 = vdwg.mxu0
    %v3420 = vmax.f32 %v3127, 0.0
    %v3421 = vmax.f32 %v3129, 0.0
    %v3422 = vmax.f32 %v3414, 0.0
    %v3423 = vmax.f32 %v3416, 0.0
    %v3424 = vpack.c.bf16 %v3420, %v3420
    %v3425 = vpack.c.bf16 %v3421, %v3421
    %v3426 = vpack.c.bf16 %v3422, %v3422
    %v3427 = vpack.c.bf16 %v3423, %v3423
    %v3428 = vld [vmem:[%s3] sm:$0xf]
    %v3429 = vld [vmem:[%s3 + $0x4] sm:$0xf]
    %v3430 = vld [vmem:[%s3 + $0x8] sm:$0xf]
    %v3431 = vld [vmem:[%s3 + $0xc] sm:$0xf]
    %v3432 = vld [vmem:[%s3 + $0x10] sm:$0xf]
    %v3433 = vld [vmem:[%s3 + $0x14] sm:$0xf]
    %v3434 = vld [vmem:[%s3 + $0x18] sm:$0xf]
    %v3435 = vld [vmem:[%s3 + $0x1c] sm:$0xf]
    %v3436 = vld [vmem:[%s3 + $0x20] sm:$0xf]
    %v3437 = vld [vmem:[%s3 + $0x24] sm:$0xf]
    %v3438 = vld [vmem:[%s3 + $0x28] sm:$0xf]
    %v3439 = vld [vmem:[%s3 + $0x2c] sm:$0xf]
    %v3440 = vld [vmem:[%s3 + $0x30] sm:$0xf]
    %v3441 = vld [vmem:[%s3 + $0x34] sm:$0xf]
    %v3442 = vld [vmem:[%s3 + $0x38] sm:$0xf]
    %v3443 = vld [vmem:[%s3 + $0x3c] sm:$0xf]
    %v3444 = vld [vmem:[%s3 + $0x40] sm:$0xf]
    %v3445 = vld [vmem:[%s3 + $0x44] sm:$0xf]
    %v3446 = vld [vmem:[%s3 + $0x48] sm:$0xf]
    %v3447 = vld [vmem:[%s3 + $0x4c] sm:$0xf]
    %v3448 = vld [vmem:[%s3 + $0x50] sm:$0xf]
    %v3449 = vld [vmem:[%s3 + $0x54] sm:$0xf]
    %v3450 = vld [vmem:[%s3 + $0x58] sm:$0xf]
    %v3451 = vld [vmem:[%s3 + $0x5c] sm:$0xf]
    %v3452 = vld [vmem:[%s3 + $0x60] sm:$0xf]
    %v3453 = vld [vmem:[%s3 + $0x64] sm:$0xf]
    %v3454 = vld [vmem:[%s3 + $0x68] sm:$0xf]
    %v3455 = vld [vmem:[%s3 + $0x6c] sm:$0xf]
    %v3456 = vld [vmem:[%s3 + $0x70] sm:$0xf]
    %v3457 = vld [vmem:[%s3 + $0x74] sm:$0xf]
    %v3458 = vld [vmem:[%s3 + $0x78] sm:$0xf]
    %v3459 = vld [vmem:[%s3 + $0x7c] sm:$0xf]
    %v3460 = vld [vmem:[%s3 + $0x80] sm:$0xf]
    %v3461 = vld [vmem:[%s3 + $0x84] sm:$0xf]
    %v3462 = vld [vmem:[%s3 + $0x88] sm:$0xf]
    %v3463 = vld [vmem:[%s3 + $0x8c] sm:$0xf]
    %v3464 = vld [vmem:[%s3 + $0x90] sm:$0xf]
    %v3465 = vld [vmem:[%s3 + $0x94] sm:$0xf]
    %v3466 = vld [vmem:[%s3 + $0x98] sm:$0xf]
    %v3467 = vld [vmem:[%s3 + $0x9c] sm:$0xf]
    %v3468 = vld [vmem:[%s3 + $0xa0] sm:$0xf]
    %v3469 = vld [vmem:[%s3 + $0xa4] sm:$0xf]
    %v3470 = vld [vmem:[%s3 + $0xa8] sm:$0xf]
    %v3471 = vld [vmem:[%s3 + $0xac] sm:$0xf]
    %v3472 = vld [vmem:[%s3 + $0xb0] sm:$0xf]
    %v3473 = vld [vmem:[%s3 + $0xb4] sm:$0xf]
    %v3474 = vld [vmem:[%s3 + $0xb8] sm:$0xf]
    %v3475 = vld [vmem:[%s3 + $0xbc] sm:$0xf]
    %v3476 = vld [vmem:[%s3 + $0xc0] sm:$0xf]
    %v3477 = vld [vmem:[%s3 + $0xc4] sm:$0xf]
    %v3478 = vld [vmem:[%s3 + $0xc8] sm:$0xf]
    %v3479 = vld [vmem:[%s3 + $0xcc] sm:$0xf]
    %v3480 = vld [vmem:[%s3 + $0xd0] sm:$0xf]
    %v3481 = vld [vmem:[%s3 + $0xd4] sm:$0xf]
    %v3482 = vld [vmem:[%s3 + $0xd8] sm:$0xf]
    %v3483 = vld [vmem:[%s3 + $0xdc] sm:$0xf]
    %v3484 = vld [vmem:[%s3 + $0xe0] sm:$0xf]
    %v3485 = vld [vmem:[%s3 + $0xe4] sm:$0xf]
    %v3486 = vld [vmem:[%s3 + $0xe8] sm:$0xf]
    %v3487 = vld [vmem:[%s3 + $0xec] sm:$0xf]
    %v3488 = vld [vmem:[%s3 + $0xf0] sm:$0xf]
    %v3489 = vld [vmem:[%s3 + $0xf4] sm:$0xf]
    %v3490 = vld [vmem:[%s3 + $0xf8] sm:$0xf]
    %v3491 = vld [vmem:[%s3 + $0xfc] sm:$0xf]
    %v3492 = vld [vmem:[%s4] sm:$0x1]
    %v3494 = vlaneseq
    %v3495 = vshrl.u32 %v3494, 7
    %v3496 = vsub.s32 0, %v3495
    %v3497 = vrot.slane %v3492, %v3496
    %v3563 = vunpack.c.l.b16 %v3428
    %v3564 = vunpack.c.l.b16 %v3429
    %v3565 = vunpack.c.l.b16 %v3430
    %v3566 = vunpack.c.l.b16 %v3431
    %v3567 = vunpack.c.l.b16 %v3432
    %v3568 = vunpack.c.l.b16 %v3433
    %v3569 = vunpack.c.l.b16 %v3434
    %v3570 = vunpack.c.l.b16 %v3435
    %v3571 = vunpack.c.l.b16 %v3436
    %v3572 = vunpack.c.l.b16 %v3437
    %v3573 = vunpack.c.l.b16 %v3438
    %v3574 = vunpack.c.l.b16 %v3439
    %v3575 = vunpack.c.l.b16 %v3440
    %v3576 = vunpack.c.l.b16 %v3441
    %v3577 = vunpack.c.l.b16 %v3442
    %v3578 = vunpack.c.l.b16 %v3443
    %v3579 = vunpack.c.l.b16 %v3444
    %v3580 = vunpack.c.l.b16 %v3445
    %v3581 = vunpack.c.l.b16 %v3446
    %v3582 = vunpack.c.l.b16 %v3447
    %v3583 = vunpack.c.l.b16 %v3448
    %v3584 = vunpack.c.l.b16 %v3449
    %v3585 = vunpack.c.l.b16 %v3450
    %v3586 = vunpack.c.l.b16 %v3451
    %v3587 = vunpack.c.l.b16 %v3452
    %v3588 = vunpack.c.l.b16 %v3453
    %v3589 = vunpack.c.l.b16 %v3454
    %v3590 = vunpack.c.l.b16 %v3455
    %v3591 = vunpack.c.l.b16 %v3456
    %v3592 = vunpack.c.l.b16 %v3457
    %v3593 = vunpack.c.l.b16 %v3458
    %v3594 = vunpack.c.l.b16 %v3459
    %v3595 = vunpack.c.l.b16 %v3460
    %v3596 = vunpack.c.l.b16 %v3461
    %v3597 = vunpack.c.l.b16 %v3462
    %v3598 = vunpack.c.l.b16 %v3463
    %v3599 = vunpack.c.l.b16 %v3464
    %v3600 = vunpack.c.l.b16 %v3465
    %v3601 = vunpack.c.l.b16 %v3466
    %v3602 = vunpack.c.l.b16 %v3467
    %v3603 = vunpack.c.l.b16 %v3468
    %v3604 = vunpack.c.l.b16 %v3469
    %v3605 = vunpack.c.l.b16 %v3470
    %v3606 = vunpack.c.l.b16 %v3471
    %v3607 = vunpack.c.l.b16 %v3472
    %v3608 = vunpack.c.l.b16 %v3473
    %v3609 = vunpack.c.l.b16 %v3474
    %v3610 = vunpack.c.l.b16 %v3475
    %v3611 = vunpack.c.l.b16 %v3476
    %v3612 = vunpack.c.l.b16 %v3477
    %v3613 = vunpack.c.l.b16 %v3478
    %v3614 = vunpack.c.l.b16 %v3479
    %v3615 = vunpack.c.l.b16 %v3480
    %v3616 = vunpack.c.l.b16 %v3481
    %v3617 = vunpack.c.l.b16 %v3482
    %v3618 = vunpack.c.l.b16 %v3483
    %v3619 = vunpack.c.l.b16 %v3484
    %v3620 = vunpack.c.l.b16 %v3485
    %v3621 = vunpack.c.l.b16 %v3486
    %v3622 = vunpack.c.l.b16 %v3487
    %v3623 = vunpack.c.l.b16 %v3488
    %v3624 = vunpack.c.l.b16 %v3489
    %v3625 = vunpack.c.l.b16 %v3490
    %v3626 = vunpack.c.l.b16 %v3491
    %v3627 = vpack.c.b16 %v3564, %v3563
    %v3628 = vpack.c.b16 %v3566, %v3565
    %v3629 = vpack.c.b16 %v3568, %v3567
    %v3630 = vpack.c.b16 %v3570, %v3569
    %v3631 = vpack.c.b16 %v3572, %v3571
    %v3632 = vpack.c.b16 %v3574, %v3573
    %v3633 = vpack.c.b16 %v3576, %v3575
    %v3634 = vpack.c.b16 %v3578, %v3577
    %v3635 = vpack.c.b16 %v3580, %v3579
    %v3636 = vpack.c.b16 %v3582, %v3581
    %v3637 = vpack.c.b16 %v3584, %v3583
    %v3638 = vpack.c.b16 %v3586, %v3585
    %v3639 = vpack.c.b16 %v3588, %v3587
    %v3640 = vpack.c.b16 %v3590, %v3589
    %v3641 = vpack.c.b16 %v3592, %v3591
    %v3642 = vpack.c.b16 %v3594, %v3593
    %v3643 = vpack.c.b16 %v3596, %v3595
    %v3644 = vpack.c.b16 %v3598, %v3597
    %v3645 = vpack.c.b16 %v3600, %v3599
    %v3646 = vpack.c.b16 %v3602, %v3601
    %v3647 = vpack.c.b16 %v3604, %v3603
    %v3648 = vpack.c.b16 %v3606, %v3605
    %v3649 = vpack.c.b16 %v3608, %v3607
    %v3650 = vpack.c.b16 %v3610, %v3609
    %v3651 = vpack.c.b16 %v3612, %v3611
    %v3652 = vpack.c.b16 %v3614, %v3613
    %v3653 = vpack.c.b16 %v3616, %v3615
    %v3654 = vpack.c.b16 %v3618, %v3617
    %v3655 = vpack.c.b16 %v3620, %v3619
    %v3656 = vpack.c.b16 %v3622, %v3621
    %v3657 = vpack.c.b16 %v3624, %v3623
    %v3658 = vpack.c.b16 %v3626, %v3625
    %3691 = vmatprep.subr.bf16.mxu0 0
    %3692 = vmatpush1.bf16.msra.mxu0 %v3634
    %3693 = vmatprep.subr.bf16.mxu0 0
    %3694 = vmatpush1.bf16.msra.mxu0 %v3633
    %3695 = vmatprep.subr.bf16.mxu0 0
    %3696 = vmatpush1.bf16.msra.mxu0 %v3632
    %3697 = vmatprep.subr.bf16.mxu0 0
    %3698 = vmatpush1.bf16.msra.mxu0 %v3631
    %3699 = vmatprep.subr.bf16.mxu0 0
    %3700 = vmatpush1.bf16.msra.mxu0 %v3630
    %3701 = vmatprep.subr.bf16.mxu0 0
    %3702 = vmatpush1.bf16.msra.mxu0 %v3629
    %3703 = vmatprep.subr.bf16.mxu0 0
    %3704 = vmatpush1.bf16.msra.mxu0 %v3628
    %3705 = vmatprep.subr.bf16.mxu0 0
    %3706 = vmatpush1.bf16.msra.mxu0 %v3627
    %3707 = vmatprep.subr.bf16.mxu0 0
    %3708 = vmatpush2.bf16.msra.mxu0 %v3642
    %3709 = vmatprep.subr.bf16.mxu0 0
    %3710 = vmatpush2.bf16.msra.mxu0 %v3641
    %3711 = vmatprep.subr.bf16.mxu0 0
    %3712 = vmatpush2.bf16.msra.mxu0 %v3640
    %3713 = vmatprep.subr.bf16.mxu0 0
    %3714 = vmatpush2.bf16.msra.mxu0 %v3639
    %3715 = vmatprep.subr.bf16.mxu0 0
    %3716 = vmatpush2.bf16.msra.mxu0 %v3638
    %3717 = vmatprep.subr.bf16.mxu0 0
    %3718 = vmatpush2.bf16.msra.mxu0 %v3637
    %3719 = vmatprep.subr.bf16.mxu0 0
    %3720 = vmatpush2.bf16.msra.mxu0 %v3636
    %3721 = vmatprep.subr.bf16.mxu0 0
    %3722 = vmatpush2.bf16.msra.mxu0 %v3635
    %3723 = vmatprep.mubr.bf16.mxu0 %v3425
    %3724 = vmatmul.mubr.bf16.gmra.mxu0 %v3424
    %v3725 = vpop.f32.mrf.mxu0
    %v3726 = vadd.f32 %v3497, %v3725
    %v3727 = vpop.f32.mrf.mxu0
    %v3728 = vpop.f32.mrf.mxu0
    %v3729 = vpop.f32.mrf.mxu0
    %3730 = vdwg.mxu0
    %3731 = vmatprep.subr.bf16.mxu0 0
    %3732 = vmatpush1.bf16.msra.mxu0 %v3650
    %3733 = vmatprep.subr.bf16.mxu0 0
    %3734 = vmatpush1.bf16.msra.mxu0 %v3649
    %3735 = vmatprep.subr.bf16.mxu0 0
    %3736 = vmatpush1.bf16.msra.mxu0 %v3648
    %3737 = vmatprep.subr.bf16.mxu0 0
    %3738 = vmatpush1.bf16.msra.mxu0 %v3647
    %3739 = vmatprep.subr.bf16.mxu0 0
    %3740 = vmatpush1.bf16.msra.mxu0 %v3646
    %3741 = vmatprep.subr.bf16.mxu0 0
    %3742 = vmatpush1.bf16.msra.mxu0 %v3645
    %3743 = vmatprep.subr.bf16.mxu0 0
    %3744 = vmatpush1.bf16.msra.mxu0 %v3644
    %3745 = vmatprep.subr.bf16.mxu0 0
    %3746 = vmatpush1.bf16.msra.mxu0 %v3643
    %3747 = vmatprep.subr.bf16.mxu0 0
    %3748 = vmatpush2.bf16.msra.mxu0 %v3658
    %3749 = vmatprep.subr.bf16.mxu0 0
    %3750 = vmatpush2.bf16.msra.mxu0 %v3657
    %3751 = vmatprep.subr.bf16.mxu0 0
    %3752 = vmatpush2.bf16.msra.mxu0 %v3656
    %3753 = vmatprep.subr.bf16.mxu0 0
    %3754 = vmatpush2.bf16.msra.mxu0 %v3655
    %3755 = vmatprep.subr.bf16.mxu0 0
    %3756 = vmatpush2.bf16.msra.mxu0 %v3654
    %3757 = vmatprep.subr.bf16.mxu0 0
    %3758 = vmatpush2.bf16.msra.mxu0 %v3653
    %3759 = vmatprep.subr.bf16.mxu0 0
    %3760 = vmatpush2.bf16.msra.mxu0 %v3652
    %3761 = vmatprep.subr.bf16.mxu0 0
    %3762 = vmatpush2.bf16.msra.mxu0 %v3651
    %3763 = vmatprep.mubr.bf16.mxu0 %v3427
    %3764 = vmatmul.mubr.bf16.gmra.mxu0 %v3426
    %v3765 = vpop.f32.mrf.mxu0
    %v3766 = vadd.f32 %v3726, %v3765
    %v3767 = vpop.f32.mrf.mxu0
    %v3768 = vpop.f32.mrf.mxu0
    %v3769 = vpop.f32.mrf.mxu0
    %3770 = vdwg.mxu0
    %v3771 = vlaneseq
    %v3772 = vand.u32 %v3771, 127
    %vm3773 = vcmp.lt.s32.totalorder %v3772, 10
    %v3774 = vsel %vm3773, %v3766, -3.4028235e+38
    %vm3775 = vcmask 1041408
    %v3776 = vsel %vm3775, %v3774, -inf
    %3777 = vmax.xlane.f32.xlu0 %v3776
    %v3778 = vpop.xlane.xlu0 %3777
    %v3779 = vsub.f32 %v3774, %v3778
    %v3780 = vmul.f32 %v3779, 1.442695
    %v3781 = vpow.pop %v3780
    %v3782 = vsel %vm3775, %v3781, 0.0
    %3783 = vadd.xlane.f32.xlu0 %v3782
    %v3784 = vpop.xlane.xlu0 %3783
    %v3785 = vlog2.pop %v3784
    %v3786 = vmul.f32 %v3785, 0.6931472
    %v3787 = vsub.f32 %v3779, %v3786
    %3788 = vst [vmem:[#allocation2] sm:$0x3] %v3787
    // Predicated region
    $region22: #{net_forward.3} parent=1 // pred_check
      _
    $region23: #{net_forward.3} parent=1 // pred_check_branch
      %3790 = sbr.rel (0) target = $region25
    $region24: #{net_forward.3} parent=1 // pred_region
      %s3792 = ssub.s32 32, 32
      %3793 = vsyncadd [#allocation3], %s3792
      %s3795 = sshll.u32 [#allocation2], 4
      %s3796 = int_to_ptr.vmem [resolvable:$true] %s3795
      %3798 = dma.vmem_to_hbm [thread:$0]  %s3796, 32, %s5, [#allocation3]
    $region25: #{net_forward.3} parent=1 // pred_fallthru
      _
    // Predicated region
    $region26: #{net_forward.3} parent=1 // pred_check
      _
    $region27: #{net_forward.3} parent=1 // pred_check_branch
      %3800 = sbr.rel (0) target = $region29
    $region28: #{net_forward.3} parent=1 // pred_region
      %3801 = dma.done [#allocation3], 32
    $region29: #{net_forward.3} parent=1 // pred_fallthru
      _
    %3802 = vsyncpa [#allocation3], 1

</llo_original>
